<compile_context>
chip_gen: v7x
topology: tpu7x:2x2x1
jax: 0.10.0
libtpu: 0.0.40
codegen_flags: <defaults>
</compile_context>

<pallas_src>
import math

import jax
import jax.numpy as jnp
from jax.experimental import pallas as pl
from jax.experimental.pallas import tpu as pltpu  # noqa: F401  (TPU backend)

# ----------------------------- configuration -------------------------------
B = 2          # batch
T = 8          # target (decoder) length
S = 12         # memory (encoder) length
D_MODEL = 32   # d_model
N_HEADS = 4
D_K = D_MODEL // N_HEADS
M_DIM = 24     # memory_dim
D_FF = 64
L_POS = 2 * T - 1          # relative positions T-1 .. -(T-1)
LN_EPS = 1e-5
SCALE = 1.0 / math.sqrt(D_K)
G = B * N_HEADS            # attention batch dim

# ------------------- merged parameter slab layout (f32) ---------------------
# One (P_ROWS, 128) slab; every tensor starts at lane 0 and at a row offset
# that is a multiple of 8 (sublane-tile aligned).
R_WQKV = 0                      # (D, 3D)  fused q|k|v  (q columns pre-scaled)
R_WPOS = R_WQKV + D_MODEL       # (D, D)
R_WO_S = R_WPOS + D_MODEL       # (D, D)
R_WQ_C = R_WO_S + D_MODEL       # (D, D)   (pre-scaled)
R_WO_C = R_WQ_C + D_MODEL       # (D, D)
R_W1 = R_WO_C + D_MODEL         # (D, D_FF)
R_WKVC = R_W1 + D_MODEL         # (M, 2D)  fused k|v for cross-attn
R_W2 = R_WKVC + M_DIM           # (D_FF, D)
R_VEC = R_W2 + D_FF             # 16 rows: biases / LN params / pos_u / pos_v
VEC_ROWS = 16
P_ROWS = R_VEC + VEC_ROWS       # 296
P_LANES = 128

(ROW_BQKV, ROW_BQC, ROW_BKVC, ROW_BOS, ROW_BOC, ROW_B1, ROW_B2,
 ROW_G1, ROW_BE1, ROW_G2, ROW_BE2, ROW_G3, ROW_BE3, ROW_U, ROW_V) = range(15)

# ------------------------ packed output slab layout --------------------------
OUT_W = 128
OFF_X = 0
OFF_SW = OFF_X + D_MODEL                 # 32 .. 64   self-attn weights (H*T)
OFF_CW = OFF_SW + N_HEADS * T            # 64 .. 112  cross-attn weights (H*S)
OFF_PAD = OFF_CW + N_HEADS * S           # 112 .. 128 zero padding


# --------------------------------- kernel ----------------------------------
def _decoder_layer_kernel(tgt_ref, mem_ref, pos_ref, tbias_ref, mbias_ref,
                          w_ref, out_ref):
    f32 = jnp.float32

    def mm(a, b):                       # plain 2-D matmul
        return jax.lax.dot_general(a, b, (((1,), (0,)), ((), ())),
                                   preferred_element_type=f32)

    def bqk(a, b):                      # (G,X,c) x (G,Y,c) -> (G,X,Y)
        return jax.lax.dot_general(a, b, (((2,), (2,)), ((0,), (0,))),
                                   preferred_element_type=f32)

    def bav(w, v):                      # (G,X,Y) x (G,Y,c) -> (G,X,c)
        return jax.lax.dot_general(w, v, (((2,), (1,)), ((0,), (0,))),
                                   preferred_element_type=f32)

    def to_heads(z, rows):              # (B*rows, H*c) -> (B*H, rows, c)
        c = z.shape[-1] // N_HEADS
        return jnp.stack(
            [z[b * rows:(b + 1) * rows, h * c:(h + 1) * c]
             for b in range(B) for h in range(N_HEADS)], axis=0)

    def from_heads(z):                  # (B*H, rows, c) -> (B*rows, H*c)
        per_b = [jnp.concatenate([z[b * N_HEADS + h] for h in range(N_HEADS)],
                                 axis=-1) for b in range(B)]
        return jnp.concatenate(per_b, axis=0)

    def layer_norm(y, g, b):
        mu = jnp.mean(y, axis=-1, keepdims=True)
        var = jnp.mean(jnp.square(y - mu), axis=-1, keepdims=True)
        return (y - mu) * jax.lax.rsqrt(var + LN_EPS) * g + b

    def softmax(s):                     # exact divide (weights are outputs)
        m = jnp.max(s, axis=-1, keepdims=True)
        e = jnp.exp(s - m)
        return e / jnp.sum(e, axis=-1, keepdims=True)

    # ---------------------------- data tiles --------------------------------
    x = tgt_ref[...]                    # (B*T, D)
    mem = mem_ref[...]                  # (B*S, M)
    pos = pos_ref[...]                  # (L, D)
    tgt_bias = tbias_ref[...]           # (B*H, T, T)  additive (0 / -1e30)
    mem_bias = mbias_ref[...]           # (B*H, T, S)

    # ----------------------- unpack parameter slab ---------------------------
    wqkv = w_ref[R_WQKV:R_WQKV + D_MODEL, 0:3 * D_MODEL]
    wpos = w_ref[R_WPOS:R_WPOS + D_MODEL, 0:D_MODEL]
    wo_s = w_ref[R_WO_S:R_WO_S + D_MODEL, 0:D_MODEL]
    wq_c = w_ref[R_WQ_C:R_WQ_C + D_MODEL, 0:D_MODEL]
    wo_c = w_ref[R_WO_C:R_WO_C + D_MODEL, 0:D_MODEL]
    w1 = w_ref[R_W1:R_W1 + D_MODEL, 0:D_FF]
    wkv_c = w_ref[R_WKVC:R_WKVC + M_DIM, 0:2 * D_MODEL]
    w2 = w_ref[R_W2:R_W2 + D_FF, 0:D_MODEL]

    def vrow(r, width):
        return w_ref[R_VEC + r:R_VEC + r + 1, 0:width]

    bqkv = vrow(ROW_BQKV, 3 * D_MODEL)
    bq_c = vrow(ROW_BQC, D_MODEL)
    bkv_c = vrow(ROW_BKVC, 2 * D_MODEL)
    bo_s = vrow(ROW_BOS, D_MODEL)
    bo_c = vrow(ROW_BOC, D_MODEL)
    b1f = vrow(ROW_B1, D_FF)
    b2f = vrow(ROW_B2, D_MODEL)
    g1, be1 = vrow(ROW_G1, D_MODEL), vrow(ROW_BE1, D_MODEL)
    g2, be2 = vrow(ROW_G2, D_MODEL), vrow(ROW_BE2, D_MODEL)
    g3, be3 = vrow(ROW_G3, D_MODEL), vrow(ROW_BE3, D_MODEL)
    pos_u = vrow(ROW_U, D_MODEL)        # already * 1/sqrt(dk)
    pos_v = vrow(ROW_V, D_MODEL)        # already * 1/sqrt(dk)

    # --------------- self attention with relative positions -----------------
    qkv = mm(x, wqkv) + bqkv            # (B*T, 3D); q pre-scaled
    q = qkv[:, 0:D_MODEL]
    k = qkv[:, D_MODEL:2 * D_MODEL]
    v = qkv[:, 2 * D_MODEL:3 * D_MODEL]
    pe = mm(pos, wpos)                  # (L, D), no bias

    qu_h = to_heads(q + pos_u, T)       # (G, T, dk)
    qv_h = to_heads(q + pos_v, T)       # (G, T, dk)
    k_h = to_heads(k, T)                # (G, T, dk)
    v_h = to_heads(v, T)                # (G, T, dk)
    pe_g = jnp.stack([pe[:, h * D_K:(h + 1) * D_K]
                      for _ in range(B) for h in range(N_HEADS)], axis=0)  # (G,L,dk)

    ac = bqk(qu_h, k_h)                 # (G, T, T)
    bd_full = bqk(qv_h, pe_g)           # (G, T, L)
    # rel-shift: bd[g,i,j] = bd_full[g,i,T-1-i+j]  (static lane windows)
    bd = jnp.concatenate(
        [bd_full[:, i:i + 1, T - 1 - i:2 * T - 1 - i] for i in range(T)], axis=1)

    slf_w = softmax(ac + bd + tgt_bias)                       # (G, T, T)
    slf_out = mm(from_heads(bav(slf_w, v_h)), wo_s) + bo_s    # (B*T, D)
    x1 = layer_norm(x + slf_out, g1, be1)                     # dropout1 = id

    # ---------------------------- cross attention ----------------------------
    qc = mm(x1, wq_c) + bq_c            # (B*T, D), pre-scaled
    kvc = mm(mem, wkv_c) + bkv_c        # (B*S, 2D)
    qc_h = to_heads(qc, T)              # (G, T, dk)
    kc_h = to_heads(kvc[:, 0:D_MODEL], S)              # (G, S, dk)
    vc_h = to_heads(kvc[:, D_MODEL:2 * D_MODEL], S)    # (G, S, dk)

    src_w = softmax(bqk(qc_h, kc_h) + mem_bias)               # (G, T, S)
    src_out = mm(from_heads(bav(src_w, vc_h)), wo_c) + bo_c   # (B*T, D)
    x2 = layer_norm(x1 + src_out, g2, be2)                    # dropout2 = id

    # ------------------------------ feed forward -----------------------------
    hdn = jnp.maximum(mm(x2, w1) + b1f, 0.0)
    x3 = layer_norm(x2 + mm(hdn, w2) + b2f, g3, be3)          # dropout3 = id

    # ------------- lane-dense packed output, single dense store --------------
    sw_flat = from_heads(slf_w)         # (B*T, H*T) = (16, 32)
    cw_flat = from_heads(src_w)         # (B*T, H*S) = (16, 48)
    pad = jnp.zeros((B * T, OUT_W - OFF_PAD), f32)
    out_ref[...] = jnp.concatenate([x3, sw_flat, cw_flat, pad], axis=-1)


# ----------------------------- parameter packing ----------------------------
def pack_params(p):
    """Fold 1/sqrt(dk) into q-side params and pack everything into one slab."""
    wqkv = jnp.concatenate([p["wq_s"] * SCALE, p["wk_s"], p["wv_s"]], axis=1)
    bqkv = jnp.concatenate([p["bq_s"] * SCALE, p["bk_s"], p["bv_s"]], axis=1)
    wkv_c = jnp.concatenate([p["wk_c"], p["wv_c"]], axis=1)
    bkv_c = jnp.concatenate([p["bk_c"], p["bv_c"]], axis=1)

    slab = jnp.zeros((P_ROWS, P_LANES), jnp.float32)

    def put(s, row, a):
        return s.at[row:row + a.shape[0], 0:a.shape[1]].set(a)

    slab = put(slab, R_WQKV, wqkv)
    slab = put(slab, R_WPOS, p["wpos"])
    slab = put(slab, R_WO_S, p["wo_s"])
    slab = put(slab, R_WQ_C, p["wq_c"] * SCALE)
    slab = put(slab, R_WO_C, p["wo_c"])
    slab = put(slab, R_W1, p["w1"])
    slab = put(slab, R_WKVC, wkv_c)
    slab = put(slab, R_W2, p["w2"])

    vec_rows = [
        (ROW_BQKV, bqkv), (ROW_BQC, p["bq_c"] * SCALE), (ROW_BKVC, bkv_c),
        (ROW_BOS, p["bo_s"]), (ROW_BOC, p["bo_c"]),
        (ROW_B1, p["b1f"]), (ROW_B2, p["b2f"]),
        (ROW_G1, p["g1"]), (ROW_BE1, p["be1"]),
        (ROW_G2, p["g2"]), (ROW_BE2, p["be2"]),
        (ROW_G3, p["g3"]), (ROW_BE3, p["be3"]),
        (ROW_U, (p["pos_u"] * SCALE).reshape(1, -1)),
        (ROW_V, (p["pos_v"] * SCALE).reshape(1, -1)),
    ]
    for r, val in vec_rows:
        slab = put(slab, R_VEC + r, val)
    return slab


# --------------------------------- wrapper ----------------------------------
def transformer_decoder_layer(tgt, tgt_mask, memory, memory_mask, pos, params):
    wslab = pack_params(params)

    # batch folded into rows (single grid step, whole arrays resident in VMEM)
    tgt2 = tgt.reshape(B * T, D_MODEL)
    mem2 = memory.reshape(B * S, M_DIM)

    # masks -> additive biases, broadcast to the (B*H, ...) attention batch
    tb = jnp.where(tgt_mask > 0.5, 0.0, -1e30).astype(jnp.float32)       # (B,T,T)
    tb = jnp.broadcast_to(tb[:, None], (B, N_HEADS, T, T)).reshape(G, T, T)
    mb = jnp.where(memory_mask > 0.5, 0.0, -1e30).astype(jnp.float32)    # (B,1,S)
    mb = jnp.broadcast_to(mb[:, None], (B, N_HEADS, T, S)).reshape(G, T, S)

    packed = pl.pallas_call(
        _decoder_layer_kernel,
        out_shape=jax.ShapeDtypeStruct((B * T, OUT_W), jnp.float32),
    )(tgt2, mem2, pos, tb, mb, wslab)

    x = packed[:, OFF_X:OFF_X + D_MODEL].reshape(B, T, D_MODEL)
    sw = packed[:, OFF_SW:OFF_SW + N_HEADS * T].reshape(
        B, T, N_HEADS, T).transpose(0, 2, 1, 3)
    cw = packed[:, OFF_CW:OFF_CW + N_HEADS * S].reshape(
        B, T, N_HEADS, S).transpose(0, 2, 1, 3)
    return x, sw, cw


# ----------------------------- parameter init -------------------------------
def init_params(key):
    p = {}

    def nxt():
        nonlocal key
        key, sub = jax.random.split(key)
        return sub

    def w(shape, scale=0.1):
        return jax.random.normal(nxt(), shape, dtype=jnp.float32) * scale

    p["wq_s"], p["bq_s"] = w((D_MODEL, D_MODEL)), w((1, D_MODEL))
    p["wk_s"], p["bk_s"] = w((D_MODEL, D_MODEL)), w((1, D_MODEL))
    p["wv_s"], p["bv_s"] = w((D_MODEL, D_MODEL)), w((1, D_MODEL))
    p["wpos"] = w((D_MODEL, D_MODEL))
    p["pos_u"], p["pos_v"] = w((N_HEADS, D_K)), w((N_HEADS, D_K))
    p["wo_s"], p["bo_s"] = w((D_MODEL, D_MODEL)), w((1, D_MODEL))

    p["wq_c"], p["bq_c"] = w((D_MODEL, D_MODEL)), w((1, D_MODEL))
    p["wk_c"], p["bk_c"] = w((M_DIM, D_MODEL)), w((1, D_MODEL))
    p["wv_c"], p["bv_c"] = w((M_DIM, D_MODEL)), w((1, D_MODEL))
    p["wo_c"], p["bo_c"] = w((D_MODEL, D_MODEL)), w((1, D_MODEL))

    p["w1"], p["b1f"] = w((D_MODEL, D_FF)), w((1, D_FF))
    p["w2"], p["b2f"] = w((D_FF, D_MODEL)), w((1, D_MODEL))

    p["g1"], p["be1"] = jnp.ones((1, D_MODEL), jnp.float32), jnp.zeros((1, D_MODEL), jnp.float32)
    p["g2"], p["be2"] = jnp.ones((1, D_MODEL), jnp.float32), jnp.zeros((1, D_MODEL), jnp.float32)
    p["g3"], p["be3"] = jnp.ones((1, D_MODEL), jnp.float32), jnp.zeros((1, D_MODEL), jnp.float32)
    return p


# ---------------------- pure-JAX reference (unfused params) -----------------
def _reference_layer(x, tgt_mask, memory, memory_mask, pos, p):
    def layer_norm(y, g, b):
        mu = jnp.mean(y, axis=-1, keepdims=True)
        var = jnp.mean(jnp.square(y - mu), axis=-1, keepdims=True)
        return (y - mu) * jax.lax.rsqrt(var + LN_EPS) * g + b

    def softmax(s):
        m = jnp.max(s, axis=-1, keepdims=True)
        e = jnp.exp(s - m)
        return e / jnp.sum(e, axis=-1, keepdims=True)

    # one-hot rel-shift selector: sel[i, j, l] = 1 iff l == T-1-i+j
    ii = jnp.arange(T)[:, None, None]
    jj = jnp.arange(T)[None, :, None]
    kk = jnp.arange(L_POS)[None, None, :]
    rel_sel = (kk == (T - 1 - ii + jj)).astype(jnp.float32)

    q = x @ p["wq_s"] + p["bq_s"]
    k = x @ p["wk_s"] + p["bk_s"]
    v = x @ p["wv_s"] + p["bv_s"]
    pe = pos @ p["wpos"]
    slf_w, slf_ctx = [], []
    for h in range(N_HEADS):
        sl = slice(h * D_K, (h + 1) * D_K)
        qh, kh, vh, ph = q[:, sl], k[:, sl], v[:, sl], pe[:, sl]
        uh, vbh = p["pos_u"][h:h + 1], p["pos_v"][h:h + 1]
        ac = (qh + uh) @ kh.T
        bd_full = (qh + vbh) @ ph.T
        bd = jnp.sum(bd_full[:, None, :] * rel_sel, axis=-1)
        scores = (ac + bd) * SCALE
        scores = jnp.where(tgt_mask > 0.5, scores, -1e30)
        wgt = softmax(scores)
        slf_w.append(wgt)
        slf_ctx.append(wgt @ vh)
    slf_out = jnp.concatenate(slf_ctx, -1) @ p["wo_s"] + p["bo_s"]
    x = layer_norm(x + slf_out, p["g1"], p["be1"])

    qc = x @ p["wq_c"] + p["bq_c"]
    kc = memory @ p["wk_c"] + p["bk_c"]
    vc = memory @ p["wv_c"] + p["bv_c"]
    src_w, src_ctx = [], []
    for h in range(N_HEADS):
        sl = slice(h * D_K, (h + 1) * D_K)
        qh, kh, vh = qc[:, sl], kc[:, sl], vc[:, sl]
        scores = (qh @ kh.T) * SCALE
        scores = jnp.where(memory_mask > 0.5, scores, -1e30)
        wgt = softmax(scores)
        src_w.append(wgt)
        src_ctx.append(wgt @ vh)
    src_out = jnp.concatenate(src_ctx, -1) @ p["wo_c"] + p["bo_c"]
    x = layer_norm(x + src_out, p["g2"], p["be2"])

    hdn = jnp.maximum(x @ p["w1"] + p["b1f"], 0.0)
    x = layer_norm(x + hdn @ p["w2"] + p["b2f"], p["g3"], p["be3"])
    return x, jnp.stack(slf_w), jnp.stack(src_w)


def reference(tgt, tgt_mask, memory, memory_mask, pos, params):
    xs, sws, cws = [], [], []
    for b in range(B):
        y, sw, cw = _reference_layer(tgt[b], tgt_mask[b], memory[b],
                                     memory_mask[b], pos, params)
        xs.append(y)
        sws.append(sw)
        cws.append(cw)
    return jnp.stack(xs), jnp.stack(sws), jnp.stack(cws)


# ---------------------------------- main -------------------------------------
if __name__ == "__main__":
    key = jax.random.PRNGKey(0)
    kt, km, kp, kparams = jax.random.split(key, 4)

    tgt = jax.random.normal(kt, (B, T, D_MODEL), dtype=jnp.float32)
    memory = jax.random.normal(km, (B, S, M_DIM), dtype=jnp.float32)
    # relative positional embeddings for distances T-1 .. -(T-1)
    pos = jax.random.normal(kp, (L_POS, D_MODEL), dtype=jnp.float32)

    # causal self-attn mask (B, T, T); 1 = keep, 0 = masked
    tgt_mask = jnp.tile(jnp.tril(jnp.ones((T, T), jnp.float32))[None], (B, 1, 1))
    # memory padding mask (B, 1, S); mask last 3 frames of batch 1
    memory_mask = jnp.ones((B, 1, S), jnp.float32).at[1, 0, S - 3:].set(0.0)

    params = init_params(kparams)

    out_x, slf_w, src_w = transformer_decoder_layer(
        tgt, tgt_mask, memory, memory_mask, pos, params)
    jax.block_until_ready((out_x, slf_w, src_w))

    ref_x, ref_sw, ref_cw = reference(tgt, tgt_mask, memory, memory_mask,
                                      pos, params)
    err = max(float(jnp.max(jnp.abs(out_x - ref_x))),
              float(jnp.max(jnp.abs(slf_w - ref_sw))),
              float(jnp.max(jnp.abs(src_w - ref_cw))))
    assert err < 1e-2, f"mismatch vs reference: {err}"
    print("KERNEL_OK")
</pallas_src>

<mosaic_0001>
module attributes {stable_mosaic.version = 11 : i64} {
  func.func @_decoder_layer_kernel(%arg0: memref<16x32xf32, #tpu.memory_space<vmem>>, %arg1: memref<24x24xf32, #tpu.memory_space<vmem>>, %arg2: memref<15x32xf32, #tpu.memory_space<vmem>>, %arg3: memref<8x8x8xf32, #tpu.memory_space<vmem>>, %arg4: memref<8x8x12xf32, #tpu.memory_space<vmem>>, %arg5: memref<296x128xf32, #tpu.memory_space<vmem>>, %arg6: memref<16x128xf32, #tpu.memory_space<vmem>>) attributes {dimension_semantics = [], scalar_prefetch = 0 : i64, scratch_operands = 0 : i64, tpu.core_type = #tpu.core_type<tc>} {
    %c0 = arith.constant 0 : index
    %c0_0 = arith.constant 0 : index
    %0 = vector.load %arg0[%c0, %c0_0] : memref<16x32xf32, #tpu.memory_space<vmem>>, vector<16x32xf32>
    %c0_1 = arith.constant 0 : index
    %c0_2 = arith.constant 0 : index
    %1 = vector.load %arg1[%c0_1, %c0_2] : memref<24x24xf32, #tpu.memory_space<vmem>>, vector<24x24xf32>
    %c0_3 = arith.constant 0 : index
    %c0_4 = arith.constant 0 : index
    %2 = vector.load %arg2[%c0_3, %c0_4] : memref<15x32xf32, #tpu.memory_space<vmem>>, vector<15x32xf32>
    %c0_5 = arith.constant 0 : index
    %c0_6 = arith.constant 0 : index
    %c0_7 = arith.constant 0 : index
    %3 = vector.load %arg3[%c0_5, %c0_6, %c0_7] : memref<8x8x8xf32, #tpu.memory_space<vmem>>, vector<8x8x8xf32>
    %c0_8 = arith.constant 0 : index
    %c0_9 = arith.constant 0 : index
    %c0_10 = arith.constant 0 : index
    %4 = vector.load %arg4[%c0_8, %c0_9, %c0_10] : memref<8x8x12xf32, #tpu.memory_space<vmem>>, vector<8x8x12xf32>
    %c0_11 = arith.constant 0 : index
    %c0_12 = arith.constant 0 : index
    %5 = vector.load %arg5[%c0_11, %c0_12] : memref<296x128xf32, #tpu.memory_space<vmem>>, vector<32x96xf32>
    %c32 = arith.constant 32 : index
    %c0_13 = arith.constant 0 : index
    %6 = vector.load %arg5[%c32, %c0_13] : memref<296x128xf32, #tpu.memory_space<vmem>>, vector<32x32xf32>
    %c64 = arith.constant 64 : index
    %c0_14 = arith.constant 0 : index
    %7 = vector.load %arg5[%c64, %c0_14] : memref<296x128xf32, #tpu.memory_space<vmem>>, vector<32x32xf32>
    %c96 = arith.constant 96 : index
    %c0_15 = arith.constant 0 : index
    %8 = vector.load %arg5[%c96, %c0_15] : memref<296x128xf32, #tpu.memory_space<vmem>>, vector<32x32xf32>
    %c128 = arith.constant 128 : index
    %c0_16 = arith.constant 0 : index
    %9 = vector.load %arg5[%c128, %c0_16] : memref<296x128xf32, #tpu.memory_space<vmem>>, vector<32x32xf32>
    %c160 = arith.constant 160 : index
    %c0_17 = arith.constant 0 : index
    %10 = vector.load %arg5[%c160, %c0_17] : memref<296x128xf32, #tpu.memory_space<vmem>>, vector<32x64xf32>
    %c192 = arith.constant 192 : index
    %c0_18 = arith.constant 0 : index
    %11 = vector.load %arg5[%c192, %c0_18] : memref<296x128xf32, #tpu.memory_space<vmem>>, vector<24x64xf32>
    %c216 = arith.constant 216 : index
    %c0_19 = arith.constant 0 : index
    %12 = vector.load %arg5[%c216, %c0_19] : memref<296x128xf32, #tpu.memory_space<vmem>>, vector<64x32xf32>
    %c280 = arith.constant 280 : index
    %c0_20 = arith.constant 0 : index
    %13 = vector.load %arg5[%c280, %c0_20] : memref<296x128xf32, #tpu.memory_space<vmem>>, vector<1x96xf32>
    %c281 = arith.constant 281 : index
    %c0_21 = arith.constant 0 : index
    %14 = vector.load %arg5[%c281, %c0_21] : memref<296x128xf32, #tpu.memory_space<vmem>>, vector<1x32xf32>
    %c282 = arith.constant 282 : index
    %c0_22 = arith.constant 0 : index
    %15 = vector.load %arg5[%c282, %c0_22] : memref<296x128xf32, #tpu.memory_space<vmem>>, vector<1x64xf32>
    %c283 = arith.constant 283 : index
    %c0_23 = arith.constant 0 : index
    %16 = vector.load %arg5[%c283, %c0_23] : memref<296x128xf32, #tpu.memory_space<vmem>>, vector<1x32xf32>
    %c284 = arith.constant 284 : index
    %c0_24 = arith.constant 0 : index
    %17 = vector.load %arg5[%c284, %c0_24] : memref<296x128xf32, #tpu.memory_space<vmem>>, vector<1x32xf32>
    %c285 = arith.constant 285 : index
    %c0_25 = arith.constant 0 : index
    %18 = vector.load %arg5[%c285, %c0_25] : memref<296x128xf32, #tpu.memory_space<vmem>>, vector<1x64xf32>
    %c286 = arith.constant 286 : index
    %c0_26 = arith.constant 0 : index
    %19 = vector.load %arg5[%c286, %c0_26] : memref<296x128xf32, #tpu.memory_space<vmem>>, vector<1x32xf32>
    %c287 = arith.constant 287 : index
    %c0_27 = arith.constant 0 : index
    %20 = vector.load %arg5[%c287, %c0_27] : memref<296x128xf32, #tpu.memory_space<vmem>>, vector<1x32xf32>
    %c288 = arith.constant 288 : index
    %c0_28 = arith.constant 0 : index
    %21 = vector.load %arg5[%c288, %c0_28] : memref<296x128xf32, #tpu.memory_space<vmem>>, vector<1x32xf32>
    %c289 = arith.constant 289 : index
    %c0_29 = arith.constant 0 : index
    %22 = vector.load %arg5[%c289, %c0_29] : memref<296x128xf32, #tpu.memory_space<vmem>>, vector<1x32xf32>
    %c290 = arith.constant 290 : index
    %c0_30 = arith.constant 0 : index
    %23 = vector.load %arg5[%c290, %c0_30] : memref<296x128xf32, #tpu.memory_space<vmem>>, vector<1x32xf32>
    %c291 = arith.constant 291 : index
    %c0_31 = arith.constant 0 : index
    %24 = vector.load %arg5[%c291, %c0_31] : memref<296x128xf32, #tpu.memory_space<vmem>>, vector<1x32xf32>
    %c292 = arith.constant 292 : index
    %c0_32 = arith.constant 0 : index
    %25 = vector.load %arg5[%c292, %c0_32] : memref<296x128xf32, #tpu.memory_space<vmem>>, vector<1x32xf32>
    %c293 = arith.constant 293 : index
    %c0_33 = arith.constant 0 : index
    %26 = vector.load %arg5[%c293, %c0_33] : memref<296x128xf32, #tpu.memory_space<vmem>>, vector<1x32xf32>
    %c294 = arith.constant 294 : index
    %c0_34 = arith.constant 0 : index
    %27 = vector.load %arg5[%c294, %c0_34] : memref<296x128xf32, #tpu.memory_space<vmem>>, vector<1x32xf32>
    %cst = arith.constant dense<0.000000e+00> : vector<16x96xf32>
    %28 = tpu.matmul %0, %5, %cst {dimension_numbers = #tpu.dot_dimension_numbers<[1], [0], [0], [1], [0, 0, 1, 1], [], []>} : vector<16x32xf32>, vector<32x96xf32>, vector<16x96xf32> -> vector<16x96xf32>
    %29 = vector.broadcast %13 : vector<1x96xf32> to vector<16x96xf32>
    %30 = arith.addf %28, %29 : vector<16x96xf32>
    %31 = vector.extract_strided_slice %30 {offsets = [0, 0], sizes = [16, 32], strides = [1, 1]} : vector<16x96xf32> to vector<16x32xf32>
    %32 = vector.extract_strided_slice %30 {offsets = [0, 32], sizes = [16, 32], strides = [1, 1]} : vector<16x96xf32> to vector<16x32xf32>
    %33 = vector.extract_strided_slice %30 {offsets = [0, 64], sizes = [16, 32], strides = [1, 1]} : vector<16x96xf32> to vector<16x32xf32>
    %cst_35 = arith.constant dense<0.000000e+00> : vector<15x32xf32>
    %34 = tpu.matmul %2, %6, %cst_35 {dimension_numbers = #tpu.dot_dimension_numbers<[1], [0], [0], [1], [0, 0, 1, 1], [], []>} : vector<15x32xf32>, vector<32x32xf32>, vector<15x32xf32> -> vector<15x32xf32>
    %35 = vector.broadcast %26 : vector<1x32xf32> to vector<16x32xf32>
    %36 = arith.addf %31, %35 : vector<16x32xf32>
    %37 = vector.extract_strided_slice %36 {offsets = [0, 0], sizes = [8, 8], strides = [1, 1]} : vector<16x32xf32> to vector<8x8xf32>
    %38 = vector.extract_strided_slice %36 {offsets = [0, 8], sizes = [8, 8], strides = [1, 1]} : vector<16x32xf32> to vector<8x8xf32>
    %39 = vector.extract_strided_slice %36 {offsets = [0, 16], sizes = [8, 8], strides = [1, 1]} : vector<16x32xf32> to vector<8x8xf32>
    %40 = vector.extract_strided_slice %36 {offsets = [0, 24], sizes = [8, 8], strides = [1, 1]} : vector<16x32xf32> to vector<8x8xf32>
    %41 = vector.extract_strided_slice %36 {offsets = [8, 0], sizes = [8, 8], strides = [1, 1]} : vector<16x32xf32> to vector<8x8xf32>
    %42 = vector.extract_strided_slice %36 {offsets = [8, 8], sizes = [8, 8], strides = [1, 1]} : vector<16x32xf32> to vector<8x8xf32>
    %43 = vector.extract_strided_slice %36 {offsets = [8, 16], sizes = [8, 8], strides = [1, 1]} : vector<16x32xf32> to vector<8x8xf32>
    %44 = vector.extract_strided_slice %36 {offsets = [8, 24], sizes = [8, 8], strides = [1, 1]} : vector<16x32xf32> to vector<8x8xf32>
    %45 = vector.shape_cast %37 : vector<8x8xf32> to vector<1x8x8xf32>
    %46 = vector.shape_cast %38 : vector<8x8xf32> to vector<1x8x8xf32>
    %47 = vector.shape_cast %39 : vector<8x8xf32> to vector<1x8x8xf32>
    %48 = vector.shape_cast %40 : vector<8x8xf32> to vector<1x8x8xf32>
    %49 = vector.shape_cast %41 : vector<8x8xf32> to vector<1x8x8xf32>
    %50 = vector.shape_cast %42 : vector<8x8xf32> to vector<1x8x8xf32>
    %51 = vector.shape_cast %43 : vector<8x8xf32> to vector<1x8x8xf32>
    %52 = vector.shape_cast %44 : vector<8x8xf32> to vector<1x8x8xf32>
    %53 = tpu.concatenate %45, %46, %47, %48, %49, %50, %51, %52 in 0 : vector<1x8x8xf32>, vector<1x8x8xf32>, vector<1x8x8xf32>, vector<1x8x8xf32>, vector<1x8x8xf32>, vector<1x8x8xf32>, vector<1x8x8xf32>, vector<1x8x8xf32> -> vector<8x8x8xf32>
    %54 = vector.broadcast %27 : vector<1x32xf32> to vector<16x32xf32>
    %55 = arith.addf %31, %54 : vector<16x32xf32>
    %56 = vector.extract_strided_slice %55 {offsets = [0, 0], sizes = [8, 8], strides = [1, 1]} : vector<16x32xf32> to vector<8x8xf32>
    %57 = vector.extract_strided_slice %55 {offsets = [0, 8], sizes = [8, 8], strides = [1, 1]} : vector<16x32xf32> to vector<8x8xf32>
    %58 = vector.extract_strided_slice %55 {offsets = [0, 16], sizes = [8, 8], strides = [1, 1]} : vector<16x32xf32> to vector<8x8xf32>
    %59 = vector.extract_strided_slice %55 {offsets = [0, 24], sizes = [8, 8], strides = [1, 1]} : vector<16x32xf32> to vector<8x8xf32>
    %60 = vector.extract_strided_slice %55 {offsets = [8, 0], sizes = [8, 8], strides = [1, 1]} : vector<16x32xf32> to vector<8x8xf32>
    %61 = vector.extract_strided_slice %55 {offsets = [8, 8], sizes = [8, 8], strides = [1, 1]} : vector<16x32xf32> to vector<8x8xf32>
    %62 = vector.extract_strided_slice %55 {offsets = [8, 16], sizes = [8, 8], strides = [1, 1]} : vector<16x32xf32> to vector<8x8xf32>
    %63 = vector.extract_strided_slice %55 {offsets = [8, 24], sizes = [8, 8], strides = [1, 1]} : vector<16x32xf32> to vector<8x8xf32>
    %64 = vector.shape_cast %56 : vector<8x8xf32> to vector<1x8x8xf32>
    %65 = vector.shape_cast %57 : vector<8x8xf32> to vector<1x8x8xf32>
    %66 = vector.shape_cast %58 : vector<8x8xf32> to vector<1x8x8xf32>
    %67 = vector.shape_cast %59 : vector<8x8xf32> to vector<1x8x8xf32>
    %68 = vector.shape_cast %60 : vector<8x8xf32> to vector<1x8x8xf32>
    %69 = vector.shape_cast %61 : vector<8x8xf32> to vector<1x8x8xf32>
    %70 = vector.shape_cast %62 : vector<8x8xf32> to vector<1x8x8xf32>
    %71 = vector.shape_cast %63 : vector<8x8xf32> to vector<1x8x8xf32>
    %72 = tpu.concatenate %64, %65, %66, %67, %68, %69, %70, %71 in 0 : vector<1x8x8xf32>, vector<1x8x8xf32>, vector<1x8x8xf32>, vector<1x8x8xf32>, vector<1x8x8xf32>, vector<1x8x8xf32>, vector<1x8x8xf32>, vector<1x8x8xf32> -> vector<8x8x8xf32>
    %73 = vector.extract_strided_slice %32 {offsets = [0, 0], sizes = [8, 8], strides = [1, 1]} : vector<16x32xf32> to vector<8x8xf32>
    %74 = vector.extract_strided_slice %32 {offsets = [0, 8], sizes = [8, 8], strides = [1, 1]} : vector<16x32xf32> to vector<8x8xf32>
    %75 = vector.extract_strided_slice %32 {offsets = [0, 16], sizes = [8, 8], strides = [1, 1]} : vector<16x32xf32> to vector<8x8xf32>
    %76 = vector.extract_strided_slice %32 {offsets = [0, 24], sizes = [8, 8], strides = [1, 1]} : vector<16x32xf32> to vector<8x8xf32>
    %77 = vector.extract_strided_slice %32 {offsets = [8, 0], sizes = [8, 8], strides = [1, 1]} : vector<16x32xf32> to vector<8x8xf32>
    %78 = vector.extract_strided_slice %32 {offsets = [8, 8], sizes = [8, 8], strides = [1, 1]} : vector<16x32xf32> to vector<8x8xf32>
    %79 = vector.extract_strided_slice %32 {offsets = [8, 16], sizes = [8, 8], strides = [1, 1]} : vector<16x32xf32> to vector<8x8xf32>
    %80 = vector.extract_strided_slice %32 {offsets = [8, 24], sizes = [8, 8], strides = [1, 1]} : vector<16x32xf32> to vector<8x8xf32>
    %81 = vector.shape_cast %73 : vector<8x8xf32> to vector<1x8x8xf32>
    %82 = vector.shape_cast %74 : vector<8x8xf32> to vector<1x8x8xf32>
    %83 = vector.shape_cast %75 : vector<8x8xf32> to vector<1x8x8xf32>
    %84 = vector.shape_cast %76 : vector<8x8xf32> to vector<1x8x8xf32>
    %85 = vector.shape_cast %77 : vector<8x8xf32> to vector<1x8x8xf32>
    %86 = vector.shape_cast %78 : vector<8x8xf32> to vector<1x8x8xf32>
    %87 = vector.shape_cast %79 : vector<8x8xf32> to vector<1x8x8xf32>
    %88 = vector.shape_cast %80 : vector<8x8xf32> to vector<1x8x8xf32>
    %89 = tpu.concatenate %81, %82, %83, %84, %85, %86, %87, %88 in 0 : vector<1x8x8xf32>, vector<1x8x8xf32>, vector<1x8x8xf32>, vector<1x8x8xf32>, vector<1x8x8xf32>, vector<1x8x8xf32>, vector<1x8x8xf32>, vector<1x8x8xf32> -> vector<8x8x8xf32>
    %90 = vector.extract_strided_slice %33 {offsets = [0, 0], sizes = [8, 8], strides = [1, 1]} : vector<16x32xf32> to vector<8x8xf32>
    %91 = vector.extract_strided_slice %33 {offsets = [0, 8], sizes = [8, 8], strides = [1, 1]} : vector<16x32xf32> to vector<8x8xf32>
    %92 = vector.extract_strided_slice %33 {offsets = [0, 16], sizes = [8, 8], strides = [1, 1]} : vector<16x32xf32> to vector<8x8xf32>
    %93 = vector.extract_strided_slice %33 {offsets = [0, 24], sizes = [8, 8], strides = [1, 1]} : vector<16x32xf32> to vector<8x8xf32>
    %94 = vector.extract_strided_slice %33 {offsets = [8, 0], sizes = [8, 8], strides = [1, 1]} : vector<16x32xf32> to vector<8x8xf32>
    %95 = vector.extract_strided_slice %33 {offsets = [8, 8], sizes = [8, 8], strides = [1, 1]} : vector<16x32xf32> to vector<8x8xf32>
    %96 = vector.extract_strided_slice %33 {offsets = [8, 16], sizes = [8, 8], strides = [1, 1]} : vector<16x32xf32> to vector<8x8xf32>
    %97 = vector.extract_strided_slice %33 {offsets = [8, 24], sizes = [8, 8], strides = [1, 1]} : vector<16x32xf32> to vector<8x8xf32>
    %98 = vector.shape_cast %90 : vector<8x8xf32> to vector<1x8x8xf32>
    %99 = vector.shape_cast %91 : vector<8x8xf32> to vector<1x8x8xf32>
    %100 = vector.shape_cast %92 : vector<8x8xf32> to vector<1x8x8xf32>
    %101 = vector.shape_cast %93 : vector<8x8xf32> to vector<1x8x8xf32>
    %102 = vector.shape_cast %94 : vector<8x8xf32> to vector<1x8x8xf32>
    %103 = vector.shape_cast %95 : vector<8x8xf32> to vector<1x8x8xf32>
    %104 = vector.shape_cast %96 : vector<8x8xf32> to vector<1x8x8xf32>
    %105 = vector.shape_cast %97 : vector<8x8xf32> to vector<1x8x8xf32>
    %106 = tpu.concatenate %98, %99, %100, %101, %102, %103, %104, %105 in 0 : vector<1x8x8xf32>, vector<1x8x8xf32>, vector<1x8x8xf32>, vector<1x8x8xf32>, vector<1x8x8xf32>, vector<1x8x8xf32>, vector<1x8x8xf32>, vector<1x8x8xf32> -> vector<8x8x8xf32>
    %107 = vector.extract_strided_slice %34 {offsets = [0, 0], sizes = [15, 8], strides = [1, 1]} : vector<15x32xf32> to vector<15x8xf32>
    %108 = vector.extract_strided_slice %34 {offsets = [0, 8], sizes = [15, 8], strides = [1, 1]} : vector<15x32xf32> to vector<15x8xf32>
    %109 = vector.extract_strided_slice %34 {offsets = [0, 16], sizes = [15, 8], strides = [1, 1]} : vector<15x32xf32> to vector<15x8xf32>
    %110 = vector.extract_strided_slice %34 {offsets = [0, 24], sizes = [15, 8], strides = [1, 1]} : vector<15x32xf32> to vector<15x8xf32>
    %111 = vector.extract_strided_slice %34 {offsets = [0, 0], sizes = [15, 8], strides = [1, 1]} : vector<15x32xf32> to vector<15x8xf32>
    %112 = vector.extract_strided_slice %34 {offsets = [0, 8], sizes = [15, 8], strides = [1, 1]} : vector<15x32xf32> to vector<15x8xf32>
    %113 = vector.extract_strided_slice %34 {offsets = [0, 16], sizes = [15, 8], strides = [1, 1]} : vector<15x32xf32> to vector<15x8xf32>
    %114 = vector.extract_strided_slice %34 {offsets = [0, 24], sizes = [15, 8], strides = [1, 1]} : vector<15x32xf32> to vector<15x8xf32>
    %115 = vector.shape_cast %107 : vector<15x8xf32> to vector<1x15x8xf32>
    %116 = vector.shape_cast %108 : vector<15x8xf32> to vector<1x15x8xf32>
    %117 = vector.shape_cast %109 : vector<15x8xf32> to vector<1x15x8xf32>
    %118 = vector.shape_cast %110 : vector<15x8xf32> to vector<1x15x8xf32>
    %119 = vector.shape_cast %111 : vector<15x8xf32> to vector<1x15x8xf32>
    %120 = vector.shape_cast %112 : vector<15x8xf32> to vector<1x15x8xf32>
    %121 = vector.shape_cast %113 : vector<15x8xf32> to vector<1x15x8xf32>
    %122 = vector.shape_cast %114 : vector<15x8xf32> to vector<1x15x8xf32>
    %123 = tpu.concatenate %115, %116, %117, %118, %119, %120, %121, %122 in 0 : vector<1x15x8xf32>, vector<1x15x8xf32>, vector<1x15x8xf32>, vector<1x15x8xf32>, vector<1x15x8xf32>, vector<1x15x8xf32>, vector<1x15x8xf32>, vector<1x15x8xf32> -> vector<8x15x8xf32>
    %cst_36 = arith.constant dense<0.000000e+00> : vector<8x8x8xf32>
    %124 = tpu.matmul %53, %89, %cst_36 {dimension_numbers = #tpu.dot_dimension_numbers<[2], [2], [1], [1], [0, 0, 0, 1, 1, 1], [0], [0]>} : vector<8x8x8xf32>, vector<8x8x8xf32>, vector<8x8x8xf32> -> vector<8x8x8xf32>
    %cst_37 = arith.constant dense<0.000000e+00> : vector<8x8x15xf32>
    %125 = tpu.matmul %72, %123, %cst_37 {dimension_numbers = #tpu.dot_dimension_numbers<[2], [2], [1], [1], [0, 0, 0, 1, 1, 1], [0], [0]>} : vector<8x8x8xf32>, vector<8x15x8xf32>, vector<8x8x15xf32> -> vector<8x8x15xf32>
    %126 = vector.extract_strided_slice %125 {offsets = [0, 0, 7], sizes = [8, 1, 8], strides = [1, 1, 1]} : vector<8x8x15xf32> to vector<8x1x8xf32>
    %127 = vector.extract_strided_slice %125 {offsets = [0, 1, 6], sizes = [8, 1, 8], strides = [1, 1, 1]} : vector<8x8x15xf32> to vector<8x1x8xf32>
    %128 = vector.extract_strided_slice %125 {offsets = [0, 2, 5], sizes = [8, 1, 8], strides = [1, 1, 1]} : vector<8x8x15xf32> to vector<8x1x8xf32>
    %129 = vector.extract_strided_slice %125 {offsets = [0, 3, 4], sizes = [8, 1, 8], strides = [1, 1, 1]} : vector<8x8x15xf32> to vector<8x1x8xf32>
    %130 = vector.extract_strided_slice %125 {offsets = [0, 4, 3], sizes = [8, 1, 8], strides = [1, 1, 1]} : vector<8x8x15xf32> to vector<8x1x8xf32>
    %131 = vector.extract_strided_slice %125 {offsets = [0, 5, 2], sizes = [8, 1, 8], strides = [1, 1, 1]} : vector<8x8x15xf32> to vector<8x1x8xf32>
    %132 = vector.extract_strided_slice %125 {offsets = [0, 6, 1], sizes = [8, 1, 8], strides = [1, 1, 1]} : vector<8x8x15xf32> to vector<8x1x8xf32>
    %133 = vector.extract_strided_slice %125 {offsets = [0, 7, 0], sizes = [8, 1, 8], strides = [1, 1, 1]} : vector<8x8x15xf32> to vector<8x1x8xf32>
    %134 = tpu.concatenate %126, %127, %128, %129, %130, %131, %132, %133 in 1 : vector<8x1x8xf32>, vector<8x1x8xf32>, vector<8x1x8xf32>, vector<8x1x8xf32>, vector<8x1x8xf32>, vector<8x1x8xf32>, vector<8x1x8xf32>, vector<8x1x8xf32> -> vector<8x8x8xf32>
    %135 = arith.addf %124, %134 : vector<8x8x8xf32>
    %136 = arith.addf %135, %3 : vector<8x8x8xf32>
    %cst_38 = arith.constant dense<0xFF800000> : vector<8x8xf32>
    %137 = vector.multi_reduction <maximumf>, %136, %cst_38 [2] : vector<8x8x8xf32> to vector<8x8xf32>
    %138 = vector.shape_cast %137 : vector<8x8xf32> to vector<8x8x1xf32>
    %139 = vector.broadcast %138 : vector<8x8x1xf32> to vector<8x8x8xf32>
    %140 = arith.subf %136, %139 : vector<8x8x8xf32>
    %141 = math.exp %140 : vector<8x8x8xf32>
    %cst_39 = arith.constant dense<0.000000e+00> : vector<8x8xf32>
    %142 = vector.multi_reduction <add>, %141, %cst_39 [2] : vector<8x8x8xf32> to vector<8x8xf32>
    %143 = vector.shape_cast %142 : vector<8x8xf32> to vector<8x8x1xf32>
    %144 = vector.broadcast %143 : vector<8x8x1xf32> to vector<8x8x8xf32>
    %145 = arith.divf %141, %144 : vector<8x8x8xf32>
    %cst_40 = arith.constant dense<0.000000e+00> : vector<8x8x8xf32>
    %146 = tpu.matmul %145, %106, %cst_40 {dimension_numbers = #tpu.dot_dimension_numbers<[2], [1], [1], [2], [0, 0, 0, 1, 1, 2], [0], [0]>} : vector<8x8x8xf32>, vector<8x8x8xf32>, vector<8x8x8xf32> -> vector<8x8x8xf32>
    %147 = vector.extract_strided_slice %146 {offsets = [0, 0, 0], sizes = [1, 8, 8], strides = [1, 1, 1]} : vector<8x8x8xf32> to vector<1x8x8xf32>
    %148 = vector.shape_cast %147 : vector<1x8x8xf32> to vector<8x8xf32>
    %149 = vector.extract_strided_slice %146 {offsets = [1, 0, 0], sizes = [1, 8, 8], strides = [1, 1, 1]} : vector<8x8x8xf32> to vector<1x8x8xf32>
    %150 = vector.shape_cast %149 : vector<1x8x8xf32> to vector<8x8xf32>
    %151 = vector.extract_strided_slice %146 {offsets = [2, 0, 0], sizes = [1, 8, 8], strides = [1, 1, 1]} : vector<8x8x8xf32> to vector<1x8x8xf32>
    %152 = vector.shape_cast %151 : vector<1x8x8xf32> to vector<8x8xf32>
    %153 = vector.extract_strided_slice %146 {offsets = [3, 0, 0], sizes = [1, 8, 8], strides = [1, 1, 1]} : vector<8x8x8xf32> to vector<1x8x8xf32>
    %154 = vector.shape_cast %153 : vector<1x8x8xf32> to vector<8x8xf32>
    %155 = tpu.concatenate %148, %150, %152, %154 in 1 : vector<8x8xf32>, vector<8x8xf32>, vector<8x8xf32>, vector<8x8xf32> -> vector<8x32xf32>
    %156 = vector.extract_strided_slice %146 {offsets = [4, 0, 0], sizes = [1, 8, 8], strides = [1, 1, 1]} : vector<8x8x8xf32> to vector<1x8x8xf32>
    %157 = vector.shape_cast %156 : vector<1x8x8xf32> to vector<8x8xf32>
    %158 = vector.extract_strided_slice %146 {offsets = [5, 0, 0], sizes = [1, 8, 8], strides = [1, 1, 1]} : vector<8x8x8xf32> to vector<1x8x8xf32>
    %159 = vector.shape_cast %158 : vector<1x8x8xf32> to vector<8x8xf32>
    %160 = vector.extract_strided_slice %146 {offsets = [6, 0, 0], sizes = [1, 8, 8], strides = [1, 1, 1]} : vector<8x8x8xf32> to vector<1x8x8xf32>
    %161 = vector.shape_cast %160 : vector<1x8x8xf32> to vector<8x8xf32>
    %162 = vector.extract_strided_slice %146 {offsets = [7, 0, 0], sizes = [1, 8, 8], strides = [1, 1, 1]} : vector<8x8x8xf32> to vector<1x8x8xf32>
    %163 = vector.shape_cast %162 : vector<1x8x8xf32> to vector<8x8xf32>
    %164 = tpu.concatenate %157, %159, %161, %163 in 1 : vector<8x8xf32>, vector<8x8xf32>, vector<8x8xf32>, vector<8x8xf32> -> vector<8x32xf32>
    %165 = tpu.concatenate %155, %164 in 0 : vector<8x32xf32>, vector<8x32xf32> -> vector<16x32xf32>
    %cst_41 = arith.constant dense<0.000000e+00> : vector<16x32xf32>
    %166 = tpu.matmul %165, %7, %cst_41 {dimension_numbers = #tpu.dot_dimension_numbers<[1], [0], [0], [1], [0, 0, 1, 1], [], []>} : vector<16x32xf32>, vector<32x32xf32>, vector<16x32xf32> -> vector<16x32xf32>
    %167 = vector.broadcast %16 : vector<1x32xf32> to vector<16x32xf32>
    %168 = arith.addf %166, %167 : vector<16x32xf32>
    %169 = arith.addf %0, %168 : vector<16x32xf32>
    %cst_42 = arith.constant dense<0.000000e+00> : vector<16xf32>
    %170 = vector.multi_reduction <add>, %169, %cst_42 [1] : vector<16x32xf32> to vector<16xf32>
    %171 = vector.shape_cast %170 : vector<16xf32> to vector<16x1xf32>
    %cst_43 = arith.constant 3.200000e+01 : f32
    %172 = vector.broadcast %cst_43 : f32 to vector<16x1xf32>
    %173 = arith.divf %171, %172 : vector<16x1xf32>
    %174 = vector.broadcast %173 : vector<16x1xf32> to vector<16x32xf32>
    %175 = arith.subf %169, %174 : vector<16x32xf32>
    %176 = arith.mulf %175, %175 : vector<16x32xf32>
    %cst_44 = arith.constant dense<0.000000e+00> : vector<16xf32>
    %177 = vector.multi_reduction <add>, %176, %cst_44 [1] : vector<16x32xf32> to vector<16xf32>
    %178 = vector.shape_cast %177 : vector<16xf32> to vector<16x1xf32>
    %cst_45 = arith.constant 3.200000e+01 : f32
    %179 = vector.broadcast %cst_45 : f32 to vector<16x1xf32>
    %180 = arith.divf %178, %179 : vector<16x1xf32>
    %181 = vector.broadcast %173 : vector<16x1xf32> to vector<16x32xf32>
    %182 = arith.subf %169, %181 : vector<16x32xf32>
    %cst_46 = arith.constant 9.99999974E-6 : f32
    %183 = vector.broadcast %cst_46 : f32 to vector<16x1xf32>
    %184 = arith.addf %180, %183 : vector<16x1xf32>
    %185 = math.rsqrt %184 : vector<16x1xf32>
    %186 = vector.broadcast %185 : vector<16x1xf32> to vector<16x32xf32>
    %187 = arith.mulf %182, %186 : vector<16x32xf32>
    %188 = vector.broadcast %20 : vector<1x32xf32> to vector<16x32xf32>
    %189 = arith.mulf %187, %188 : vector<16x32xf32>
    %190 = vector.broadcast %21 : vector<1x32xf32> to vector<16x32xf32>
    %191 = arith.addf %189, %190 : vector<16x32xf32>
    %cst_47 = arith.constant dense<0.000000e+00> : vector<16x32xf32>
    %192 = tpu.matmul %191, %8, %cst_47 {dimension_numbers = #tpu.dot_dimension_numbers<[1], [0], [0], [1], [0, 0, 1, 1], [], []>} : vector<16x32xf32>, vector<32x32xf32>, vector<16x32xf32> -> vector<16x32xf32>
    %193 = vector.broadcast %14 : vector<1x32xf32> to vector<16x32xf32>
    %194 = arith.addf %192, %193 : vector<16x32xf32>
    %cst_48 = arith.constant dense<0.000000e+00> : vector<24x64xf32>
    %195 = tpu.matmul %1, %11, %cst_48 {dimension_numbers = #tpu.dot_dimension_numbers<[1], [0], [0], [1], [0, 0, 1, 1], [], []>} : vector<24x24xf32>, vector<24x64xf32>, vector<24x64xf32> -> vector<24x64xf32>
    %196 = vector.broadcast %15 : vector<1x64xf32> to vector<24x64xf32>
    %197 = arith.addf %195, %196 : vector<24x64xf32>
    %198 = vector.extract_strided_slice %194 {offsets = [0, 0], sizes = [8, 8], strides = [1, 1]} : vector<16x32xf32> to vector<8x8xf32>
    %199 = vector.extract_strided_slice %194 {offsets = [0, 8], sizes = [8, 8], strides = [1, 1]} : vector<16x32xf32> to vector<8x8xf32>
    %200 = vector.extract_strided_slice %194 {offsets = [0, 16], sizes = [8, 8], strides = [1, 1]} : vector<16x32xf32> to vector<8x8xf32>
    %201 = vector.extract_strided_slice %194 {offsets = [0, 24], sizes = [8, 8], strides = [1, 1]} : vector<16x32xf32> to vector<8x8xf32>
    %202 = vector.extract_strided_slice %194 {offsets = [8, 0], sizes = [8, 8], strides = [1, 1]} : vector<16x32xf32> to vector<8x8xf32>
    %203 = vector.extract_strided_slice %194 {offsets = [8, 8], sizes = [8, 8], strides = [1, 1]} : vector<16x32xf32> to vector<8x8xf32>
    %204 = vector.extract_strided_slice %194 {offsets = [8, 16], sizes = [8, 8], strides = [1, 1]} : vector<16x32xf32> to vector<8x8xf32>
    %205 = vector.extract_strided_slice %194 {offsets = [8, 24], sizes = [8, 8], strides = [1, 1]} : vector<16x32xf32> to vector<8x8xf32>
    %206 = vector.shape_cast %198 : vector<8x8xf32> to vector<1x8x8xf32>
    %207 = vector.shape_cast %199 : vector<8x8xf32> to vector<1x8x8xf32>
    %208 = vector.shape_cast %200 : vector<8x8xf32> to vector<1x8x8xf32>
    %209 = vector.shape_cast %201 : vector<8x8xf32> to vector<1x8x8xf32>
    %210 = vector.shape_cast %202 : vector<8x8xf32> to vector<1x8x8xf32>
    %211 = vector.shape_cast %203 : vector<8x8xf32> to vector<1x8x8xf32>
    %212 = vector.shape_cast %204 : vector<8x8xf32> to vector<1x8x8xf32>
    %213 = vector.shape_cast %205 : vector<8x8xf32> to vector<1x8x8xf32>
    %214 = tpu.concatenate %206, %207, %208, %209, %210, %211, %212, %213 in 0 : vector<1x8x8xf32>, vector<1x8x8xf32>, vector<1x8x8xf32>, vector<1x8x8xf32>, vector<1x8x8xf32>, vector<1x8x8xf32>, vector<1x8x8xf32>, vector<1x8x8xf32> -> vector<8x8x8xf32>
    %215 = vector.extract_strided_slice %197 {offsets = [0, 0], sizes = [24, 32], strides = [1, 1]} : vector<24x64xf32> to vector<24x32xf32>
    %216 = vector.extract_strided_slice %215 {offsets = [0, 0], sizes = [12, 8], strides = [1, 1]} : vector<24x32xf32> to vector<12x8xf32>
    %217 = vector.extract_strided_slice %215 {offsets = [0, 8], sizes = [12, 8], strides = [1, 1]} : vector<24x32xf32> to vector<12x8xf32>
    %218 = vector.extract_strided_slice %215 {offsets = [0, 16], sizes = [12, 8], strides = [1, 1]} : vector<24x32xf32> to vector<12x8xf32>
    %219 = vector.extract_strided_slice %215 {offsets = [0, 24], sizes = [12, 8], strides = [1, 1]} : vector<24x32xf32> to vector<12x8xf32>
    %220 = vector.extract_strided_slice %215 {offsets = [12, 0], sizes = [12, 8], strides = [1, 1]} : vector<24x32xf32> to vector<12x8xf32>
    %221 = vector.extract_strided_slice %215 {offsets = [12, 8], sizes = [12, 8], strides = [1, 1]} : vector<24x32xf32> to vector<12x8xf32>
    %222 = vector.extract_strided_slice %215 {offsets = [12, 16], sizes = [12, 8], strides = [1, 1]} : vector<24x32xf32> to vector<12x8xf32>
    %223 = vector.extract_strided_slice %215 {offsets = [12, 24], sizes = [12, 8], strides = [1, 1]} : vector<24x32xf32> to vector<12x8xf32>
    %224 = vector.shape_cast %216 : vector<12x8xf32> to vector<1x12x8xf32>
    %225 = vector.shape_cast %217 : vector<12x8xf32> to vector<1x12x8xf32>
    %226 = vector.shape_cast %218 : vector<12x8xf32> to vector<1x12x8xf32>
    %227 = vector.shape_cast %219 : vector<12x8xf32> to vector<1x12x8xf32>
    %228 = vector.shape_cast %220 : vector<12x8xf32> to vector<1x12x8xf32>
    %229 = vector.shape_cast %221 : vector<12x8xf32> to vector<1x12x8xf32>
    %230 = vector.shape_cast %222 : vector<12x8xf32> to vector<1x12x8xf32>
    %231 = vector.shape_cast %223 : vector<12x8xf32> to vector<1x12x8xf32>
    %232 = tpu.concatenate %224, %225, %226, %227, %228, %229, %230, %231 in 0 : vector<1x12x8xf32>, vector<1x12x8xf32>, vector<1x12x8xf32>, vector<1x12x8xf32>, vector<1x12x8xf32>, vector<1x12x8xf32>, vector<1x12x8xf32>, vector<1x12x8xf32> -> vector<8x12x8xf32>
    %233 = vector.extract_strided_slice %197 {offsets = [0, 32], sizes = [24, 32], strides = [1, 1]} : vector<24x64xf32> to vector<24x32xf32>
    %234 = vector.extract_strided_slice %233 {offsets = [0, 0], sizes = [12, 8], strides = [1, 1]} : vector<24x32xf32> to vector<12x8xf32>
    %235 = vector.extract_strided_slice %233 {offsets = [0, 8], sizes = [12, 8], strides = [1, 1]} : vector<24x32xf32> to vector<12x8xf32>
    %236 = vector.extract_strided_slice %233 {offsets = [0, 16], sizes = [12, 8], strides = [1, 1]} : vector<24x32xf32> to vector<12x8xf32>
    %237 = vector.extract_strided_slice %233 {offsets = [0, 24], sizes = [12, 8], strides = [1, 1]} : vector<24x32xf32> to vector<12x8xf32>
    %238 = vector.extract_strided_slice %233 {offsets = [12, 0], sizes = [12, 8], strides = [1, 1]} : vector<24x32xf32> to vector<12x8xf32>
    %239 = vector.extract_strided_slice %233 {offsets = [12, 8], sizes = [12, 8], strides = [1, 1]} : vector<24x32xf32> to vector<12x8xf32>
    %240 = vector.extract_strided_slice %233 {offsets = [12, 16], sizes = [12, 8], strides = [1, 1]} : vector<24x32xf32> to vector<12x8xf32>
    %241 = vector.extract_strided_slice %233 {offsets = [12, 24], sizes = [12, 8], strides = [1, 1]} : vector<24x32xf32> to vector<12x8xf32>
    %242 = vector.shape_cast %234 : vector<12x8xf32> to vector<1x12x8xf32>
    %243 = vector.shape_cast %235 : vector<12x8xf32> to vector<1x12x8xf32>
    %244 = vector.shape_cast %236 : vector<12x8xf32> to vector<1x12x8xf32>
    %245 = vector.shape_cast %237 : vector<12x8xf32> to vector<1x12x8xf32>
    %246 = vector.shape_cast %238 : vector<12x8xf32> to vector<1x12x8xf32>
    %247 = vector.shape_cast %239 : vector<12x8xf32> to vector<1x12x8xf32>
    %248 = vector.shape_cast %240 : vector<12x8xf32> to vector<1x12x8xf32>
    %249 = vector.shape_cast %241 : vector<12x8xf32> to vector<1x12x8xf32>
    %250 = tpu.concatenate %242, %243, %244, %245, %246, %247, %248, %249 in 0 : vector<1x12x8xf32>, vector<1x12x8xf32>, vector<1x12x8xf32>, vector<1x12x8xf32>, vector<1x12x8xf32>, vector<1x12x8xf32>, vector<1x12x8xf32>, vector<1x12x8xf32> -> vector<8x12x8xf32>
    %cst_49 = arith.constant dense<0.000000e+00> : vector<8x8x12xf32>
    %251 = tpu.matmul %214, %232, %cst_49 {dimension_numbers = #tpu.dot_dimension_numbers<[2], [2], [1], [1], [0, 0, 0, 1, 1, 1], [0], [0]>} : vector<8x8x8xf32>, vector<8x12x8xf32>, vector<8x8x12xf32> -> vector<8x8x12xf32>
    %252 = arith.addf %251, %4 : vector<8x8x12xf32>
    %cst_50 = arith.constant dense<0xFF800000> : vector<8x8xf32>
    %253 = vector.multi_reduction <maximumf>, %252, %cst_50 [2] : vector<8x8x12xf32> to vector<8x8xf32>
    %254 = vector.shape_cast %253 : vector<8x8xf32> to vector<8x8x1xf32>
    %255 = vector.broadcast %254 : vector<8x8x1xf32> to vector<8x8x12xf32>
    %256 = arith.subf %252, %255 : vector<8x8x12xf32>
    %257 = math.exp %256 : vector<8x8x12xf32>
    %cst_51 = arith.constant dense<0.000000e+00> : vector<8x8xf32>
    %258 = vector.multi_reduction <add>, %257, %cst_51 [2] : vector<8x8x12xf32> to vector<8x8xf32>
    %259 = vector.shape_cast %258 : vector<8x8xf32> to vector<8x8x1xf32>
    %260 = vector.broadcast %259 : vector<8x8x1xf32> to vector<8x8x12xf32>
    %261 = arith.divf %257, %260 : vector<8x8x12xf32>
    %cst_52 = arith.constant dense<0.000000e+00> : vector<8x8x8xf32>
    %262 = tpu.matmul %261, %250, %cst_52 {dimension_numbers = #tpu.dot_dimension_numbers<[2], [1], [1], [2], [0, 0, 0, 1, 1, 2], [0], [0]>} : vector<8x8x12xf32>, vector<8x12x8xf32>, vector<8x8x8xf32> -> vector<8x8x8xf32>
    %263 = vector.extract_strided_slice %262 {offsets = [0, 0, 0], sizes = [1, 8, 8], strides = [1, 1, 1]} : vector<8x8x8xf32> to vector<1x8x8xf32>
    %264 = vector.shape_cast %263 : vector<1x8x8xf32> to vector<8x8xf32>
    %265 = vector.extract_strided_slice %262 {offsets = [1, 0, 0], sizes = [1, 8, 8], strides = [1, 1, 1]} : vector<8x8x8xf32> to vector<1x8x8xf32>
    %266 = vector.shape_cast %265 : vector<1x8x8xf32> to vector<8x8xf32>
    %267 = vector.extract_strided_slice %262 {offsets = [2, 0, 0], sizes = [1, 8, 8], strides = [1, 1, 1]} : vector<8x8x8xf32> to vector<1x8x8xf32>
    %268 = vector.shape_cast %267 : vector<1x8x8xf32> to vector<8x8xf32>
    %269 = vector.extract_strided_slice %262 {offsets = [3, 0, 0], sizes = [1, 8, 8], strides = [1, 1, 1]} : vector<8x8x8xf32> to vector<1x8x8xf32>
    %270 = vector.shape_cast %269 : vector<1x8x8xf32> to vector<8x8xf32>
    %271 = tpu.concatenate %264, %266, %268, %270 in 1 : vector<8x8xf32>, vector<8x8xf32>, vector<8x8xf32>, vector<8x8xf32> -> vector<8x32xf32>
    %272 = vector.extract_strided_slice %262 {offsets = [4, 0, 0], sizes = [1, 8, 8], strides = [1, 1, 1]} : vector<8x8x8xf32> to vector<1x8x8xf32>
    %273 = vector.shape_cast %272 : vector<1x8x8xf32> to vector<8x8xf32>
    %274 = vector.extract_strided_slice %262 {offsets = [5, 0, 0], sizes = [1, 8, 8], strides = [1, 1, 1]} : vector<8x8x8xf32> to vector<1x8x8xf32>
    %275 = vector.shape_cast %274 : vector<1x8x8xf32> to vector<8x8xf32>
    %276 = vector.extract_strided_slice %262 {offsets = [6, 0, 0], sizes = [1, 8, 8], strides = [1, 1, 1]} : vector<8x8x8xf32> to vector<1x8x8xf32>
    %277 = vector.shape_cast %276 : vector<1x8x8xf32> to vector<8x8xf32>
    %278 = vector.extract_strided_slice %262 {offsets = [7, 0, 0], sizes = [1, 8, 8], strides = [1, 1, 1]} : vector<8x8x8xf32> to vector<1x8x8xf32>
    %279 = vector.shape_cast %278 : vector<1x8x8xf32> to vector<8x8xf32>
    %280 = tpu.concatenate %273, %275, %277, %279 in 1 : vector<8x8xf32>, vector<8x8xf32>, vector<8x8xf32>, vector<8x8xf32> -> vector<8x32xf32>
    %281 = tpu.concatenate %271, %280 in 0 : vector<8x32xf32>, vector<8x32xf32> -> vector<16x32xf32>
    %cst_53 = arith.constant dense<0.000000e+00> : vector<16x32xf32>
    %282 = tpu.matmul %281, %9, %cst_53 {dimension_numbers = #tpu.dot_dimension_numbers<[1], [0], [0], [1], [0, 0, 1, 1], [], []>} : vector<16x32xf32>, vector<32x32xf32>, vector<16x32xf32> -> vector<16x32xf32>
    %283 = vector.broadcast %17 : vector<1x32xf32> to vector<16x32xf32>
    %284 = arith.addf %282, %283 : vector<16x32xf32>
    %285 = arith.addf %191, %284 : vector<16x32xf32>
    %cst_54 = arith.constant dense<0.000000e+00> : vector<16xf32>
    %286 = vector.multi_reduction <add>, %285, %cst_54 [1] : vector<16x32xf32> to vector<16xf32>
    %287 = vector.shape_cast %286 : vector<16xf32> to vector<16x1xf32>
    %cst_55 = arith.constant 3.200000e+01 : f32
    %288 = vector.broadcast %cst_55 : f32 to vector<16x1xf32>
    %289 = arith.divf %287, %288 : vector<16x1xf32>
    %290 = vector.broadcast %289 : vector<16x1xf32> to vector<16x32xf32>
    %291 = arith.subf %285, %290 : vector<16x32xf32>
    %292 = arith.mulf %291, %291 : vector<16x32xf32>
    %cst_56 = arith.constant dense<0.000000e+00> : vector<16xf32>
    %293 = vector.multi_reduction <add>, %292, %cst_56 [1] : vector<16x32xf32> to vector<16xf32>
    %294 = vector.shape_cast %293 : vector<16xf32> to vector<16x1xf32>
    %cst_57 = arith.constant 3.200000e+01 : f32
    %295 = vector.broadcast %cst_57 : f32 to vector<16x1xf32>
    %296 = arith.divf %294, %295 : vector<16x1xf32>
    %297 = vector.broadcast %289 : vector<16x1xf32> to vector<16x32xf32>
    %298 = arith.subf %285, %297 : vector<16x32xf32>
    %cst_58 = arith.constant 9.99999974E-6 : f32
    %299 = vector.broadcast %cst_58 : f32 to vector<16x1xf32>
    %300 = arith.addf %296, %299 : vector<16x1xf32>
    %301 = math.rsqrt %300 : vector<16x1xf32>
    %302 = vector.broadcast %301 : vector<16x1xf32> to vector<16x32xf32>
    %303 = arith.mulf %298, %302 : vector<16x32xf32>
    %304 = vector.broadcast %22 : vector<1x32xf32> to vector<16x32xf32>
    %305 = arith.mulf %303, %304 : vector<16x32xf32>
    %306 = vector.broadcast %23 : vector<1x32xf32> to vector<16x32xf32>
    %307 = arith.addf %305, %306 : vector<16x32xf32>
    %cst_59 = arith.constant dense<0.000000e+00> : vector<16x64xf32>
    %308 = tpu.matmul %307, %10, %cst_59 {dimension_numbers = #tpu.dot_dimension_numbers<[1], [0], [0], [1], [0, 0, 1, 1], [], []>} : vector<16x32xf32>, vector<32x64xf32>, vector<16x64xf32> -> vector<16x64xf32>
    %309 = vector.broadcast %18 : vector<1x64xf32> to vector<16x64xf32>
    %310 = arith.addf %308, %309 : vector<16x64xf32>
    %cst_60 = arith.constant 0.000000e+00 : f32
    %311 = vector.broadcast %cst_60 : f32 to vector<16x64xf32>
    %312 = arith.maximumf %310, %311 : vector<16x64xf32>
    %cst_61 = arith.constant dense<0.000000e+00> : vector<16x32xf32>
    %313 = tpu.matmul %312, %12, %cst_61 {dimension_numbers = #tpu.dot_dimension_numbers<[1], [0], [0], [1], [0, 0, 1, 1], [], []>} : vector<16x64xf32>, vector<64x32xf32>, vector<16x32xf32> -> vector<16x32xf32>
    %314 = arith.addf %307, %313 : vector<16x32xf32>
    %315 = vector.broadcast %19 : vector<1x32xf32> to vector<16x32xf32>
    %316 = arith.addf %314, %315 : vector<16x32xf32>
    %cst_62 = arith.constant dense<0.000000e+00> : vector<16xf32>
    %317 = vector.multi_reduction <add>, %316, %cst_62 [1] : vector<16x32xf32> to vector<16xf32>
    %318 = vector.shape_cast %317 : vector<16xf32> to vector<16x1xf32>
    %cst_63 = arith.constant 3.200000e+01 : f32
    %319 = vector.broadcast %cst_63 : f32 to vector<16x1xf32>
    %320 = arith.divf %318, %319 : vector<16x1xf32>
    %321 = vector.broadcast %320 : vector<16x1xf32> to vector<16x32xf32>
    %322 = arith.subf %316, %321 : vector<16x32xf32>
    %323 = arith.mulf %322, %322 : vector<16x32xf32>
    %cst_64 = arith.constant dense<0.000000e+00> : vector<16xf32>
    %324 = vector.multi_reduction <add>, %323, %cst_64 [1] : vector<16x32xf32> to vector<16xf32>
    %325 = vector.shape_cast %324 : vector<16xf32> to vector<16x1xf32>
    %cst_65 = arith.constant 3.200000e+01 : f32
    %326 = vector.broadcast %cst_65 : f32 to vector<16x1xf32>
    %327 = arith.divf %325, %326 : vector<16x1xf32>
    %328 = vector.broadcast %320 : vector<16x1xf32> to vector<16x32xf32>
    %329 = arith.subf %316, %328 : vector<16x32xf32>
    %cst_66 = arith.constant 9.99999974E-6 : f32
    %330 = vector.broadcast %cst_66 : f32 to vector<16x1xf32>
    %331 = arith.addf %327, %330 : vector<16x1xf32>
    %332 = math.rsqrt %331 : vector<16x1xf32>
    %333 = vector.broadcast %332 : vector<16x1xf32> to vector<16x32xf32>
    %334 = arith.mulf %329, %333 : vector<16x32xf32>
    %335 = vector.broadcast %24 : vector<1x32xf32> to vector<16x32xf32>
    %336 = arith.mulf %334, %335 : vector<16x32xf32>
    %337 = vector.broadcast %25 : vector<1x32xf32> to vector<16x32xf32>
    %338 = arith.addf %336, %337 : vector<16x32xf32>
    %339 = vector.extract_strided_slice %145 {offsets = [0, 0, 0], sizes = [1, 8, 8], strides = [1, 1, 1]} : vector<8x8x8xf32> to vector<1x8x8xf32>
    %340 = vector.shape_cast %339 : vector<1x8x8xf32> to vector<8x8xf32>
    %341 = vector.extract_strided_slice %145 {offsets = [1, 0, 0], sizes = [1, 8, 8], strides = [1, 1, 1]} : vector<8x8x8xf32> to vector<1x8x8xf32>
    %342 = vector.shape_cast %341 : vector<1x8x8xf32> to vector<8x8xf32>
    %343 = vector.extract_strided_slice %145 {offsets = [2, 0, 0], sizes = [1, 8, 8], strides = [1, 1, 1]} : vector<8x8x8xf32> to vector<1x8x8xf32>
    %344 = vector.shape_cast %343 : vector<1x8x8xf32> to vector<8x8xf32>
    %345 = vector.extract_strided_slice %145 {offsets = [3, 0, 0], sizes = [1, 8, 8], strides = [1, 1, 1]} : vector<8x8x8xf32> to vector<1x8x8xf32>
    %346 = vector.shape_cast %345 : vector<1x8x8xf32> to vector<8x8xf32>
    %347 = tpu.concatenate %340, %342, %344, %346 in 1 : vector<8x8xf32>, vector<8x8xf32>, vector<8x8xf32>, vector<8x8xf32> -> vector<8x32xf32>
    %348 = vector.extract_strided_slice %145 {offsets = [4, 0, 0], sizes = [1, 8, 8], strides = [1, 1, 1]} : vector<8x8x8xf32> to vector<1x8x8xf32>
    %349 = vector.shape_cast %348 : vector<1x8x8xf32> to vector<8x8xf32>
    %350 = vector.extract_strided_slice %145 {offsets = [5, 0, 0], sizes = [1, 8, 8], strides = [1, 1, 1]} : vector<8x8x8xf32> to vector<1x8x8xf32>
    %351 = vector.shape_cast %350 : vector<1x8x8xf32> to vector<8x8xf32>
    %352 = vector.extract_strided_slice %145 {offsets = [6, 0, 0], sizes = [1, 8, 8], strides = [1, 1, 1]} : vector<8x8x8xf32> to vector<1x8x8xf32>
    %353 = vector.shape_cast %352 : vector<1x8x8xf32> to vector<8x8xf32>
    %354 = vector.extract_strided_slice %145 {offsets = [7, 0, 0], sizes = [1, 8, 8], strides = [1, 1, 1]} : vector<8x8x8xf32> to vector<1x8x8xf32>
    %355 = vector.shape_cast %354 : vector<1x8x8xf32> to vector<8x8xf32>
    %356 = tpu.concatenate %349, %351, %353, %355 in 1 : vector<8x8xf32>, vector<8x8xf32>, vector<8x8xf32>, vector<8x8xf32> -> vector<8x32xf32>
    %357 = tpu.concatenate %347, %356 in 0 : vector<8x32xf32>, vector<8x32xf32> -> vector<16x32xf32>
    %358 = vector.extract_strided_slice %261 {offsets = [0, 0, 0], sizes = [1, 8, 12], strides = [1, 1, 1]} : vector<8x8x12xf32> to vector<1x8x12xf32>
    %359 = vector.shape_cast %358 : vector<1x8x12xf32> to vector<8x12xf32>
    %360 = vector.extract_strided_slice %261 {offsets = [1, 0, 0], sizes = [1, 8, 12], strides = [1, 1, 1]} : vector<8x8x12xf32> to vector<1x8x12xf32>
    %361 = vector.shape_cast %360 : vector<1x8x12xf32> to vector<8x12xf32>
    %362 = vector.extract_strided_slice %261 {offsets = [2, 0, 0], sizes = [1, 8, 12], strides = [1, 1, 1]} : vector<8x8x12xf32> to vector<1x8x12xf32>
    %363 = vector.shape_cast %362 : vector<1x8x12xf32> to vector<8x12xf32>
    %364 = vector.extract_strided_slice %261 {offsets = [3, 0, 0], sizes = [1, 8, 12], strides = [1, 1, 1]} : vector<8x8x12xf32> to vector<1x8x12xf32>
    %365 = vector.shape_cast %364 : vector<1x8x12xf32> to vector<8x12xf32>
    %366 = tpu.concatenate %359, %361, %363, %365 in 1 : vector<8x12xf32>, vector<8x12xf32>, vector<8x12xf32>, vector<8x12xf32> -> vector<8x48xf32>
    %367 = vector.extract_strided_slice %261 {offsets = [4, 0, 0], sizes = [1, 8, 12], strides = [1, 1, 1]} : vector<8x8x12xf32> to vector<1x8x12xf32>
    %368 = vector.shape_cast %367 : vector<1x8x12xf32> to vector<8x12xf32>
    %369 = vector.extract_strided_slice %261 {offsets = [5, 0, 0], sizes = [1, 8, 12], strides = [1, 1, 1]} : vector<8x8x12xf32> to vector<1x8x12xf32>
    %370 = vector.shape_cast %369 : vector<1x8x12xf32> to vector<8x12xf32>
    %371 = vector.extract_strided_slice %261 {offsets = [6, 0, 0], sizes = [1, 8, 12], strides = [1, 1, 1]} : vector<8x8x12xf32> to vector<1x8x12xf32>
    %372 = vector.shape_cast %371 : vector<1x8x12xf32> to vector<8x12xf32>
    %373 = vector.extract_strided_slice %261 {offsets = [7, 0, 0], sizes = [1, 8, 12], strides = [1, 1, 1]} : vector<8x8x12xf32> to vector<1x8x12xf32>
    %374 = vector.shape_cast %373 : vector<1x8x12xf32> to vector<8x12xf32>
    %375 = tpu.concatenate %368, %370, %372, %374 in 1 : vector<8x12xf32>, vector<8x12xf32>, vector<8x12xf32>, vector<8x12xf32> -> vector<8x48xf32>
    %376 = tpu.concatenate %366, %375 in 0 : vector<8x48xf32>, vector<8x48xf32> -> vector<16x48xf32>
    %cst_67 = arith.constant 0.000000e+00 : f32
    %377 = vector.broadcast %cst_67 : f32 to vector<16x16xf32>
    %378 = tpu.concatenate %338, %357, %376, %377 in 1 : vector<16x32xf32>, vector<16x32xf32>, vector<16x48xf32>, vector<16x16xf32> -> vector<16x128xf32>
    %c0_68 = arith.constant 0 : index
    %c0_69 = arith.constant 0 : index
    %379 = vector.load %arg6[%c0_68, %c0_69] : memref<16x128xf32, #tpu.memory_space<vmem>>, vector<16x128xf32>
    tpu.vector_store %arg6[%c0_68, %c0_69], %378 {strides = array<i32>} : memref<16x128xf32, #tpu.memory_space<vmem>>, vector<16x128xf32>,
    return
  }
}

</mosaic_0001>

<llo_original>
// kernel: tpu_custom_call.1
$region0: #{tpu_custom_call.1}
  #allocation0 [shape = 'u32[]', space=smem, size = 0x4, offset = 0x4, fixed_abs, tag = 'smem constant byte address 0x4 - core index']
  #allocation1 [shape = 'u32[144,128]{1,0:T(1,128)}', space=vmem, size = 0x12000, scoped, tag = 'internal scratch']
  %s0 = inlined_call_operand.hbm [shape: f32[16,32], index: 0, kind: input, shape index: {}]
  %s1 = inlined_call_operand.hbm [shape: f32[24,24], index: 1, kind: input, shape index: {}]
  %s2 = inlined_call_operand.hbm [shape: f32[15,32], index: 2, kind: input, shape index: {}]
  %s3 = inlined_call_operand.hbm [shape: f32[8,8,8], index: 3, kind: input, shape index: {}]
  %s4 = inlined_call_operand.hbm [shape: f32[8,8,12], index: 4, kind: input, shape index: {}]
  %s5 = inlined_call_operand.hbm [shape: f32[296,128], index: 5, kind: input, shape index: {}]
  %s6 = inlined_call_operand.hbm [shape: f32[16,128], index: 6, kind: output, shape index: {}]
  %s7 = sld [smem:[#allocation0]]
  $region58: #{tpu_custom_call.1} parent=0
    _
  %s9 = ssub.s32 1, %s7
  %s10 = scalar_select 0, %s9, %s7
  $region1: #{tpu_custom_call.1} parent=0
    #allocation2 [shape = 'u8[8192]{0}', space=vmem, size = 0x2000, scoped, tag = 'input window, operand 0, single buffered']
    #allocation3 [shape = 's32[1]{0}', space=sflag, size = 0x4, scoped, tag = 'scoped memory for tpu_custom_call.1']
    #allocation4 [shape = 's32[1]{0}', space=sflag, size = 0x4, scoped, tag = 'scoped memory for tpu_custom_call.1']
    #allocation5 [shape = 'u8[12288]{0}', space=vmem, size = 0x3000, scoped, tag = 'input window, operand 1, single buffered']
    #allocation6 [shape = 's32[1]{0}', space=sflag, size = 0x4, scoped, tag = 'scoped memory for tpu_custom_call.1']
    #allocation7 [shape = 'u8[8192]{0}', space=vmem, size = 0x2000, scoped, tag = 'input window, operand 2, single buffered']
    #allocation8 [shape = 'u8[32768]{0}', space=vmem, size = 0x8000, scoped, tag = 'input window, operand 3, single buffered']
    #allocation9 [shape = 's32[1]{0}', space=sflag, size = 0x4, scoped, tag = 'scoped memory for tpu_custom_call.1']
    #allocation10 [shape = 'u8[32768]{0}', space=vmem, size = 0x8000, scoped, tag = 'input window, operand 4, single buffered']
    #allocation11 [shape = 'u8[151552]{0}', space=vmem, size = 0x25000, scoped, tag = 'input window, operand 5, single buffered']
    #allocation12 [shape = 's32[1]{0}', space=sflag, size = 0x4, scoped, tag = 'scoped memory for tpu_custom_call.1']
    #allocation13 [shape = 'u8[8192]{0}', space=vmem, size = 0x2000, scoped, tag = 'output window, operand 0, single buffered']
    %11 = vsyncpa [#allocation3], 0
    %12 = vsyncpa [#allocation6], 0
    %13 = vsyncpa [#allocation9], 0
    %14 = vsyncpa [#allocation12], 0
    %15 = vsyncpa [#allocation4], 0
    // Predicated region
    $region2: #{tpu_custom_call.1} parent=1 // pred_check
      _
    $region3: #{tpu_custom_call.1} parent=1 // pred_check_branch
      %17 = sbr.rel (0) target = $region5
    $region4: #{tpu_custom_call.1} parent=1 // pred_region
      %s19 = ssub.s32 256, 256
      %20 = vsyncadd [#allocation3], %s19
      %s21 = sshll.u32 [#allocation2], 4
      %s22 = int_to_ptr.vmem [resolvable:$true] %s21
      %27 = dma.hbm_to_vmem [thread:$0]  %s0, 256, %s22, [#allocation3], 128, 128, 8
    $region5: #{tpu_custom_call.1} parent=1 // pred_fallthru
      _
    // Predicated region
    $region6: #{tpu_custom_call.1} parent=1 // pred_check
      _
    $region7: #{tpu_custom_call.1} parent=1 // pred_check_branch
      %29 = sbr.rel (0) target = $region9
    $region8: #{tpu_custom_call.1} parent=1 // pred_region
      %s31 = ssub.s32 384, 384
      %32 = vsyncadd [#allocation6], %s31
      %s33 = sshll.u32 [#allocation5], 4
      %s34 = int_to_ptr.vmem [resolvable:$true] %s33
      %39 = dma.hbm_to_vmem [thread:$0]  %s1, 384, %s34, [#allocation6], 128, 128, 8
    $region9: #{tpu_custom_call.1} parent=1 // pred_fallthru
      _
    // Predicated region
    $region10: #{tpu_custom_call.1} parent=1 // pred_check
      _
    $region11: #{tpu_custom_call.1} parent=1 // pred_check_branch
      %41 = sbr.rel (0) target = $region13
    $region12: #{tpu_custom_call.1} parent=1 // pred_region
      %s43 = ssub.s32 256, 256
      %44 = vsyncadd [#allocation6], %s43
      %s45 = sshll.u32 [#allocation7], 4
      %s46 = int_to_ptr.vmem [resolvable:$true] %s45
      %51 = dma.hbm_to_vmem [thread:$0]  %s2, 256, %s46, [#allocation6], 128, 128, 8
    $region13: #{tpu_custom_call.1} parent=1 // pred_fallthru
      _
    // Predicated region
    $region14: #{tpu_custom_call.1} parent=1 // pred_check
      _
    $region15: #{tpu_custom_call.1} parent=1 // pred_check_branch
      %53 = sbr.rel (0) target = $region17
    $region16: #{tpu_custom_call.1} parent=1 // pred_region
      %s55 = ssub.s32 1024, 1024
      %56 = vsyncadd [#allocation9], %s55
      %s57 = sshll.u32 [#allocation8], 4
      %s58 = int_to_ptr.vmem [resolvable:$true] %s57
      %63 = dma.hbm_to_vmem [thread:$0]  %s3, 1024, %s58, [#allocation9], 128, 128, 8
    $region17: #{tpu_custom_call.1} parent=1 // pred_fallthru
      _
    // Predicated region
    $region18: #{tpu_custom_call.1} parent=1 // pred_check
      _
    $region19: #{tpu_custom_call.1} parent=1 // pred_check_branch
      %65 = sbr.rel (0) target = $region21
    $region20: #{tpu_custom_call.1} parent=1 // pred_region
      %s67 = ssub.s32 1024, 1024
      %68 = vsyncadd [#allocation9], %s67
      %s69 = sshll.u32 [#allocation10], 4
      %s70 = int_to_ptr.vmem [resolvable:$true] %s69
      %75 = dma.hbm_to_vmem [thread:$0]  %s4, 1024, %s70, [#allocation9], 128, 128, 8
    $region21: #{tpu_custom_call.1} parent=1 // pred_fallthru
      _
    // Predicated region
    $region22: #{tpu_custom_call.1} parent=1 // pred_check
      _
    $region23: #{tpu_custom_call.1} parent=1 // pred_check_branch
      %77 = sbr.rel (0) target = $region25
    $region24: #{tpu_custom_call.1} parent=1 // pred_region
      %s79 = ssub.s32 4736, 4736
      %80 = vsyncadd [#allocation12], %s79
      %s81 = sshll.u32 [#allocation11], 4
      %s82 = int_to_ptr.vmem [resolvable:$true] %s81
      %87 = dma.hbm_to_vmem [thread:$0]  %s5, 4736, %s82, [#allocation12], 128, 128, 8
    $region25: #{tpu_custom_call.1} parent=1 // pred_fallthru
      _
    // Predicated region
    $region26: #{tpu_custom_call.1} parent=1 // pred_check
      _
    $region27: #{tpu_custom_call.1} parent=1 // pred_check_branch
      %89 = sbr.rel (0) target = $region29
    $region28: #{tpu_custom_call.1} parent=1 // pred_region
      %90 = dma.done [#allocation3], 256
    $region29: #{tpu_custom_call.1} parent=1 // pred_fallthru
      _
    // Predicated region
    $region30: #{tpu_custom_call.1} parent=1 // pred_check
      _
    $region31: #{tpu_custom_call.1} parent=1 // pred_check_branch
      %92 = sbr.rel (0) target = $region33
    $region32: #{tpu_custom_call.1} parent=1 // pred_region
      %93 = dma.done [#allocation6], 384
    $region33: #{tpu_custom_call.1} parent=1 // pred_fallthru
      _
    // Predicated region
    $region34: #{tpu_custom_call.1} parent=1 // pred_check
      _
    $region35: #{tpu_custom_call.1} parent=1 // pred_check_branch
      %95 = sbr.rel (0) target = $region37
    $region36: #{tpu_custom_call.1} parent=1 // pred_region
      %96 = dma.done [#allocation6], 256
    $region37: #{tpu_custom_call.1} parent=1 // pred_fallthru
      _
    // Predicated region
    $region38: #{tpu_custom_call.1} parent=1 // pred_check
      _
    $region39: #{tpu_custom_call.1} parent=1 // pred_check_branch
      %98 = sbr.rel (0) target = $region41
    $region40: #{tpu_custom_call.1} parent=1 // pred_region
      %99 = dma.done [#allocation9], 1024
    $region41: #{tpu_custom_call.1} parent=1 // pred_fallthru
      _
    // Predicated region
    $region42: #{tpu_custom_call.1} parent=1 // pred_check
      _
    $region43: #{tpu_custom_call.1} parent=1 // pred_check_branch
      %101 = sbr.rel (0) target = $region45
    $region44: #{tpu_custom_call.1} parent=1 // pred_region
      %102 = dma.done [#allocation9], 1024
    $region45: #{tpu_custom_call.1} parent=1 // pred_fallthru
      _
    // Predicated region
    $region46: #{tpu_custom_call.1} parent=1 // pred_check
      _
    $region47: #{tpu_custom_call.1} parent=1 // pred_check_branch
      %104 = sbr.rel (0) target = $region49
    $region48: #{tpu_custom_call.1} parent=1 // pred_region
      %105 = dma.done [#allocation12], 4736
    $region49: #{tpu_custom_call.1} parent=1 // pred_fallthru
      _
    %v106 = vld [vmem:[#allocation2] sm:$0xff]
    %v107 = vld [vmem:[#allocation2 + $0x8] sm:$0xff]
    %v108 = vld [vmem:[#allocation5] sm:$0xff]
    %v109 = vld [vmem:[#allocation5 + $0x8] sm:$0xff]
    %v110 = vld [vmem:[#allocation5 + $0x10] sm:$0xff]
    %v111 = vld [vmem:[#allocation7] sm:$0xff]
    %v112 = vld [vmem:[#allocation7 + $0x8] sm:$0x7f]
    %v113 = vld [vmem:[#allocation8] sm:$0xff]
    %v114 = vld [vmem:[#allocation8 + $0x8] sm:$0xff]
    %v115 = vld [vmem:[#allocation8 + $0x10] sm:$0xff]
    %v116 = vld [vmem:[#allocation8 + $0x18] sm:$0xff]
    %v117 = vld [vmem:[#allocation8 + $0x20] sm:$0xff]
    %v118 = vld [vmem:[#allocation8 + $0x28] sm:$0xff]
    %v119 = vld [vmem:[#allocation8 + $0x30] sm:$0xff]
    %v120 = vld [vmem:[#allocation8 + $0x38] sm:$0xff]
    %v121 = vld [vmem:[#allocation10] sm:$0xff]
    %v122 = vld [vmem:[#allocation10 + $0x8] sm:$0xff]
    %v123 = vld [vmem:[#allocation10 + $0x10] sm:$0xff]
    %v124 = vld [vmem:[#allocation10 + $0x18] sm:$0xff]
    %v125 = vld [vmem:[#allocation10 + $0x20] sm:$0xff]
    %v126 = vld [vmem:[#allocation10 + $0x28] sm:$0xff]
    %v127 = vld [vmem:[#allocation10 + $0x30] sm:$0xff]
    %v128 = vld [vmem:[#allocation10 + $0x38] sm:$0xff]
    %v129 = vld [vmem:[#allocation11] sm:$0xff]
    %v130 = vld [vmem:[#allocation11 + $0x8] sm:$0xff]
    %v131 = vld [vmem:[#allocation11 + $0x10] sm:$0xff]
    %v132 = vld [vmem:[#allocation11 + $0x18] sm:$0xff]
    %v133 = vld [vmem:[#allocation11 + $0x20] sm:$0xff]
    %v134 = vld [vmem:[#allocation11 + $0x28] sm:$0xff]
    %v135 = vld [vmem:[#allocation11 + $0x30] sm:$0xff]
    %v136 = vld [vmem:[#allocation11 + $0x38] sm:$0xff]
    %v137 = vld [vmem:[#allocation11 + $0x40] sm:$0xff]
    %v138 = vld [vmem:[#allocation11 + $0x48] sm:$0xff]
    %v139 = vld [vmem:[#allocation11 + $0x50] sm:$0xff]
    %v140 = vld [vmem:[#allocation11 + $0x58] sm:$0xff]
    %v141 = vld [vmem:[#allocation11 + $0x60] sm:$0xff]
    %v142 = vld [vmem:[#allocation11 + $0x68] sm:$0xff]
    %v143 = vld [vmem:[#allocation11 + $0x70] sm:$0xff]
    %v144 = vld [vmem:[#allocation11 + $0x78] sm:$0xff]
    %v145 = vld [vmem:[#allocation11 + $0x80] sm:$0xff]
    %v146 = vld [vmem:[#allocation11 + $0x88] sm:$0xff]
    %v147 = vld [vmem:[#allocation11 + $0x90] sm:$0xff]
    %v148 = vld [vmem:[#allocation11 + $0x98] sm:$0xff]
    %v149 = vld [vmem:[#allocation11 + $0xa0] sm:$0xff]
    %v150 = vld [vmem:[#allocation11 + $0xa8] sm:$0xff]
    %v151 = vld [vmem:[#allocation11 + $0xb0] sm:$0xff]
    %v152 = vld [vmem:[#allocation11 + $0xb8] sm:$0xff]
    %v153 = vld [vmem:[#allocation11 + $0xc0] sm:$0xff]
    %v154 = vld [vmem:[#allocation11 + $0xc8] sm:$0xff]
    %v155 = vld [vmem:[#allocation11 + $0xd0] sm:$0xff]
    %v156 = vld [vmem:[#allocation11 + $0xd8] sm:$0xff]
    %v157 = vld [vmem:[#allocation11 + $0xe0] sm:$0xff]
    %v158 = vld [vmem:[#allocation11 + $0xe8] sm:$0xff]
    %v159 = vld [vmem:[#allocation11 + $0xf0] sm:$0xff]
    %v160 = vld [vmem:[#allocation11 + $0xf8] sm:$0xff]
    %v161 = vld [vmem:[#allocation11 + $0x100] sm:$0xff]
    %v162 = vld [vmem:[#allocation11 + $0x108] sm:$0xff]
    %v163 = vld [vmem:[#allocation11 + $0x110] sm:$0xff]
    %v164 = vld [vmem:[#allocation11 + $0x118] sm:$0x1]
    %v165 = vld [vmem:[#allocation11 + $0x119] sm:$0x1]
    %v166 = vld [vmem:[#allocation11 + $0x11a] sm:$0x1]
    %v167 = vld [vmem:[#allocation11 + $0x11b] sm:$0x1]
    %v168 = vld [vmem:[#allocation11 + $0x11c] sm:$0x1]
    %v169 = vld [vmem:[#allocation11 + $0x11d] sm:$0x1]
    %v170 = vld [vmem:[#allocation11 + $0x11e] sm:$0x1]
    %v171 = vld [vmem:[#allocation11 + $0x11f] sm:$0x1]
    %v172 = vld [vmem:[#allocation11 + $0x120] sm:$0x1]
    %v173 = vld [vmem:[#allocation11 + $0x121] sm:$0x1]
    %v174 = vld [vmem:[#allocation11 + $0x122] sm:$0x1]
    %v175 = vld [vmem:[#allocation11 + $0x123] sm:$0x1]
    %v176 = vld [vmem:[#allocation11 + $0x124] sm:$0x1]
    %v177 = vld [vmem:[#allocation11 + $0x125] sm:$0x1]
    %v178 = vld [vmem:[#allocation11 + $0x126] sm:$0x1]
    %v179 = vlaneseq
    %v180 = vshrl.u32 %v179, 7
    %v181 = vsub.s32 0, %v180
    %v182 = vrot.slane %v164, %v181
    %vm183 = vcmask 261120
    %v185 = vsel %vm183, %v106, 0
    %v188 = vsel %vm183, %v107, 0
    %190 = vmatprep.subr.mxu0 0.0
    %191 = vmatpush1.msra.mxu0 %v129
    %192 = vmatprep.subr.mxu0 0.0
    %193 = vmatpush1.msra.mxu0 %v130
    %194 = vmatprep.subr.mxu0 0.0
    %195 = vmatpush1.msra.mxu0 %v131
    %196 = vmatprep.subr.mxu0 0.0
    %197 = vmatpush1.msra.mxu0 %v132
    %198 = vmatprep.subr.mxu0 0.0
    %199 = vmatpush1.msra.mxu0 0.0
    %200 = vmatprep.subr.mxu0 0.0
    %201 = vmatpush1.msra.mxu0 0.0
    %202 = vmatprep.subr.mxu0 0.0
    %203 = vmatpush1.msra.mxu0 0.0
    %204 = vmatprep.subr.mxu0 0.0
    %205 = vmatpush1.msra.mxu0 0.0
    %206 = vmatprep.subr.mxu0 0.0
    %207 = vmatpush1.msra.mxu0 0.0
    %208 = vmatprep.subr.mxu0 0.0
    %209 = vmatpush1.msra.mxu0 0.0
    %210 = vmatprep.subr.mxu0 0.0
    %211 = vmatpush1.msra.mxu0 0.0
    %212 = vmatprep.subr.mxu0 0.0
    %213 = vmatpush1.msra.mxu0 0.0
    %214 = vmatprep.subr.mxu0 0.0
    %215 = vmatpush1.msra.mxu0 0.0
    %216 = vmatprep.subr.mxu0 0.0
    %217 = vmatpush1.msra.mxu0 0.0
    %218 = vmatprep.subr.mxu0 0.0
    %219 = vmatpush1.msra.mxu0 0.0
    %220 = vmatprep.subr.mxu0 0.0
    %221 = vmatpush1.msra.mxu0 0.0
    %222 = vmatprep.subr.mxu0 0.0
    %223 = vmatpush1.msra.mxu0 0.0
    %224 = vmatprep.subr.mxu0 0.0
    %225 = vmatpush1.msra.mxu0 0.0
    %226 = vmatprep.subr.mxu0 0.0
    %227 = vmatpush1.msra.mxu0 0.0
    %228 = vmatprep.subr.mxu0 0.0
    %229 = vmatpush1.msra.mxu0 0.0
    %230 = vmatprep.subr.mxu0 0.0
    %231 = vmatpush1.msra.mxu0 0.0
    %232 = vmatprep.subr.mxu0 0.0
    %233 = vmatpush1.msra.mxu0 0.0
    %234 = vmatprep.subr.mxu0 0.0
    %235 = vmatpush1.msra.mxu0 0.0
    %236 = vmatprep.subr.mxu0 0.0
    %237 = vmatpush1.msra.mxu0 0.0
    %238 = vmatprep.subr.mxu0 0.0
    %239 = vmatpush1.msra.mxu0 0.0
    %240 = vmatprep.subr.mxu0 0.0
    %241 = vmatpush1.msra.mxu0 0.0
    %242 = vmatprep.subr.mxu0 0.0
    %243 = vmatpush1.msra.mxu0 0.0
    %244 = vmatprep.subr.mxu0 0.0
    %245 = vmatpush1.msra.mxu0 0.0
    %246 = vmatprep.subr.mxu0 0.0
    %247 = vmatpush1.msra.mxu0 0.0
    %248 = vmatprep.subr.mxu0 0.0
    %249 = vmatpush1.msra.mxu0 0.0
    %250 = vmatprep.subr.mxu0 0.0
    %251 = vmatpush1.msra.mxu0 0.0
    %252 = vmatprep.subr.mxu0 0.0
    %253 = vmatpush1.msra.mxu0 0.0
    %254 = vmatprep.mubr.f32.mxu0 0.0
    %255 = vmatmul.mubr.f32.gmra.mrb[0].mxu0 %v185
    %v256 = vpop.f32.mrb[0].mxu0
    %v257 = vadd.f32 %v182, %v256
    %v258 = vpop.f32.mrb[0].mxu0
    %259 = vmatprep.mubr.f32.mxu0 0.0
    %260 = vmatmul.mubr.f32.gmra.mrb[0].mxu0 %v188
    %v261 = vpop.f32.mrb[0].mxu0
    %v262 = vadd.f32 %v182, %v261
    %v263 = vpop.f32.mrb[0].mxu0
    %264 = vdwg.mxu0
    %v266 = vsel %vm183, %v111, 0
    %v269 = vsel %vm183, %v112, 0
    %271 = vmatprep.subr.mxu0 0.0
    %272 = vmatpush1.msra.mxu0 %v133
    %273 = vmatprep.subr.mxu0 0.0
    %274 = vmatpush1.msra.mxu0 %v134
    %275 = vmatprep.subr.mxu0 0.0
    %276 = vmatpush1.msra.mxu0 %v135
    %277 = vmatprep.subr.mxu0 0.0
    %278 = vmatpush1.msra.mxu0 %v136
    %279 = vmatprep.subr.mxu0 0.0
    %280 = vmatpush1.msra.mxu0 0.0
    %281 = vmatprep.subr.mxu0 0.0
    %282 = vmatpush1.msra.mxu0 0.0
    %283 = vmatprep.subr.mxu0 0.0
    %284 = vmatpush1.msra.mxu0 0.0
    %285 = vmatprep.subr.mxu0 0.0
    %286 = vmatpush1.msra.mxu0 0.0
    %287 = vmatprep.subr.mxu0 0.0
    %288 = vmatpush1.msra.mxu0 0.0
    %289 = vmatprep.subr.mxu0 0.0
    %290 = vmatpush1.msra.mxu0 0.0
    %291 = vmatprep.subr.mxu0 0.0
    %292 = vmatpush1.msra.mxu0 0.0
    %293 = vmatprep.subr.mxu0 0.0
    %294 = vmatpush1.msra.mxu0 0.0
    %295 = vmatprep.subr.mxu0 0.0
    %296 = vmatpush1.msra.mxu0 0.0
    %297 = vmatprep.subr.mxu0 0.0
    %298 = vmatpush1.msra.mxu0 0.0
    %299 = vmatprep.subr.mxu0 0.0
    %300 = vmatpush1.msra.mxu0 0.0
    %301 = vmatprep.subr.mxu0 0.0
    %302 = vmatpush1.msra.mxu0 0.0
    %303 = vmatprep.subr.mxu0 0.0
    %304 = vmatpush1.msra.mxu0 0.0
    %305 = vmatprep.subr.mxu0 0.0
    %306 = vmatpush1.msra.mxu0 0.0
    %307 = vmatprep.subr.mxu0 0.0
    %308 = vmatpush1.msra.mxu0 0.0
    %309 = vmatprep.subr.mxu0 0.0
    %310 = vmatpush1.msra.mxu0 0.0
    %311 = vmatprep.subr.mxu0 0.0
    %312 = vmatpush1.msra.mxu0 0.0
    %313 = vmatprep.subr.mxu0 0.0
    %314 = vmatpush1.msra.mxu0 0.0
    %315 = vmatprep.subr.mxu0 0.0
    %316 = vmatpush1.msra.mxu0 0.0
    %317 = vmatprep.subr.mxu0 0.0
    %318 = vmatpush1.msra.mxu0 0.0
    %319 = vmatprep.subr.mxu0 0.0
    %320 = vmatpush1.msra.mxu0 0.0
    %321 = vmatprep.subr.mxu0 0.0
    %322 = vmatpush1.msra.mxu0 0.0
    %323 = vmatprep.subr.mxu0 0.0
    %324 = vmatpush1.msra.mxu0 0.0
    %325 = vmatprep.subr.mxu0 0.0
    %326 = vmatpush1.msra.mxu0 0.0
    %327 = vmatprep.subr.mxu0 0.0
    %328 = vmatpush1.msra.mxu0 0.0
    %329 = vmatprep.subr.mxu0 0.0
    %330 = vmatpush1.msra.mxu0 0.0
    %331 = vmatprep.subr.mxu0 0.0
    %332 = vmatpush1.msra.mxu0 0.0
    %333 = vmatprep.subr.mxu0 0.0
    %334 = vmatpush1.msra.mxu0 0.0
    %335 = vmatprep.mubr.f32.mxu0 0.0
    %336 = vmatmul.mubr.f32.gmra.mrb[0].mxu0 %v266
    %v337 = vpop.f32.mrb[0].mxu0
    %v338 = vadd.f32 0.0, %v337
    %v339 = vpop.f32.mrb[0].mxu0
    %340 = vmatprep.mubr.f32.mxu0 0.0
    %341 = vmatmul.mubr.f32.gmra.mrb[0].mxu0 %v269
    %v342 = vpop.f32.mrb[0].mxu0
    %v343 = vadd.f32 0.0, %v342
    %v344 = vpop.f32.mrb[0].mxu0
    %345 = vdwg.mxu0
    %v346 = vlaneseq
    %v347 = vshrl.u32 %v346, 7
    %v348 = vsub.s32 0, %v347
    %v349 = vrot.slane %v177, %v348
    %v350 = vadd.f32 %v257, %v349
    %v351 = vadd.f32 %v262, %v349
    %353 = vrot.lane.b32.xlu0 %v350, 120
    %v354 = vpop.permute.xlu0 %353
    %355 = vrot.lane.b32.xlu0 %v350, 112
    %v356 = vpop.permute.xlu0 %355
    %357 = vrot.lane.b32.xlu0 %v350, 104
    %v358 = vpop.permute.xlu0 %357
    %360 = vrot.lane.b32.xlu0 %v351, 120
    %v361 = vpop.permute.xlu0 %360
    %362 = vrot.lane.b32.xlu0 %v351, 112
    %v363 = vpop.permute.xlu0 %362
    %364 = vrot.lane.b32.xlu0 %v351, 104
    %v365 = vpop.permute.xlu0 %364
    %v366 = vlaneseq
    %v367 = vshrl.u32 %v366, 7
    %v368 = vsub.s32 0, %v367
    %v369 = vrot.slane %v178, %v368
    %v370 = vadd.f32 %v257, %v369
    %v371 = vadd.f32 %v262, %v369
    %373 = vrot.lane.b32.xlu0 %v370, 120
    %v374 = vpop.permute.xlu0 %373
    %375 = vrot.lane.b32.xlu0 %v370, 112
    %v376 = vpop.permute.xlu0 %375
    %377 = vrot.lane.b32.xlu0 %v370, 104
    %v378 = vpop.permute.xlu0 %377
    %380 = vrot.lane.b32.xlu0 %v371, 120
    %v381 = vpop.permute.xlu0 %380
    %382 = vrot.lane.b32.xlu0 %v371, 112
    %v383 = vpop.permute.xlu0 %382
    %384 = vrot.lane.b32.xlu0 %v371, 104
    %v385 = vpop.permute.xlu0 %384
    %387 = vrot.lane.b32.xlu0 %v257, 120
    %v388 = vpop.permute.xlu0 %387
    %389 = vrot.lane.b32.xlu0 %v257, 112
    %v390 = vpop.permute.xlu0 %389
    %391 = vrot.lane.b32.xlu0 %v257, 104
    %v392 = vpop.permute.xlu0 %391
    %394 = vrot.lane.b32.xlu0 %v262, 120
    %v395 = vpop.permute.xlu0 %394
    %396 = vrot.lane.b32.xlu0 %v262, 112
    %v397 = vpop.permute.xlu0 %396
    %398 = vrot.lane.b32.xlu0 %v262, 104
    %v399 = vpop.permute.xlu0 %398
    %402 = vrot.lane.b32.xlu0 %v338, 120
    %v403 = vpop.permute.xlu0 %402
    %404 = vrot.lane.b32.xlu0 %v343, 120
    %v405 = vpop.permute.xlu0 %404
    %406 = vrot.lane.b32.xlu0 %v338, 112
    %v407 = vpop.permute.xlu0 %406
    %408 = vrot.lane.b32.xlu0 %v343, 112
    %v409 = vpop.permute.xlu0 %408
    %410 = vrot.lane.b32.xlu0 %v338, 104
    %v411 = vpop.permute.xlu0 %410
    %412 = vrot.lane.b32.xlu0 %v343, 104
    %v413 = vpop.permute.xlu0 %412
    %vm414 = vcmask 64512
    %v415 = vsel %vm414, %v370, 0
    %v417 = vsel %vm414, %v338, 0
    %v419 = vsel %vm414, %v343, 0
    %421 = vmatprep.subr.mxu0 0.0
    %422 = vmatpush1.xpose.msra.mxu0 %v417
    %423 = vmatprep.subr.mxu0 0.0
    %424 = vmatpush1.xpose.msra.mxu0 %v419
    %425 = vmatprep.subr.mxu0 0.0
    %426 = vmatpush1.xpose.msra.mxu0 0.0
    %427 = vmatprep.subr.mxu0 0.0
    %428 = vmatpush1.xpose.msra.mxu0 0.0
    %429 = vmatprep.subr.mxu0 0.0
    %430 = vmatpush1.xpose.msra.mxu0 0.0
    %431 = vmatprep.subr.mxu0 0.0
    %432 = vmatpush1.xpose.msra.mxu0 0.0
    %433 = vmatprep.subr.mxu0 0.0
    %434 = vmatpush1.xpose.msra.mxu0 0.0
    %435 = vmatprep.subr.mxu0 0.0
    %436 = vmatpush1.xpose.msra.mxu0 0.0
    %437 = vmatprep.subr.mxu0 0.0
    %438 = vmatpush1.xpose.msra.mxu0 0.0
    %439 = vmatprep.subr.mxu0 0.0
    %440 = vmatpush1.xpose.msra.mxu0 0.0
    %441 = vmatprep.subr.mxu0 0.0
    %442 = vmatpush1.xpose.msra.mxu0 0.0
    %443 = vmatprep.subr.mxu0 0.0
    %444 = vmatpush1.xpose.msra.mxu0 0.0
    %445 = vmatprep.subr.mxu0 0.0
    %446 = vmatpush1.xpose.msra.mxu0 0.0
    %447 = vmatprep.subr.mxu0 0.0
    %448 = vmatpush1.xpose.msra.mxu0 0.0
    %449 = vmatprep.subr.mxu0 0.0
    %450 = vmatpush1.xpose.msra.mxu0 0.0
    %451 = vmatprep.subr.mxu0 0.0
    %452 = vmatpush1.xpose.msra.mxu0 0.0
    %453 = vmatprep.subr.mxu0 0.0
    %454 = vmatpush1.xpose.msra.mxu0 0.0
    %455 = vmatprep.subr.mxu0 0.0
    %456 = vmatpush1.xpose.msra.mxu0 0.0
    %457 = vmatprep.subr.mxu0 0.0
    %458 = vmatpush1.xpose.msra.mxu0 0.0
    %459 = vmatprep.subr.mxu0 0.0
    %460 = vmatpush1.xpose.msra.mxu0 0.0
    %461 = vmatprep.subr.mxu0 0.0
    %462 = vmatpush1.xpose.msra.mxu0 0.0
    %463 = vmatprep.subr.mxu0 0.0
    %464 = vmatpush1.xpose.msra.mxu0 0.0
    %465 = vmatprep.subr.mxu0 0.0
    %466 = vmatpush1.xpose.msra.mxu0 0.0
    %467 = vmatprep.subr.mxu0 0.0
    %468 = vmatpush1.xpose.msra.mxu0 0.0
    %469 = vmatprep.subr.mxu0 0.0
    %470 = vmatpush1.xpose.msra.mxu0 0.0
    %471 = vmatprep.subr.mxu0 0.0
    %472 = vmatpush1.xpose.msra.mxu0 0.0
    %473 = vmatprep.subr.mxu0 0.0
    %474 = vmatpush1.xpose.msra.mxu0 0.0
    %475 = vmatprep.subr.mxu0 0.0
    %476 = vmatpush1.xpose.msra.mxu0 0.0
    %477 = vmatprep.subr.mxu0 0.0
    %478 = vmatpush1.xpose.msra.mxu0 0.0
    %479 = vmatprep.subr.mxu0 0.0
    %480 = vmatpush1.xpose.msra.mxu0 0.0
    %481 = vmatprep.subr.mxu0 0.0
    %482 = vmatpush1.xpose.msra.mxu0 0.0
    %483 = vmatprep.subr.mxu0 0.0
    %484 = vmatpush1.xpose.msra.mxu0 0.0
    %485 = vmatprep.mubr.f32.mxu0 0.0
    %486 = vmatmul.mubr.f32.gmra.mrb[0].mxu0 %v415
    %v487 = vpop.f32.mrb[0].mxu0
    %v488 = vadd.f32 0.0, %v487
    %v489 = vpop.f32.mrb[0].mxu0
    %490 = vdwg.mxu0
    %v491 = vsel %vm414, %v374, 0
    %v493 = vsel %vm414, %v403, 0
    %v495 = vsel %vm414, %v405, 0
    %497 = vmatprep.subr.mxu0 0.0
    %498 = vmatpush1.xpose.msra.mxu0 %v493
    %499 = vmatprep.subr.mxu0 0.0
    %500 = vmatpush1.xpose.msra.mxu0 %v495
    %501 = vmatprep.subr.mxu0 0.0
    %502 = vmatpush1.xpose.msra.mxu0 0.0
    %503 = vmatprep.subr.mxu0 0.0
    %504 = vmatpush1.xpose.msra.mxu0 0.0
    %505 = vmatprep.subr.mxu0 0.0
    %506 = vmatpush1.xpose.msra.mxu0 0.0
    %507 = vmatprep.subr.mxu0 0.0
    %508 = vmatpush1.xpose.msra.mxu0 0.0
    %509 = vmatprep.subr.mxu0 0.0
    %510 = vmatpush1.xpose.msra.mxu0 0.0
    %511 = vmatprep.subr.mxu0 0.0
    %512 = vmatpush1.xpose.msra.mxu0 0.0
    %513 = vmatprep.subr.mxu0 0.0
    %514 = vmatpush1.xpose.msra.mxu0 0.0
    %515 = vmatprep.subr.mxu0 0.0
    %516 = vmatpush1.xpose.msra.mxu0 0.0
    %517 = vmatprep.subr.mxu0 0.0
    %518 = vmatpush1.xpose.msra.mxu0 0.0
    %519 = vmatprep.subr.mxu0 0.0
    %520 = vmatpush1.xpose.msra.mxu0 0.0
    %521 = vmatprep.subr.mxu0 0.0
    %522 = vmatpush1.xpose.msra.mxu0 0.0
    %523 = vmatprep.subr.mxu0 0.0
    %524 = vmatpush1.xpose.msra.mxu0 0.0
    %525 = vmatprep.subr.mxu0 0.0
    %526 = vmatpush1.xpose.msra.mxu0 0.0
    %527 = vmatprep.subr.mxu0 0.0
    %528 = vmatpush1.xpose.msra.mxu0 0.0
    %529 = vmatprep.subr.mxu0 0.0
    %530 = vmatpush1.xpose.msra.mxu0 0.0
    %531 = vmatprep.subr.mxu0 0.0
    %532 = vmatpush1.xpose.msra.mxu0 0.0
    %533 = vmatprep.subr.mxu0 0.0
    %534 = vmatpush1.xpose.msra.mxu0 0.0
    %535 = vmatprep.subr.mxu0 0.0
    %536 = vmatpush1.xpose.msra.mxu0 0.0
    %537 = vmatprep.subr.mxu0 0.0
    %538 = vmatpush1.xpose.msra.mxu0 0.0
    %539 = vmatprep.subr.mxu0 0.0
    %540 = vmatpush1.xpose.msra.mxu0 0.0
    %541 = vmatprep.subr.mxu0 0.0
    %542 = vmatpush1.xpose.msra.mxu0 0.0
    %543 = vmatprep.subr.mxu0 0.0
    %544 = vmatpush1.xpose.msra.mxu0 0.0
    %545 = vmatprep.subr.mxu0 0.0
    %546 = vmatpush1.xpose.msra.mxu0 0.0
    %547 = vmatprep.subr.mxu0 0.0
    %548 = vmatpush1.xpose.msra.mxu0 0.0
    %549 = vmatprep.subr.mxu0 0.0
    %550 = vmatpush1.xpose.msra.mxu0 0.0
    %551 = vmatprep.subr.mxu0 0.0
    %552 = vmatpush1.xpose.msra.mxu0 0.0
    %553 = vmatprep.subr.mxu0 0.0
    %554 = vmatpush1.xpose.msra.mxu0 0.0
    %555 = vmatprep.subr.mxu0 0.0
    %556 = vmatpush1.xpose.msra.mxu0 0.0
    %557 = vmatprep.subr.mxu0 0.0
    %558 = vmatpush1.xpose.msra.mxu0 0.0
    %559 = vmatprep.subr.mxu0 0.0
    %560 = vmatpush1.xpose.msra.mxu0 0.0
    %561 = vmatprep.mubr.f32.mxu0 0.0
    %562 = vmatmul.mubr.f32.gmra.mrb[0].mxu0 %v491
    %v563 = vpop.f32.mrb[0].mxu0
    %v564 = vadd.f32 0.0, %v563
    %v565 = vpop.f32.mrb[0].mxu0
    %566 = vdwg.mxu0
    %v567 = vsel %vm414, %v376, 0
    %v569 = vsel %vm414, %v407, 0
    %v571 = vsel %vm414, %v409, 0
    %573 = vmatprep.subr.mxu0 0.0
    %574 = vmatpush1.xpose.msra.mxu0 %v569
    %575 = vmatprep.subr.mxu0 0.0
    %576 = vmatpush1.xpose.msra.mxu0 %v571
    %577 = vmatprep.subr.mxu0 0.0
    %578 = vmatpush1.xpose.msra.mxu0 0.0
    %579 = vmatprep.subr.mxu0 0.0
    %580 = vmatpush1.xpose.msra.mxu0 0.0
    %581 = vmatprep.subr.mxu0 0.0
    %582 = vmatpush1.xpose.msra.mxu0 0.0
    %583 = vmatprep.subr.mxu0 0.0
    %584 = vmatpush1.xpose.msra.mxu0 0.0
    %585 = vmatprep.subr.mxu0 0.0
    %586 = vmatpush1.xpose.msra.mxu0 0.0
    %587 = vmatprep.subr.mxu0 0.0
    %588 = vmatpush1.xpose.msra.mxu0 0.0
    %589 = vmatprep.subr.mxu0 0.0
    %590 = vmatpush1.xpose.msra.mxu0 0.0
    %591 = vmatprep.subr.mxu0 0.0
    %592 = vmatpush1.xpose.msra.mxu0 0.0
    %593 = vmatprep.subr.mxu0 0.0
    %594 = vmatpush1.xpose.msra.mxu0 0.0
    %595 = vmatprep.subr.mxu0 0.0
    %596 = vmatpush1.xpose.msra.mxu0 0.0
    %597 = vmatprep.subr.mxu0 0.0
    %598 = vmatpush1.xpose.msra.mxu0 0.0
    %599 = vmatprep.subr.mxu0 0.0
    %600 = vmatpush1.xpose.msra.mxu0 0.0
    %601 = vmatprep.subr.mxu0 0.0
    %602 = vmatpush1.xpose.msra.mxu0 0.0
    %603 = vmatprep.subr.mxu0 0.0
    %604 = vmatpush1.xpose.msra.mxu0 0.0
    %605 = vmatprep.subr.mxu0 0.0
    %606 = vmatpush1.xpose.msra.mxu0 0.0
    %607 = vmatprep.subr.mxu0 0.0
    %608 = vmatpush1.xpose.msra.mxu0 0.0
    %609 = vmatprep.subr.mxu0 0.0
    %610 = vmatpush1.xpose.msra.mxu0 0.0
    %611 = vmatprep.subr.mxu0 0.0
    %612 = vmatpush1.xpose.msra.mxu0 0.0
    %613 = vmatprep.subr.mxu0 0.0
    %614 = vmatpush1.xpose.msra.mxu0 0.0
    %615 = vmatprep.subr.mxu0 0.0
    %616 = vmatpush1.xpose.msra.mxu0 0.0
    %617 = vmatprep.subr.mxu0 0.0
    %618 = vmatpush1.xpose.msra.mxu0 0.0
    %619 = vmatprep.subr.mxu0 0.0
    %620 = vmatpush1.xpose.msra.mxu0 0.0
    %621 = vmatprep.subr.mxu0 0.0
    %622 = vmatpush1.xpose.msra.mxu0 0.0
    %623 = vmatprep.subr.mxu0 0.0
    %624 = vmatpush1.xpose.msra.mxu0 0.0
    %625 = vmatprep.subr.mxu0 0.0
    %626 = vmatpush1.xpose.msra.mxu0 0.0
    %627 = vmatprep.subr.mxu0 0.0
    %628 = vmatpush1.xpose.msra.mxu0 0.0
    %629 = vmatprep.subr.mxu0 0.0
    %630 = vmatpush1.xpose.msra.mxu0 0.0
    %631 = vmatprep.subr.mxu0 0.0
    %632 = vmatpush1.xpose.msra.mxu0 0.0
    %633 = vmatprep.subr.mxu0 0.0
    %634 = vmatpush1.xpose.msra.mxu0 0.0
    %635 = vmatprep.subr.mxu0 0.0
    %636 = vmatpush1.xpose.msra.mxu0 0.0
    %637 = vmatprep.mubr.f32.mxu0 0.0
    %638 = vmatmul.mubr.f32.gmra.mrb[0].mxu0 %v567
    %v639 = vpop.f32.mrb[0].mxu0
    %v640 = vadd.f32 0.0, %v639
    %v641 = vpop.f32.mrb[0].mxu0
    %642 = vdwg.mxu0
    %v643 = vsel %vm414, %v378, 0
    %v645 = vsel %vm414, %v411, 0
    %v647 = vsel %vm414, %v413, 0
    %649 = vmatprep.subr.mxu0 0.0
    %650 = vmatpush1.xpose.msra.mxu0 %v645
    %651 = vmatprep.subr.mxu0 0.0
    %652 = vmatpush1.xpose.msra.mxu0 %v647
    %653 = vmatprep.subr.mxu0 0.0
    %654 = vmatpush1.xpose.msra.mxu0 0.0
    %655 = vmatprep.subr.mxu0 0.0
    %656 = vmatpush1.xpose.msra.mxu0 0.0
    %657 = vmatprep.subr.mxu0 0.0
    %658 = vmatpush1.xpose.msra.mxu0 0.0
    %659 = vmatprep.subr.mxu0 0.0
    %660 = vmatpush1.xpose.msra.mxu0 0.0
    %661 = vmatprep.subr.mxu0 0.0
    %662 = vmatpush1.xpose.msra.mxu0 0.0
    %663 = vmatprep.subr.mxu0 0.0
    %664 = vmatpush1.xpose.msra.mxu0 0.0
    %665 = vmatprep.subr.mxu0 0.0
    %666 = vmatpush1.xpose.msra.mxu0 0.0
    %667 = vmatprep.subr.mxu0 0.0
    %668 = vmatpush1.xpose.msra.mxu0 0.0
    %669 = vmatprep.subr.mxu0 0.0
    %670 = vmatpush1.xpose.msra.mxu0 0.0
    %671 = vmatprep.subr.mxu0 0.0
    %672 = vmatpush1.xpose.msra.mxu0 0.0
    %673 = vmatprep.subr.mxu0 0.0
    %674 = vmatpush1.xpose.msra.mxu0 0.0
    %675 = vmatprep.subr.mxu0 0.0
    %676 = vmatpush1.xpose.msra.mxu0 0.0
    %677 = vmatprep.subr.mxu0 0.0
    %678 = vmatpush1.xpose.msra.mxu0 0.0
    %679 = vmatprep.subr.mxu0 0.0
    %680 = vmatpush1.xpose.msra.mxu0 0.0
    %681 = vmatprep.subr.mxu0 0.0
    %682 = vmatpush1.xpose.msra.mxu0 0.0
    %683 = vmatprep.subr.mxu0 0.0
    %684 = vmatpush1.xpose.msra.mxu0 0.0
    %685 = vmatprep.subr.mxu0 0.0
    %686 = vmatpush1.xpose.msra.mxu0 0.0
    %687 = vmatprep.subr.mxu0 0.0
    %688 = vmatpush1.xpose.msra.mxu0 0.0
    %689 = vmatprep.subr.mxu0 0.0
    %690 = vmatpush1.xpose.msra.mxu0 0.0
    %691 = vmatprep.subr.mxu0 0.0
    %692 = vmatpush1.xpose.msra.mxu0 0.0
    %693 = vmatprep.subr.mxu0 0.0
    %694 = vmatpush1.xpose.msra.mxu0 0.0
    %695 = vmatprep.subr.mxu0 0.0
    %696 = vmatpush1.xpose.msra.mxu0 0.0
    %697 = vmatprep.subr.mxu0 0.0
    %698 = vmatpush1.xpose.msra.mxu0 0.0
    %699 = vmatprep.subr.mxu0 0.0
    %700 = vmatpush1.xpose.msra.mxu0 0.0
    %701 = vmatprep.subr.mxu0 0.0
    %702 = vmatpush1.xpose.msra.mxu0 0.0
    %703 = vmatprep.subr.mxu0 0.0
    %704 = vmatpush1.xpose.msra.mxu0 0.0
    %705 = vmatprep.subr.mxu0 0.0
    %706 = vmatpush1.xpose.msra.mxu0 0.0
    %707 = vmatprep.subr.mxu0 0.0
    %708 = vmatpush1.xpose.msra.mxu0 0.0
    %709 = vmatprep.subr.mxu0 0.0
    %710 = vmatpush1.xpose.msra.mxu0 0.0
    %711 = vmatprep.subr.mxu0 0.0
    %712 = vmatpush1.xpose.msra.mxu0 0.0
    %713 = vmatprep.mubr.f32.mxu0 0.0
    %714 = vmatmul.mubr.f32.gmra.mrb[0].mxu0 %v643
    %v715 = vpop.f32.mrb[0].mxu0
    %v716 = vadd.f32 0.0, %v715
    %v717 = vpop.f32.mrb[0].mxu0
    %718 = vdwg.mxu0
    %v719 = vsel %vm414, %v371, 0
    %721 = vmatprep.subr.mxu0 0.0
    %722 = vmatpush1.xpose.msra.mxu0 %v417
    %723 = vmatprep.subr.mxu0 0.0
    %724 = vmatpush1.xpose.msra.mxu0 %v419
    %725 = vmatprep.subr.mxu0 0.0
    %726 = vmatpush1.xpose.msra.mxu0 0.0
    %727 = vmatprep.subr.mxu0 0.0
    %728 = vmatpush1.xpose.msra.mxu0 0.0
    %729 = vmatprep.subr.mxu0 0.0
    %730 = vmatpush1.xpose.msra.mxu0 0.0
    %731 = vmatprep.subr.mxu0 0.0
    %732 = vmatpush1.xpose.msra.mxu0 0.0
    %733 = vmatprep.subr.mxu0 0.0
    %734 = vmatpush1.xpose.msra.mxu0 0.0
    %735 = vmatprep.subr.mxu0 0.0
    %736 = vmatpush1.xpose.msra.mxu0 0.0
    %737 = vmatprep.subr.mxu0 0.0
    %738 = vmatpush1.xpose.msra.mxu0 0.0
    %739 = vmatprep.subr.mxu0 0.0
    %740 = vmatpush1.xpose.msra.mxu0 0.0
    %741 = vmatprep.subr.mxu0 0.0
    %742 = vmatpush1.xpose.msra.mxu0 0.0
    %743 = vmatprep.subr.mxu0 0.0
    %744 = vmatpush1.xpose.msra.mxu0 0.0
    %745 = vmatprep.subr.mxu0 0.0
    %746 = vmatpush1.xpose.msra.mxu0 0.0
    %747 = vmatprep.subr.mxu0 0.0
    %748 = vmatpush1.xpose.msra.mxu0 0.0
    %749 = vmatprep.subr.mxu0 0.0
    %750 = vmatpush1.xpose.msra.mxu0 0.0
    %751 = vmatprep.subr.mxu0 0.0
    %752 = vmatpush1.xpose.msra.mxu0 0.0
    %753 = vmatprep.subr.mxu0 0.0
    %754 = vmatpush1.xpose.msra.mxu0 0.0
    %755 = vmatprep.subr.mxu0 0.0
    %756 = vmatpush1.xpose.msra.mxu0 0.0
    %757 = vmatprep.subr.mxu0 0.0
    %758 = vmatpush1.xpose.msra.mxu0 0.0
    %759 = vmatprep.subr.mxu0 0.0
    %760 = vmatpush1.xpose.msra.mxu0 0.0
    %761 = vmatprep.subr.mxu0 0.0
    %762 = vmatpush1.xpose.msra.mxu0 0.0
    %763 = vmatprep.subr.mxu0 0.0
    %764 = vmatpush1.xpose.msra.mxu0 0.0
    %765 = vmatprep.subr.mxu0 0.0
    %766 = vmatpush1.xpose.msra.mxu0 0.0
    %767 = vmatprep.subr.mxu0 0.0
    %768 = vmatpush1.xpose.msra.mxu0 0.0
    %769 = vmatprep.subr.mxu0 0.0
    %770 = vmatpush1.xpose.msra.mxu0 0.0
    %771 = vmatprep.subr.mxu0 0.0
    %772 = vmatpush1.xpose.msra.mxu0 0.0
    %773 = vmatprep.subr.mxu0 0.0
    %774 = vmatpush1.xpose.msra.mxu0 0.0
    %775 = vmatprep.subr.mxu0 0.0
    %776 = vmatpush1.xpose.msra.mxu0 0.0
    %777 = vmatprep.subr.mxu0 0.0
    %778 = vmatpush1.xpose.msra.mxu0 0.0
    %779 = vmatprep.subr.mxu0 0.0
    %780 = vmatpush1.xpose.msra.mxu0 0.0
    %781 = vmatprep.subr.mxu0 0.0
    %782 = vmatpush1.xpose.msra.mxu0 0.0
    %783 = vmatprep.subr.mxu0 0.0
    %784 = vmatpush1.xpose.msra.mxu0 0.0
    %785 = vmatprep.mubr.f32.mxu0 0.0
    %786 = vmatmul.mubr.f32.gmra.mrb[0].mxu0 %v719
    %v787 = vpop.f32.mrb[0].mxu0
    %v788 = vadd.f32 0.0, %v787
    %v789 = vpop.f32.mrb[0].mxu0
    %790 = vdwg.mxu0
    %v791 = vsel %vm414, %v381, 0
    %793 = vmatprep.subr.mxu0 0.0
    %794 = vmatpush1.xpose.msra.mxu0 %v493
    %795 = vmatprep.subr.mxu0 0.0
    %796 = vmatpush1.xpose.msra.mxu0 %v495
    %797 = vmatprep.subr.mxu0 0.0
    %798 = vmatpush1.xpose.msra.mxu0 0.0
    %799 = vmatprep.subr.mxu0 0.0
    %800 = vmatpush1.xpose.msra.mxu0 0.0
    %801 = vmatprep.subr.mxu0 0.0
    %802 = vmatpush1.xpose.msra.mxu0 0.0
    %803 = vmatprep.subr.mxu0 0.0
    %804 = vmatpush1.xpose.msra.mxu0 0.0
    %805 = vmatprep.subr.mxu0 0.0
    %806 = vmatpush1.xpose.msra.mxu0 0.0
    %807 = vmatprep.subr.mxu0 0.0
    %808 = vmatpush1.xpose.msra.mxu0 0.0
    %809 = vmatprep.subr.mxu0 0.0
    %810 = vmatpush1.xpose.msra.mxu0 0.0
    %811 = vmatprep.subr.mxu0 0.0
    %812 = vmatpush1.xpose.msra.mxu0 0.0
    %813 = vmatprep.subr.mxu0 0.0
    %814 = vmatpush1.xpose.msra.mxu0 0.0
    %815 = vmatprep.subr.mxu0 0.0
    %816 = vmatpush1.xpose.msra.mxu0 0.0
    %817 = vmatprep.subr.mxu0 0.0
    %818 = vmatpush1.xpose.msra.mxu0 0.0
    %819 = vmatprep.subr.mxu0 0.0
    %820 = vmatpush1.xpose.msra.mxu0 0.0
    %821 = vmatprep.subr.mxu0 0.0
    %822 = vmatpush1.xpose.msra.mxu0 0.0
    %823 = vmatprep.subr.mxu0 0.0
    %824 = vmatpush1.xpose.msra.mxu0 0.0
    %825 = vmatprep.subr.mxu0 0.0
    %826 = vmatpush1.xpose.msra.mxu0 0.0
    %827 = vmatprep.subr.mxu0 0.0
    %828 = vmatpush1.xpose.msra.mxu0 0.0
    %829 = vmatprep.subr.mxu0 0.0
    %830 = vmatpush1.xpose.msra.mxu0 0.0
    %831 = vmatprep.subr.mxu0 0.0
    %832 = vmatpush1.xpose.msra.mxu0 0.0
    %833 = vmatprep.subr.mxu0 0.0
    %834 = vmatpush1.xpose.msra.mxu0 0.0
    %835 = vmatprep.subr.mxu0 0.0
    %836 = vmatpush1.xpose.msra.mxu0 0.0
    %837 = vmatprep.subr.mxu0 0.0
    %838 = vmatpush1.xpose.msra.mxu0 0.0
    %839 = vmatprep.subr.mxu0 0.0
    %840 = vmatpush1.xpose.msra.mxu0 0.0
    %841 = vmatprep.subr.mxu0 0.0
    %842 = vmatpush1.xpose.msra.mxu0 0.0
    %843 = vmatprep.subr.mxu0 0.0
    %844 = vmatpush1.xpose.msra.mxu0 0.0
    %845 = vmatprep.subr.mxu0 0.0
    %846 = vmatpush1.xpose.msra.mxu0 0.0
    %847 = vmatprep.subr.mxu0 0.0
    %848 = vmatpush1.xpose.msra.mxu0 0.0
    %849 = vmatprep.subr.mxu0 0.0
    %850 = vmatpush1.xpose.msra.mxu0 0.0
    %851 = vmatprep.subr.mxu0 0.0
    %852 = vmatpush1.xpose.msra.mxu0 0.0
    %853 = vmatprep.subr.mxu0 0.0
    %854 = vmatpush1.xpose.msra.mxu0 0.0
    %855 = vmatprep.subr.mxu0 0.0
    %856 = vmatpush1.xpose.msra.mxu0 0.0
    %857 = vmatprep.mubr.f32.mxu0 0.0
    %858 = vmatmul.mubr.f32.gmra.mrb[0].mxu0 %v791
    %v859 = vpop.f32.mrb[0].mxu0
    %v860 = vadd.f32 0.0, %v859
    %v861 = vpop.f32.mrb[0].mxu0
    %862 = vdwg.mxu0
    %v863 = vsel %vm414, %v383, 0
    %865 = vmatprep.subr.mxu0 0.0
    %866 = vmatpush1.xpose.msra.mxu0 %v569
    %867 = vmatprep.subr.mxu0 0.0
    %868 = vmatpush1.xpose.msra.mxu0 %v571
    %869 = vmatprep.subr.mxu0 0.0
    %870 = vmatpush1.xpose.msra.mxu0 0.0
    %871 = vmatprep.subr.mxu0 0.0
    %872 = vmatpush1.xpose.msra.mxu0 0.0
    %873 = vmatprep.subr.mxu0 0.0
    %874 = vmatpush1.xpose.msra.mxu0 0.0
    %875 = vmatprep.subr.mxu0 0.0
    %876 = vmatpush1.xpose.msra.mxu0 0.0
    %877 = vmatprep.subr.mxu0 0.0
    %878 = vmatpush1.xpose.msra.mxu0 0.0
    %879 = vmatprep.subr.mxu0 0.0
    %880 = vmatpush1.xpose.msra.mxu0 0.0
    %881 = vmatprep.subr.mxu0 0.0
    %882 = vmatpush1.xpose.msra.mxu0 0.0
    %883 = vmatprep.subr.mxu0 0.0
    %884 = vmatpush1.xpose.msra.mxu0 0.0
    %885 = vmatprep.subr.mxu0 0.0
    %886 = vmatpush1.xpose.msra.mxu0 0.0
    %887 = vmatprep.subr.mxu0 0.0
    %888 = vmatpush1.xpose.msra.mxu0 0.0
    %889 = vmatprep.subr.mxu0 0.0
    %890 = vmatpush1.xpose.msra.mxu0 0.0
    %891 = vmatprep.subr.mxu0 0.0
    %892 = vmatpush1.xpose.msra.mxu0 0.0
    %893 = vmatprep.subr.mxu0 0.0
    %894 = vmatpush1.xpose.msra.mxu0 0.0
    %895 = vmatprep.subr.mxu0 0.0
    %896 = vmatpush1.xpose.msra.mxu0 0.0
    %897 = vmatprep.subr.mxu0 0.0
    %898 = vmatpush1.xpose.msra.mxu0 0.0
    %899 = vmatprep.subr.mxu0 0.0
    %900 = vmatpush1.xpose.msra.mxu0 0.0
    %901 = vmatprep.subr.mxu0 0.0
    %902 = vmatpush1.xpose.msra.mxu0 0.0
    %903 = vmatprep.subr.mxu0 0.0
    %904 = vmatpush1.xpose.msra.mxu0 0.0
    %905 = vmatprep.subr.mxu0 0.0
    %906 = vmatpush1.xpose.msra.mxu0 0.0
    %907 = vmatprep.subr.mxu0 0.0
    %908 = vmatpush1.xpose.msra.mxu0 0.0
    %909 = vmatprep.subr.mxu0 0.0
    %910 = vmatpush1.xpose.msra.mxu0 0.0
    %911 = vmatprep.subr.mxu0 0.0
    %912 = vmatpush1.xpose.msra.mxu0 0.0
    %913 = vmatprep.subr.mxu0 0.0
    %914 = vmatpush1.xpose.msra.mxu0 0.0
    %915 = vmatprep.subr.mxu0 0.0
    %916 = vmatpush1.xpose.msra.mxu0 0.0
    %917 = vmatprep.subr.mxu0 0.0
    %918 = vmatpush1.xpose.msra.mxu0 0.0
    %919 = vmatprep.subr.mxu0 0.0
    %920 = vmatpush1.xpose.msra.mxu0 0.0
    %921 = vmatprep.subr.mxu0 0.0
    %922 = vmatpush1.xpose.msra.mxu0 0.0
    %923 = vmatprep.subr.mxu0 0.0
    %924 = vmatpush1.xpose.msra.mxu0 0.0
    %925 = vmatprep.subr.mxu0 0.0
    %926 = vmatpush1.xpose.msra.mxu0 0.0
    %927 = vmatprep.subr.mxu0 0.0
    %928 = vmatpush1.xpose.msra.mxu0 0.0
    %929 = vmatprep.mubr.f32.mxu0 0.0
    %930 = vmatmul.mubr.f32.gmra.mrb[0].mxu0 %v863
    %v931 = vpop.f32.mrb[0].mxu0
    %v932 = vadd.f32 0.0, %v931
    %v933 = vpop.f32.mrb[0].mxu0
    %934 = vdwg.mxu0
    %v935 = vsel %vm414, %v385, 0
    %937 = vmatprep.subr.mxu0 0.0
    %938 = vmatpush1.xpose.msra.mxu0 %v645
    %939 = vmatprep.subr.mxu0 0.0
    %940 = vmatpush1.xpose.msra.mxu0 %v647
    %941 = vmatprep.subr.mxu0 0.0
    %942 = vmatpush1.xpose.msra.mxu0 0.0
    %943 = vmatprep.subr.mxu0 0.0
    %944 = vmatpush1.xpose.msra.mxu0 0.0
    %945 = vmatprep.subr.mxu0 0.0
    %946 = vmatpush1.xpose.msra.mxu0 0.0
    %947 = vmatprep.subr.mxu0 0.0
    %948 = vmatpush1.xpose.msra.mxu0 0.0
    %949 = vmatprep.subr.mxu0 0.0
    %950 = vmatpush1.xpose.msra.mxu0 0.0
    %951 = vmatprep.subr.mxu0 0.0
    %952 = vmatpush1.xpose.msra.mxu0 0.0
    %953 = vmatprep.subr.mxu0 0.0
    %954 = vmatpush1.xpose.msra.mxu0 0.0
    %955 = vmatprep.subr.mxu0 0.0
    %956 = vmatpush1.xpose.msra.mxu0 0.0
    %957 = vmatprep.subr.mxu0 0.0
    %958 = vmatpush1.xpose.msra.mxu0 0.0
    %959 = vmatprep.subr.mxu0 0.0
    %960 = vmatpush1.xpose.msra.mxu0 0.0
    %961 = vmatprep.subr.mxu0 0.0
    %962 = vmatpush1.xpose.msra.mxu0 0.0
    %963 = vmatprep.subr.mxu0 0.0
    %964 = vmatpush1.xpose.msra.mxu0 0.0
    %965 = vmatprep.subr.mxu0 0.0
    %966 = vmatpush1.xpose.msra.mxu0 0.0
    %967 = vmatprep.subr.mxu0 0.0
    %968 = vmatpush1.xpose.msra.mxu0 0.0
    %969 = vmatprep.subr.mxu0 0.0
    %970 = vmatpush1.xpose.msra.mxu0 0.0
    %971 = vmatprep.subr.mxu0 0.0
    %972 = vmatpush1.xpose.msra.mxu0 0.0
    %973 = vmatprep.subr.mxu0 0.0
    %974 = vmatpush1.xpose.msra.mxu0 0.0
    %975 = vmatprep.subr.mxu0 0.0
    %976 = vmatpush1.xpose.msra.mxu0 0.0
    %977 = vmatprep.subr.mxu0 0.0
    %978 = vmatpush1.xpose.msra.mxu0 0.0
    %979 = vmatprep.subr.mxu0 0.0
    %980 = vmatpush1.xpose.msra.mxu0 0.0
    %981 = vmatprep.subr.mxu0 0.0
    %982 = vmatpush1.xpose.msra.mxu0 0.0
    %983 = vmatprep.subr.mxu0 0.0
    %984 = vmatpush1.xpose.msra.mxu0 0.0
    %985 = vmatprep.subr.mxu0 0.0
    %986 = vmatpush1.xpose.msra.mxu0 0.0
    %987 = vmatprep.subr.mxu0 0.0
    %988 = vmatpush1.xpose.msra.mxu0 0.0
    %989 = vmatprep.subr.mxu0 0.0
    %990 = vmatpush1.xpose.msra.mxu0 0.0
    %991 = vmatprep.subr.mxu0 0.0
    %992 = vmatpush1.xpose.msra.mxu0 0.0
    %993 = vmatprep.subr.mxu0 0.0
    %994 = vmatpush1.xpose.msra.mxu0 0.0
    %995 = vmatprep.subr.mxu0 0.0
    %996 = vmatpush1.xpose.msra.mxu0 0.0
    %997 = vmatprep.subr.mxu0 0.0
    %998 = vmatpush1.xpose.msra.mxu0 0.0
    %999 = vmatprep.subr.mxu0 0.0
    %1000 = vmatpush1.xpose.msra.mxu0 0.0
    %1001 = vmatprep.mubr.f32.mxu0 0.0
    %1002 = vmatmul.mubr.f32.gmra.mrb[0].mxu0 %v935
    %v1003 = vpop.f32.mrb[0].mxu0
    %v1004 = vadd.f32 0.0, %v1003
    %v1005 = vpop.f32.mrb[0].mxu0
    %1006 = vdwg.mxu0
    %1015 = vrot.lane.b32.xlu0 %v488, 1
    %v1016 = vpop.permute.xlu0 %1015
    %1017 = vrot.lane.b32.xlu0 %v564, 1
    %v1018 = vpop.permute.xlu0 %1017
    %1019 = vrot.lane.b32.xlu0 %v640, 1
    %v1020 = vpop.permute.xlu0 %1019
    %1021 = vrot.lane.b32.xlu0 %v716, 1
    %v1022 = vpop.permute.xlu0 %1021
    %1023 = vrot.lane.b32.xlu0 %v788, 1
    %v1024 = vpop.permute.xlu0 %1023
    %1025 = vrot.lane.b32.xlu0 %v860, 1
    %v1026 = vpop.permute.xlu0 %1025
    %1027 = vrot.lane.b32.xlu0 %v932, 1
    %v1028 = vpop.permute.xlu0 %1027
    %1029 = vrot.lane.b32.xlu0 %v1004, 1
    %v1030 = vpop.permute.xlu0 %1029
    %1039 = vrot.lane.b32.xlu0 %v488, 2
    %v1040 = vpop.permute.xlu0 %1039
    %1041 = vrot.lane.b32.xlu0 %v564, 2
    %v1042 = vpop.permute.xlu0 %1041
    %1043 = vrot.lane.b32.xlu0 %v640, 2
    %v1044 = vpop.permute.xlu0 %1043
    %1045 = vrot.lane.b32.xlu0 %v716, 2
    %v1046 = vpop.permute.xlu0 %1045
    %1047 = vrot.lane.b32.xlu0 %v788, 2
    %v1048 = vpop.permute.xlu0 %1047
    %1049 = vrot.lane.b32.xlu0 %v860, 2
    %v1050 = vpop.permute.xlu0 %1049
    %1051 = vrot.lane.b32.xlu0 %v932, 2
    %v1052 = vpop.permute.xlu0 %1051
    %1053 = vrot.lane.b32.xlu0 %v1004, 2
    %v1054 = vpop.permute.xlu0 %1053
    %1063 = vrot.lane.b32.xlu0 %v488, 3
    %v1064 = vpop.permute.xlu0 %1063
    %1065 = vrot.lane.b32.xlu0 %v564, 3
    %v1066 = vpop.permute.xlu0 %1065
    %1067 = vrot.lane.b32.xlu0 %v640, 3
    %v1068 = vpop.permute.xlu0 %1067
    %1069 = vrot.lane.b32.xlu0 %v716, 3
    %v1070 = vpop.permute.xlu0 %1069
    %1071 = vrot.lane.b32.xlu0 %v788, 3
    %v1072 = vpop.permute.xlu0 %1071
    %1073 = vrot.lane.b32.xlu0 %v860, 3
    %v1074 = vpop.permute.xlu0 %1073
    %1075 = vrot.lane.b32.xlu0 %v932, 3
    %v1076 = vpop.permute.xlu0 %1075
    %1077 = vrot.lane.b32.xlu0 %v1004, 3
    %v1078 = vpop.permute.xlu0 %1077
    %1087 = vrot.lane.b32.xlu0 %v488, 4
    %v1088 = vpop.permute.xlu0 %1087
    %1089 = vrot.lane.b32.xlu0 %v564, 4
    %v1090 = vpop.permute.xlu0 %1089
    %1091 = vrot.lane.b32.xlu0 %v640, 4
    %v1092 = vpop.permute.xlu0 %1091
    %1093 = vrot.lane.b32.xlu0 %v716, 4
    %v1094 = vpop.permute.xlu0 %1093
    %1095 = vrot.lane.b32.xlu0 %v788, 4
    %v1096 = vpop.permute.xlu0 %1095
    %1097 = vrot.lane.b32.xlu0 %v860, 4
    %v1098 = vpop.permute.xlu0 %1097
    %1099 = vrot.lane.b32.xlu0 %v932, 4
    %v1100 = vpop.permute.xlu0 %1099
    %1101 = vrot.lane.b32.xlu0 %v1004, 4
    %v1102 = vpop.permute.xlu0 %1101
    %1111 = vrot.lane.b32.xlu0 %v488, 5
    %v1112 = vpop.permute.xlu0 %1111
    %1113 = vrot.lane.b32.xlu0 %v564, 5
    %v1114 = vpop.permute.xlu0 %1113
    %1115 = vrot.lane.b32.xlu0 %v640, 5
    %v1116 = vpop.permute.xlu0 %1115
    %1117 = vrot.lane.b32.xlu0 %v716, 5
    %v1118 = vpop.permute.xlu0 %1117
    %1119 = vrot.lane.b32.xlu0 %v788, 5
    %v1120 = vpop.permute.xlu0 %1119
    %1121 = vrot.lane.b32.xlu0 %v860, 5
    %v1122 = vpop.permute.xlu0 %1121
    %1123 = vrot.lane.b32.xlu0 %v932, 5
    %v1124 = vpop.permute.xlu0 %1123
    %1125 = vrot.lane.b32.xlu0 %v1004, 5
    %v1126 = vpop.permute.xlu0 %1125
    %1135 = vrot.lane.b32.xlu0 %v488, 6
    %v1136 = vpop.permute.xlu0 %1135
    %1137 = vrot.lane.b32.xlu0 %v564, 6
    %v1138 = vpop.permute.xlu0 %1137
    %1139 = vrot.lane.b32.xlu0 %v640, 6
    %v1140 = vpop.permute.xlu0 %1139
    %1141 = vrot.lane.b32.xlu0 %v716, 6
    %v1142 = vpop.permute.xlu0 %1141
    %1143 = vrot.lane.b32.xlu0 %v788, 6
    %v1144 = vpop.permute.xlu0 %1143
    %1145 = vrot.lane.b32.xlu0 %v860, 6
    %v1146 = vpop.permute.xlu0 %1145
    %1147 = vrot.lane.b32.xlu0 %v932, 6
    %v1148 = vpop.permute.xlu0 %1147
    %1149 = vrot.lane.b32.xlu0 %v1004, 6
    %v1150 = vpop.permute.xlu0 %1149
    %1159 = vrot.lane.b32.xlu0 %v488, 7
    %v1160 = vpop.permute.xlu0 %1159
    %1161 = vrot.lane.b32.xlu0 %v564, 7
    %v1162 = vpop.permute.xlu0 %1161
    %1163 = vrot.lane.b32.xlu0 %v640, 7
    %v1164 = vpop.permute.xlu0 %1163
    %1165 = vrot.lane.b32.xlu0 %v716, 7
    %v1166 = vpop.permute.xlu0 %1165
    %1167 = vrot.lane.b32.xlu0 %v788, 7
    %v1168 = vpop.permute.xlu0 %1167
    %1169 = vrot.lane.b32.xlu0 %v860, 7
    %v1170 = vpop.permute.xlu0 %1169
    %1171 = vrot.lane.b32.xlu0 %v932, 7
    %v1172 = vpop.permute.xlu0 %1171
    %1173 = vrot.lane.b32.xlu0 %v1004, 7
    %v1174 = vpop.permute.xlu0 %1173
    %vm1183 = vcmask 1040384
    %v1184 = vsel %vm1183, %v488, %v1016
    %v1185 = vsel %vm1183, %v564, %v1018
    %v1186 = vsel %vm1183, %v640, %v1020
    %v1187 = vsel %vm1183, %v716, %v1022
    %v1188 = vsel %vm1183, %v788, %v1024
    %v1189 = vsel %vm1183, %v860, %v1026
    %v1190 = vsel %vm1183, %v932, %v1028
    %v1191 = vsel %vm1183, %v1004, %v1030
    %vm1192 = vcmask 1041408
    %v1193 = vsel %vm1192, %v1184, %v1040
    %v1194 = vsel %vm1192, %v1185, %v1042
    %v1195 = vsel %vm1192, %v1186, %v1044
    %v1196 = vsel %vm1192, %v1187, %v1046
    %v1197 = vsel %vm1192, %v1188, %v1048
    %v1198 = vsel %vm1192, %v1189, %v1050
    %v1199 = vsel %vm1192, %v1190, %v1052
    %v1200 = vsel %vm1192, %v1191, %v1054
    %vm1201 = vcmask 1042432
    %v1202 = vsel %vm1201, %v1193, %v1064
    %v1203 = vsel %vm1201, %v1194, %v1066
    %v1204 = vsel %vm1201, %v1195, %v1068
    %v1205 = vsel %vm1201, %v1196, %v1070
    %v1206 = vsel %vm1201, %v1197, %v1072
    %v1207 = vsel %vm1201, %v1198, %v1074
    %v1208 = vsel %vm1201, %v1199, %v1076
    %v1209 = vsel %vm1201, %v1200, %v1078
    %vm1210 = vcmask 1043456
    %v1211 = vsel %vm1210, %v1202, %v1088
    %v1212 = vsel %vm1210, %v1203, %v1090
    %v1213 = vsel %vm1210, %v1204, %v1092
    %v1214 = vsel %vm1210, %v1205, %v1094
    %v1215 = vsel %vm1210, %v1206, %v1096
    %v1216 = vsel %vm1210, %v1207, %v1098
    %v1217 = vsel %vm1210, %v1208, %v1100
    %v1218 = vsel %vm1210, %v1209, %v1102
    %vm1219 = vcmask 1044480
    %v1220 = vsel %vm1219, %v1211, %v1112
    %v1221 = vsel %vm1219, %v1212, %v1114
    %v1222 = vsel %vm1219, %v1213, %v1116
    %v1223 = vsel %vm1219, %v1214, %v1118
    %v1224 = vsel %vm1219, %v1215, %v1120
    %v1225 = vsel %vm1219, %v1216, %v1122
    %v1226 = vsel %vm1219, %v1217, %v1124
    %v1227 = vsel %vm1219, %v1218, %v1126
    %vm1228 = vcmask 1045504
    %v1229 = vsel %vm1228, %v1220, %v1136
    %v1230 = vsel %vm1228, %v1221, %v1138
    %v1231 = vsel %vm1228, %v1222, %v1140
    %v1232 = vsel %vm1228, %v1223, %v1142
    %v1233 = vsel %vm1228, %v1224, %v1144
    %v1234 = vsel %vm1228, %v1225, %v1146
    %v1235 = vsel %vm1228, %v1226, %v1148
    %v1236 = vsel %vm1228, %v1227, %v1150
    %vm1237 = vcmask 1046528
    %v1238 = vsel %vm1237, %v1229, %v1160
    %v1239 = vsel %vm1237, %v1230, %v1162
    %v1240 = vsel %vm1237, %v1231, %v1164
    %v1241 = vsel %vm1237, %v1232, %v1166
    %v1242 = vsel %vm1237, %v1233, %v1168
    %v1243 = vsel %vm1237, %v1234, %v1170
    %v1244 = vsel %vm1237, %v1235, %v1172
    %v1245 = vsel %vm1237, %v1236, %v1174
    %1246 = vrot.lane.b32.xlu0 %v257, 96
    %v1247 = vpop.permute.xlu0 %1246
    %1249 = vrot.lane.b32.xlu0 %v1238, 121
    %v1250 = vpop.permute.xlu0 %1249
    %v1252 = vsel %vm414, %v350, 0
    %v1254 = vsel %vm414, %v1247, 0
    %1256 = vmatprep.subr.mxu0 0.0
    %1257 = vmatpush1.xpose.msra.mxu0 %v1254
    %1258 = vmatprep.subr.mxu0 0.0
    %1259 = vmatpush1.xpose.msra.mxu0 0.0
    %1260 = vmatprep.subr.mxu0 0.0
    %1261 = vmatpush1.xpose.msra.mxu0 0.0
    %1262 = vmatprep.subr.mxu0 0.0
    %1263 = vmatpush1.xpose.msra.mxu0 0.0
    %1264 = vmatprep.subr.mxu0 0.0
    %1265 = vmatpush1.xpose.msra.mxu0 0.0
    %1266 = vmatprep.subr.mxu0 0.0
    %1267 = vmatpush1.xpose.msra.mxu0 0.0
    %1268 = vmatprep.subr.mxu0 0.0
    %1269 = vmatpush1.xpose.msra.mxu0 0.0
    %1270 = vmatprep.subr.mxu0 0.0
    %1271 = vmatpush1.xpose.msra.mxu0 0.0
    %1272 = vmatprep.subr.mxu0 0.0
    %1273 = vmatpush1.xpose.msra.mxu0 0.0
    %1274 = vmatprep.subr.mxu0 0.0
    %1275 = vmatpush1.xpose.msra.mxu0 0.0
    %1276 = vmatprep.subr.mxu0 0.0
    %1277 = vmatpush1.xpose.msra.mxu0 0.0
    %1278 = vmatprep.subr.mxu0 0.0
    %1279 = vmatpush1.xpose.msra.mxu0 0.0
    %1280 = vmatprep.subr.mxu0 0.0
    %1281 = vmatpush1.xpose.msra.mxu0 0.0
    %1282 = vmatprep.subr.mxu0 0.0
    %1283 = vmatpush1.xpose.msra.mxu0 0.0
    %1284 = vmatprep.subr.mxu0 0.0
    %1285 = vmatpush1.xpose.msra.mxu0 0.0
    %1286 = vmatprep.subr.mxu0 0.0
    %1287 = vmatpush1.xpose.msra.mxu0 0.0
    %1288 = vmatprep.subr.mxu0 0.0
    %1289 = vmatpush1.xpose.msra.mxu0 0.0
    %1290 = vmatprep.subr.mxu0 0.0
    %1291 = vmatpush1.xpose.msra.mxu0 0.0
    %1292 = vmatprep.subr.mxu0 0.0
    %1293 = vmatpush1.xpose.msra.mxu0 0.0
    %1294 = vmatprep.subr.mxu0 0.0
    %1295 = vmatpush1.xpose.msra.mxu0 0.0
    %1296 = vmatprep.subr.mxu0 0.0
    %1297 = vmatpush1.xpose.msra.mxu0 0.0
    %1298 = vmatprep.subr.mxu0 0.0
    %1299 = vmatpush1.xpose.msra.mxu0 0.0
    %1300 = vmatprep.subr.mxu0 0.0
    %1301 = vmatpush1.xpose.msra.mxu0 0.0
    %1302 = vmatprep.subr.mxu0 0.0
    %1303 = vmatpush1.xpose.msra.mxu0 0.0
    %1304 = vmatprep.subr.mxu0 0.0
    %1305 = vmatpush1.xpose.msra.mxu0 0.0
    %1306 = vmatprep.subr.mxu0 0.0
    %1307 = vmatpush1.xpose.msra.mxu0 0.0
    %1308 = vmatprep.subr.mxu0 0.0
    %1309 = vmatpush1.xpose.msra.mxu0 0.0
    %1310 = vmatprep.subr.mxu0 0.0
    %1311 = vmatpush1.xpose.msra.mxu0 0.0
    %1312 = vmatprep.subr.mxu0 0.0
    %1313 = vmatpush1.xpose.msra.mxu0 0.0
    %1314 = vmatprep.subr.mxu0 0.0
    %1315 = vmatpush1.xpose.msra.mxu0 0.0
    %1316 = vmatprep.subr.mxu0 0.0
    %1317 = vmatpush1.xpose.msra.mxu0 0.0
    %1318 = vmatprep.subr.mxu0 0.0
    %1319 = vmatpush1.xpose.msra.mxu0 0.0
    %1320 = vmatprep.mubr.f32.mxu0 0.0
    %1321 = vmatmul.mubr.f32.gmra.mrb[0].mxu0 %v1252
    %v1322 = vpop.f32.mrb[0].mxu0
    %v1323 = vadd.f32 %v1250, %v1322
    %v1324 = vpop.f32.mrb[0].mxu0
    %1325 = vdwg.mxu0
    %1326 = vrot.lane.b32.xlu0 %v388, 96
    %v1327 = vpop.permute.xlu0 %1326
    %1329 = vrot.lane.b32.xlu0 %v1239, 121
    %v1330 = vpop.permute.xlu0 %1329
    %v1332 = vsel %vm414, %v354, 0
    %v1334 = vsel %vm414, %v1327, 0
    %1336 = vmatprep.subr.mxu0 0.0
    %1337 = vmatpush1.xpose.msra.mxu0 %v1334
    %1338 = vmatprep.subr.mxu0 0.0
    %1339 = vmatpush1.xpose.msra.mxu0 0.0
    %1340 = vmatprep.subr.mxu0 0.0
    %1341 = vmatpush1.xpose.msra.mxu0 0.0
    %1342 = vmatprep.subr.mxu0 0.0
    %1343 = vmatpush1.xpose.msra.mxu0 0.0
    %1344 = vmatprep.subr.mxu0 0.0
    %1345 = vmatpush1.xpose.msra.mxu0 0.0
    %1346 = vmatprep.subr.mxu0 0.0
    %1347 = vmatpush1.xpose.msra.mxu0 0.0
    %1348 = vmatprep.subr.mxu0 0.0
    %1349 = vmatpush1.xpose.msra.mxu0 0.0
    %1350 = vmatprep.subr.mxu0 0.0
    %1351 = vmatpush1.xpose.msra.mxu0 0.0
    %1352 = vmatprep.subr.mxu0 0.0
    %1353 = vmatpush1.xpose.msra.mxu0 0.0
    %1354 = vmatprep.subr.mxu0 0.0
    %1355 = vmatpush1.xpose.msra.mxu0 0.0
    %1356 = vmatprep.subr.mxu0 0.0
    %1357 = vmatpush1.xpose.msra.mxu0 0.0
    %1358 = vmatprep.subr.mxu0 0.0
    %1359 = vmatpush1.xpose.msra.mxu0 0.0
    %1360 = vmatprep.subr.mxu0 0.0
    %1361 = vmatpush1.xpose.msra.mxu0 0.0
    %1362 = vmatprep.subr.mxu0 0.0
    %1363 = vmatpush1.xpose.msra.mxu0 0.0
    %1364 = vmatprep.subr.mxu0 0.0
    %1365 = vmatpush1.xpose.msra.mxu0 0.0
    %1366 = vmatprep.subr.mxu0 0.0
    %1367 = vmatpush1.xpose.msra.mxu0 0.0
    %1368 = vmatprep.subr.mxu0 0.0
    %1369 = vmatpush1.xpose.msra.mxu0 0.0
    %1370 = vmatprep.subr.mxu0 0.0
    %1371 = vmatpush1.xpose.msra.mxu0 0.0
    %1372 = vmatprep.subr.mxu0 0.0
    %1373 = vmatpush1.xpose.msra.mxu0 0.0
    %1374 = vmatprep.subr.mxu0 0.0
    %1375 = vmatpush1.xpose.msra.mxu0 0.0
    %1376 = vmatprep.subr.mxu0 0.0
    %1377 = vmatpush1.xpose.msra.mxu0 0.0
    %1378 = vmatprep.subr.mxu0 0.0
    %1379 = vmatpush1.xpose.msra.mxu0 0.0
    %1380 = vmatprep.subr.mxu0 0.0
    %1381 = vmatpush1.xpose.msra.mxu0 0.0
    %1382 = vmatprep.subr.mxu0 0.0
    %1383 = vmatpush1.xpose.msra.mxu0 0.0
    %1384 = vmatprep.subr.mxu0 0.0
    %1385 = vmatpush1.xpose.msra.mxu0 0.0
    %1386 = vmatprep.subr.mxu0 0.0
    %1387 = vmatpush1.xpose.msra.mxu0 0.0
    %1388 = vmatprep.subr.mxu0 0.0
    %1389 = vmatpush1.xpose.msra.mxu0 0.0
    %1390 = vmatprep.subr.mxu0 0.0
    %1391 = vmatpush1.xpose.msra.mxu0 0.0
    %1392 = vmatprep.subr.mxu0 0.0
    %1393 = vmatpush1.xpose.msra.mxu0 0.0
    %1394 = vmatprep.subr.mxu0 0.0
    %1395 = vmatpush1.xpose.msra.mxu0 0.0
    %1396 = vmatprep.subr.mxu0 0.0
    %1397 = vmatpush1.xpose.msra.mxu0 0.0
    %1398 = vmatprep.subr.mxu0 0.0
    %1399 = vmatpush1.xpose.msra.mxu0 0.0
    %1400 = vmatprep.mubr.f32.mxu0 0.0
    %1401 = vmatmul.mubr.f32.gmra.mrb[0].mxu0 %v1332
    %v1402 = vpop.f32.mrb[0].mxu0
    %v1403 = vadd.f32 %v1330, %v1402
    %v1404 = vpop.f32.mrb[0].mxu0
    %1405 = vdwg.mxu0
    %1406 = vrot.lane.b32.xlu0 %v390, 96
    %v1407 = vpop.permute.xlu0 %1406
    %1409 = vrot.lane.b32.xlu0 %v1240, 121
    %v1410 = vpop.permute.xlu0 %1409
    %v1412 = vsel %vm414, %v356, 0
    %v1414 = vsel %vm414, %v1407, 0
    %1416 = vmatprep.subr.mxu0 0.0
    %1417 = vmatpush1.xpose.msra.mxu0 %v1414
    %1418 = vmatprep.subr.mxu0 0.0
    %1419 = vmatpush1.xpose.msra.mxu0 0.0
    %1420 = vmatprep.subr.mxu0 0.0
    %1421 = vmatpush1.xpose.msra.mxu0 0.0
    %1422 = vmatprep.subr.mxu0 0.0
    %1423 = vmatpush1.xpose.msra.mxu0 0.0
    %1424 = vmatprep.subr.mxu0 0.0
    %1425 = vmatpush1.xpose.msra.mxu0 0.0
    %1426 = vmatprep.subr.mxu0 0.0
    %1427 = vmatpush1.xpose.msra.mxu0 0.0
    %1428 = vmatprep.subr.mxu0 0.0
    %1429 = vmatpush1.xpose.msra.mxu0 0.0
    %1430 = vmatprep.subr.mxu0 0.0
    %1431 = vmatpush1.xpose.msra.mxu0 0.0
    %1432 = vmatprep.subr.mxu0 0.0
    %1433 = vmatpush1.xpose.msra.mxu0 0.0
    %1434 = vmatprep.subr.mxu0 0.0
    %1435 = vmatpush1.xpose.msra.mxu0 0.0
    %1436 = vmatprep.subr.mxu0 0.0
    %1437 = vmatpush1.xpose.msra.mxu0 0.0
    %1438 = vmatprep.subr.mxu0 0.0
    %1439 = vmatpush1.xpose.msra.mxu0 0.0
    %1440 = vmatprep.subr.mxu0 0.0
    %1441 = vmatpush1.xpose.msra.mxu0 0.0
    %1442 = vmatprep.subr.mxu0 0.0
    %1443 = vmatpush1.xpose.msra.mxu0 0.0
    %1444 = vmatprep.subr.mxu0 0.0
    %1445 = vmatpush1.xpose.msra.mxu0 0.0
    %1446 = vmatprep.subr.mxu0 0.0
    %1447 = vmatpush1.xpose.msra.mxu0 0.0
    %1448 = vmatprep.subr.mxu0 0.0
    %1449 = vmatpush1.xpose.msra.mxu0 0.0
    %1450 = vmatprep.subr.mxu0 0.0
    %1451 = vmatpush1.xpose.msra.mxu0 0.0
    %1452 = vmatprep.subr.mxu0 0.0
    %1453 = vmatpush1.xpose.msra.mxu0 0.0
    %1454 = vmatprep.subr.mxu0 0.0
    %1455 = vmatpush1.xpose.msra.mxu0 0.0
    %1456 = vmatprep.subr.mxu0 0.0
    %1457 = vmatpush1.xpose.msra.mxu0 0.0
    %1458 = vmatprep.subr.mxu0 0.0
    %1459 = vmatpush1.xpose.msra.mxu0 0.0
    %1460 = vmatprep.subr.mxu0 0.0
    %1461 = vmatpush1.xpose.msra.mxu0 0.0
    %1462 = vmatprep.subr.mxu0 0.0
    %1463 = vmatpush1.xpose.msra.mxu0 0.0
    %1464 = vmatprep.subr.mxu0 0.0
    %1465 = vmatpush1.xpose.msra.mxu0 0.0
    %1466 = vmatprep.subr.mxu0 0.0
    %1467 = vmatpush1.xpose.msra.mxu0 0.0
    %1468 = vmatprep.subr.mxu0 0.0
    %1469 = vmatpush1.xpose.msra.mxu0 0.0
    %1470 = vmatprep.subr.mxu0 0.0
    %1471 = vmatpush1.xpose.msra.mxu0 0.0
    %1472 = vmatprep.subr.mxu0 0.0
    %1473 = vmatpush1.xpose.msra.mxu0 0.0
    %1474 = vmatprep.subr.mxu0 0.0
    %1475 = vmatpush1.xpose.msra.mxu0 0.0
    %1476 = vmatprep.subr.mxu0 0.0
    %1477 = vmatpush1.xpose.msra.mxu0 0.0
    %1478 = vmatprep.subr.mxu0 0.0
    %1479 = vmatpush1.xpose.msra.mxu0 0.0
    %1480 = vmatprep.mubr.f32.mxu0 0.0
    %1481 = vmatmul.mubr.f32.gmra.mrb[0].mxu0 %v1412
    %v1482 = vpop.f32.mrb[0].mxu0
    %v1483 = vadd.f32 %v1410, %v1482
    %v1484 = vpop.f32.mrb[0].mxu0
    %1485 = vdwg.mxu0
    %1486 = vrot.lane.b32.xlu0 %v392, 96
    %v1487 = vpop.permute.xlu0 %1486
    %1489 = vrot.lane.b32.xlu0 %v1241, 121
    %v1490 = vpop.permute.xlu0 %1489
    %v1492 = vsel %vm414, %v358, 0
    %v1494 = vsel %vm414, %v1487, 0
    %1496 = vmatprep.subr.mxu0 0.0
    %1497 = vmatpush1.xpose.msra.mxu0 %v1494
    %1498 = vmatprep.subr.mxu0 0.0
    %1499 = vmatpush1.xpose.msra.mxu0 0.0
    %1500 = vmatprep.subr.mxu0 0.0
    %1501 = vmatpush1.xpose.msra.mxu0 0.0
    %1502 = vmatprep.subr.mxu0 0.0
    %1503 = vmatpush1.xpose.msra.mxu0 0.0
    %1504 = vmatprep.subr.mxu0 0.0
    %1505 = vmatpush1.xpose.msra.mxu0 0.0
    %1506 = vmatprep.subr.mxu0 0.0
    %1507 = vmatpush1.xpose.msra.mxu0 0.0
    %1508 = vmatprep.subr.mxu0 0.0
    %1509 = vmatpush1.xpose.msra.mxu0 0.0
    %1510 = vmatprep.subr.mxu0 0.0
    %1511 = vmatpush1.xpose.msra.mxu0 0.0
    %1512 = vmatprep.subr.mxu0 0.0
    %1513 = vmatpush1.xpose.msra.mxu0 0.0
    %1514 = vmatprep.subr.mxu0 0.0
    %1515 = vmatpush1.xpose.msra.mxu0 0.0
    %1516 = vmatprep.subr.mxu0 0.0
    %1517 = vmatpush1.xpose.msra.mxu0 0.0
    %1518 = vmatprep.subr.mxu0 0.0
    %1519 = vmatpush1.xpose.msra.mxu0 0.0
    %1520 = vmatprep.subr.mxu0 0.0
    %1521 = vmatpush1.xpose.msra.mxu0 0.0
    %1522 = vmatprep.subr.mxu0 0.0
    %1523 = vmatpush1.xpose.msra.mxu0 0.0
    %1524 = vmatprep.subr.mxu0 0.0
    %1525 = vmatpush1.xpose.msra.mxu0 0.0
    %1526 = vmatprep.subr.mxu0 0.0
    %1527 = vmatpush1.xpose.msra.mxu0 0.0
    %1528 = vmatprep.subr.mxu0 0.0
    %1529 = vmatpush1.xpose.msra.mxu0 0.0
    %1530 = vmatprep.subr.mxu0 0.0
    %1531 = vmatpush1.xpose.msra.mxu0 0.0
    %1532 = vmatprep.subr.mxu0 0.0
    %1533 = vmatpush1.xpose.msra.mxu0 0.0
    %1534 = vmatprep.subr.mxu0 0.0
    %1535 = vmatpush1.xpose.msra.mxu0 0.0
    %1536 = vmatprep.subr.mxu0 0.0
    %1537 = vmatpush1.xpose.msra.mxu0 0.0
    %1538 = vmatprep.subr.mxu0 0.0
    %1539 = vmatpush1.xpose.msra.mxu0 0.0
    %1540 = vmatprep.subr.mxu0 0.0
    %1541 = vmatpush1.xpose.msra.mxu0 0.0
    %1542 = vmatprep.subr.mxu0 0.0
    %1543 = vmatpush1.xpose.msra.mxu0 0.0
    %1544 = vmatprep.subr.mxu0 0.0
    %1545 = vmatpush1.xpose.msra.mxu0 0.0
    %1546 = vmatprep.subr.mxu0 0.0
    %1547 = vmatpush1.xpose.msra.mxu0 0.0
    %1548 = vmatprep.subr.mxu0 0.0
    %1549 = vmatpush1.xpose.msra.mxu0 0.0
    %1550 = vmatprep.subr.mxu0 0.0
    %1551 = vmatpush1.xpose.msra.mxu0 0.0
    %1552 = vmatprep.subr.mxu0 0.0
    %1553 = vmatpush1.xpose.msra.mxu0 0.0
    %1554 = vmatprep.subr.mxu0 0.0
    %1555 = vmatpush1.xpose.msra.mxu0 0.0
    %1556 = vmatprep.subr.mxu0 0.0
    %1557 = vmatpush1.xpose.msra.mxu0 0.0
    %1558 = vmatprep.subr.mxu0 0.0
    %1559 = vmatpush1.xpose.msra.mxu0 0.0
    %1560 = vmatprep.mubr.f32.mxu0 0.0
    %1561 = vmatmul.mubr.f32.gmra.mrb[0].mxu0 %v1492
    %v1562 = vpop.f32.mrb[0].mxu0
    %v1563 = vadd.f32 %v1490, %v1562
    %v1564 = vpop.f32.mrb[0].mxu0
    %1565 = vdwg.mxu0
    %1566 = vrot.lane.b32.xlu0 %v262, 96
    %v1567 = vpop.permute.xlu0 %1566
    %1569 = vrot.lane.b32.xlu0 %v1242, 121
    %v1570 = vpop.permute.xlu0 %1569
    %v1572 = vsel %vm414, %v351, 0
    %v1574 = vsel %vm414, %v1567, 0
    %1576 = vmatprep.subr.mxu0 0.0
    %1577 = vmatpush1.xpose.msra.mxu0 %v1574
    %1578 = vmatprep.subr.mxu0 0.0
    %1579 = vmatpush1.xpose.msra.mxu0 0.0
    %1580 = vmatprep.subr.mxu0 0.0
    %1581 = vmatpush1.xpose.msra.mxu0 0.0
    %1582 = vmatprep.subr.mxu0 0.0
    %1583 = vmatpush1.xpose.msra.mxu0 0.0
    %1584 = vmatprep.subr.mxu0 0.0
    %1585 = vmatpush1.xpose.msra.mxu0 0.0
    %1586 = vmatprep.subr.mxu0 0.0
    %1587 = vmatpush1.xpose.msra.mxu0 0.0
    %1588 = vmatprep.subr.mxu0 0.0
    %1589 = vmatpush1.xpose.msra.mxu0 0.0
    %1590 = vmatprep.subr.mxu0 0.0
    %1591 = vmatpush1.xpose.msra.mxu0 0.0
    %1592 = vmatprep.subr.mxu0 0.0
    %1593 = vmatpush1.xpose.msra.mxu0 0.0
    %1594 = vmatprep.subr.mxu0 0.0
    %1595 = vmatpush1.xpose.msra.mxu0 0.0
    %1596 = vmatprep.subr.mxu0 0.0
    %1597 = vmatpush1.xpose.msra.mxu0 0.0
    %1598 = vmatprep.subr.mxu0 0.0
    %1599 = vmatpush1.xpose.msra.mxu0 0.0
    %1600 = vmatprep.subr.mxu0 0.0
    %1601 = vmatpush1.xpose.msra.mxu0 0.0
    %1602 = vmatprep.subr.mxu0 0.0
    %1603 = vmatpush1.xpose.msra.mxu0 0.0
    %1604 = vmatprep.subr.mxu0 0.0
    %1605 = vmatpush1.xpose.msra.mxu0 0.0
    %1606 = vmatprep.subr.mxu0 0.0
    %1607 = vmatpush1.xpose.msra.mxu0 0.0
    %1608 = vmatprep.subr.mxu0 0.0
    %1609 = vmatpush1.xpose.msra.mxu0 0.0
    %1610 = vmatprep.subr.mxu0 0.0
    %1611 = vmatpush1.xpose.msra.mxu0 0.0
    %1612 = vmatprep.subr.mxu0 0.0
    %1613 = vmatpush1.xpose.msra.mxu0 0.0
    %1614 = vmatprep.subr.mxu0 0.0
    %1615 = vmatpush1.xpose.msra.mxu0 0.0
    %1616 = vmatprep.subr.mxu0 0.0
    %1617 = vmatpush1.xpose.msra.mxu0 0.0
    %1618 = vmatprep.subr.mxu0 0.0
    %1619 = vmatpush1.xpose.msra.mxu0 0.0
    %1620 = vmatprep.subr.mxu0 0.0
    %1621 = vmatpush1.xpose.msra.mxu0 0.0
    %1622 = vmatprep.subr.mxu0 0.0
    %1623 = vmatpush1.xpose.msra.mxu0 0.0
    %1624 = vmatprep.subr.mxu0 0.0
    %1625 = vmatpush1.xpose.msra.mxu0 0.0
    %1626 = vmatprep.subr.mxu0 0.0
    %1627 = vmatpush1.xpose.msra.mxu0 0.0
    %1628 = vmatprep.subr.mxu0 0.0
    %1629 = vmatpush1.xpose.msra.mxu0 0.0
    %1630 = vmatprep.subr.mxu0 0.0
    %1631 = vmatpush1.xpose.msra.mxu0 0.0
    %1632 = vmatprep.subr.mxu0 0.0
    %1633 = vmatpush1.xpose.msra.mxu0 0.0
    %1634 = vmatprep.subr.mxu0 0.0
    %1635 = vmatpush1.xpose.msra.mxu0 0.0
    %1636 = vmatprep.subr.mxu0 0.0
    %1637 = vmatpush1.xpose.msra.mxu0 0.0
    %1638 = vmatprep.subr.mxu0 0.0
    %1639 = vmatpush1.xpose.msra.mxu0 0.0
    %1640 = vmatprep.mubr.f32.mxu0 0.0
    %1641 = vmatmul.mubr.f32.gmra.mrb[0].mxu0 %v1572
    %v1642 = vpop.f32.mrb[0].mxu0
    %v1643 = vadd.f32 %v1570, %v1642
    %v1644 = vpop.f32.mrb[0].mxu0
    %1645 = vdwg.mxu0
    %1646 = vrot.lane.b32.xlu0 %v395, 96
    %v1647 = vpop.permute.xlu0 %1646
    %1649 = vrot.lane.b32.xlu0 %v1243, 121
    %v1650 = vpop.permute.xlu0 %1649
    %v1652 = vsel %vm414, %v361, 0
    %v1654 = vsel %vm414, %v1647, 0
    %1656 = vmatprep.subr.mxu0 0.0
    %1657 = vmatpush1.xpose.msra.mxu0 %v1654
    %1658 = vmatprep.subr.mxu0 0.0
    %1659 = vmatpush1.xpose.msra.mxu0 0.0
    %1660 = vmatprep.subr.mxu0 0.0
    %1661 = vmatpush1.xpose.msra.mxu0 0.0
    %1662 = vmatprep.subr.mxu0 0.0
    %1663 = vmatpush1.xpose.msra.mxu0 0.0
    %1664 = vmatprep.subr.mxu0 0.0
    %1665 = vmatpush1.xpose.msra.mxu0 0.0
    %1666 = vmatprep.subr.mxu0 0.0
    %1667 = vmatpush1.xpose.msra.mxu0 0.0
    %1668 = vmatprep.subr.mxu0 0.0
    %1669 = vmatpush1.xpose.msra.mxu0 0.0
    %1670 = vmatprep.subr.mxu0 0.0
    %1671 = vmatpush1.xpose.msra.mxu0 0.0
    %1672 = vmatprep.subr.mxu0 0.0
    %1673 = vmatpush1.xpose.msra.mxu0 0.0
    %1674 = vmatprep.subr.mxu0 0.0
    %1675 = vmatpush1.xpose.msra.mxu0 0.0
    %1676 = vmatprep.subr.mxu0 0.0
    %1677 = vmatpush1.xpose.msra.mxu0 0.0
    %1678 = vmatprep.subr.mxu0 0.0
    %1679 = vmatpush1.xpose.msra.mxu0 0.0
    %1680 = vmatprep.subr.mxu0 0.0
    %1681 = vmatpush1.xpose.msra.mxu0 0.0
    %1682 = vmatprep.subr.mxu0 0.0
    %1683 = vmatpush1.xpose.msra.mxu0 0.0
    %1684 = vmatprep.subr.mxu0 0.0
    %1685 = vmatpush1.xpose.msra.mxu0 0.0
    %1686 = vmatprep.subr.mxu0 0.0
    %1687 = vmatpush1.xpose.msra.mxu0 0.0
    %1688 = vmatprep.subr.mxu0 0.0
    %1689 = vmatpush1.xpose.msra.mxu0 0.0
    %1690 = vmatprep.subr.mxu0 0.0
    %1691 = vmatpush1.xpose.msra.mxu0 0.0
    %1692 = vmatprep.subr.mxu0 0.0
    %1693 = vmatpush1.xpose.msra.mxu0 0.0
    %1694 = vmatprep.subr.mxu0 0.0
    %1695 = vmatpush1.xpose.msra.mxu0 0.0
    %1696 = vmatprep.subr.mxu0 0.0
    %1697 = vmatpush1.xpose.msra.mxu0 0.0
    %1698 = vmatprep.subr.mxu0 0.0
    %1699 = vmatpush1.xpose.msra.mxu0 0.0
    %1700 = vmatprep.subr.mxu0 0.0
    %1701 = vmatpush1.xpose.msra.mxu0 0.0
    %1702 = vmatprep.subr.mxu0 0.0
    %1703 = vmatpush1.xpose.msra.mxu0 0.0
    %1704 = vmatprep.subr.mxu0 0.0
    %1705 = vmatpush1.xpose.msra.mxu0 0.0
    %1706 = vmatprep.subr.mxu0 0.0
    %1707 = vmatpush1.xpose.msra.mxu0 0.0
    %1708 = vmatprep.subr.mxu0 0.0
    %1709 = vmatpush1.xpose.msra.mxu0 0.0
    %1710 = vmatprep.subr.mxu0 0.0
    %1711 = vmatpush1.xpose.msra.mxu0 0.0
    %1712 = vmatprep.subr.mxu0 0.0
    %1713 = vmatpush1.xpose.msra.mxu0 0.0
    %1714 = vmatprep.subr.mxu0 0.0
    %1715 = vmatpush1.xpose.msra.mxu0 0.0
    %1716 = vmatprep.subr.mxu0 0.0
    %1717 = vmatpush1.xpose.msra.mxu0 0.0
    %1718 = vmatprep.subr.mxu0 0.0
    %1719 = vmatpush1.xpose.msra.mxu0 0.0
    %1720 = vmatprep.mubr.f32.mxu0 0.0
    %1721 = vmatmul.mubr.f32.gmra.mrb[0].mxu0 %v1652
    %v1722 = vpop.f32.mrb[0].mxu0
    %v1723 = vadd.f32 %v1650, %v1722
    %v1724 = vpop.f32.mrb[0].mxu0
    %1725 = vdwg.mxu0
    %1726 = vrot.lane.b32.xlu0 %v397, 96
    %v1727 = vpop.permute.xlu0 %1726
    %1729 = vrot.lane.b32.xlu0 %v1244, 121
    %v1730 = vpop.permute.xlu0 %1729
    %v1732 = vsel %vm414, %v363, 0
    %v1734 = vsel %vm414, %v1727, 0
    %1736 = vmatprep.subr.mxu0 0.0
    %1737 = vmatpush1.xpose.msra.mxu0 %v1734
    %1738 = vmatprep.subr.mxu0 0.0
    %1739 = vmatpush1.xpose.msra.mxu0 0.0
    %1740 = vmatprep.subr.mxu0 0.0
    %1741 = vmatpush1.xpose.msra.mxu0 0.0
    %1742 = vmatprep.subr.mxu0 0.0
    %1743 = vmatpush1.xpose.msra.mxu0 0.0
    %1744 = vmatprep.subr.mxu0 0.0
    %1745 = vmatpush1.xpose.msra.mxu0 0.0
    %1746 = vmatprep.subr.mxu0 0.0
    %1747 = vmatpush1.xpose.msra.mxu0 0.0
    %1748 = vmatprep.subr.mxu0 0.0
    %1749 = vmatpush1.xpose.msra.mxu0 0.0
    %1750 = vmatprep.subr.mxu0 0.0
    %1751 = vmatpush1.xpose.msra.mxu0 0.0
    %1752 = vmatprep.subr.mxu0 0.0
    %1753 = vmatpush1.xpose.msra.mxu0 0.0
    %1754 = vmatprep.subr.mxu0 0.0
    %1755 = vmatpush1.xpose.msra.mxu0 0.0
    %1756 = vmatprep.subr.mxu0 0.0
    %1757 = vmatpush1.xpose.msra.mxu0 0.0
    %1758 = vmatprep.subr.mxu0 0.0
    %1759 = vmatpush1.xpose.msra.mxu0 0.0
    %1760 = vmatprep.subr.mxu0 0.0
    %1761 = vmatpush1.xpose.msra.mxu0 0.0
    %1762 = vmatprep.subr.mxu0 0.0
    %1763 = vmatpush1.xpose.msra.mxu0 0.0
    %1764 = vmatprep.subr.mxu0 0.0
    %1765 = vmatpush1.xpose.msra.mxu0 0.0
    %1766 = vmatprep.subr.mxu0 0.0
    %1767 = vmatpush1.xpose.msra.mxu0 0.0
    %1768 = vmatprep.subr.mxu0 0.0
    %1769 = vmatpush1.xpose.msra.mxu0 0.0
    %1770 = vmatprep.subr.mxu0 0.0
    %1771 = vmatpush1.xpose.msra.mxu0 0.0
    %1772 = vmatprep.subr.mxu0 0.0
    %1773 = vmatpush1.xpose.msra.mxu0 0.0
    %1774 = vmatprep.subr.mxu0 0.0
    %1775 = vmatpush1.xpose.msra.mxu0 0.0
    %1776 = vmatprep.subr.mxu0 0.0
    %1777 = vmatpush1.xpose.msra.mxu0 0.0
    %1778 = vmatprep.subr.mxu0 0.0
    %1779 = vmatpush1.xpose.msra.mxu0 0.0
    %1780 = vmatprep.subr.mxu0 0.0
    %1781 = vmatpush1.xpose.msra.mxu0 0.0
    %1782 = vmatprep.subr.mxu0 0.0
    %1783 = vmatpush1.xpose.msra.mxu0 0.0
    %1784 = vmatprep.subr.mxu0 0.0
    %1785 = vmatpush1.xpose.msra.mxu0 0.0
    %1786 = vmatprep.subr.mxu0 0.0
    %1787 = vmatpush1.xpose.msra.mxu0 0.0
    %1788 = vmatprep.subr.mxu0 0.0
    %1789 = vmatpush1.xpose.msra.mxu0 0.0
    %1790 = vmatprep.subr.mxu0 0.0
    %1791 = vmatpush1.xpose.msra.mxu0 0.0
    %1792 = vmatprep.subr.mxu0 0.0
    %1793 = vmatpush1.xpose.msra.mxu0 0.0
    %1794 = vmatprep.subr.mxu0 0.0
    %1795 = vmatpush1.xpose.msra.mxu0 0.0
    %1796 = vmatprep.subr.mxu0 0.0
    %1797 = vmatpush1.xpose.msra.mxu0 0.0
    %1798 = vmatprep.subr.mxu0 0.0
    %1799 = vmatpush1.xpose.msra.mxu0 0.0
    %1800 = vmatprep.mubr.f32.mxu0 0.0
    %1801 = vmatmul.mubr.f32.gmra.mrb[0].mxu0 %v1732
    %v1802 = vpop.f32.mrb[0].mxu0
    %v1803 = vadd.f32 %v1730, %v1802
    %v1804 = vpop.f32.mrb[0].mxu0
    %1805 = vdwg.mxu0
    %1806 = vrot.lane.b32.xlu0 %v399, 96
    %v1807 = vpop.permute.xlu0 %1806
    %1809 = vrot.lane.b32.xlu0 %v1245, 121
    %v1810 = vpop.permute.xlu0 %1809
    %v1812 = vsel %vm414, %v365, 0
    %v1814 = vsel %vm414, %v1807, 0
    %1816 = vmatprep.subr.mxu0 0.0
    %1817 = vmatpush1.xpose.msra.mxu0 %v1814
    %1818 = vmatprep.subr.mxu0 0.0
    %1819 = vmatpush1.xpose.msra.mxu0 0.0
    %1820 = vmatprep.subr.mxu0 0.0
    %1821 = vmatpush1.xpose.msra.mxu0 0.0
    %1822 = vmatprep.subr.mxu0 0.0
    %1823 = vmatpush1.xpose.msra.mxu0 0.0
    %1824 = vmatprep.subr.mxu0 0.0
    %1825 = vmatpush1.xpose.msra.mxu0 0.0
    %1826 = vmatprep.subr.mxu0 0.0
    %1827 = vmatpush1.xpose.msra.mxu0 0.0
    %1828 = vmatprep.subr.mxu0 0.0
    %1829 = vmatpush1.xpose.msra.mxu0 0.0
    %1830 = vmatprep.subr.mxu0 0.0
    %1831 = vmatpush1.xpose.msra.mxu0 0.0
    %1832 = vmatprep.subr.mxu0 0.0
    %1833 = vmatpush1.xpose.msra.mxu0 0.0
    %1834 = vmatprep.subr.mxu0 0.0
    %1835 = vmatpush1.xpose.msra.mxu0 0.0
    %1836 = vmatprep.subr.mxu0 0.0
    %1837 = vmatpush1.xpose.msra.mxu0 0.0
    %1838 = vmatprep.subr.mxu0 0.0
    %1839 = vmatpush1.xpose.msra.mxu0 0.0
    %1840 = vmatprep.subr.mxu0 0.0
    %1841 = vmatpush1.xpose.msra.mxu0 0.0
    %1842 = vmatprep.subr.mxu0 0.0
    %1843 = vmatpush1.xpose.msra.mxu0 0.0
    %1844 = vmatprep.subr.mxu0 0.0
    %1845 = vmatpush1.xpose.msra.mxu0 0.0
    %1846 = vmatprep.subr.mxu0 0.0
    %1847 = vmatpush1.xpose.msra.mxu0 0.0
    %1848 = vmatprep.subr.mxu0 0.0
    %1849 = vmatpush1.xpose.msra.mxu0 0.0
    %1850 = vmatprep.subr.mxu0 0.0
    %1851 = vmatpush1.xpose.msra.mxu0 0.0
    %1852 = vmatprep.subr.mxu0 0.0
    %1853 = vmatpush1.xpose.msra.mxu0 0.0
    %1854 = vmatprep.subr.mxu0 0.0
    %1855 = vmatpush1.xpose.msra.mxu0 0.0
    %1856 = vmatprep.subr.mxu0 0.0
    %1857 = vmatpush1.xpose.msra.mxu0 0.0
    %1858 = vmatprep.subr.mxu0 0.0
    %1859 = vmatpush1.xpose.msra.mxu0 0.0
    %1860 = vmatprep.subr.mxu0 0.0
    %1861 = vmatpush1.xpose.msra.mxu0 0.0
    %1862 = vmatprep.subr.mxu0 0.0
    %1863 = vmatpush1.xpose.msra.mxu0 0.0
    %1864 = vmatprep.subr.mxu0 0.0
    %1865 = vmatpush1.xpose.msra.mxu0 0.0
    %1866 = vmatprep.subr.mxu0 0.0
    %1867 = vmatpush1.xpose.msra.mxu0 0.0
    %1868 = vmatprep.subr.mxu0 0.0
    %1869 = vmatpush1.xpose.msra.mxu0 0.0
    %1870 = vmatprep.subr.mxu0 0.0
    %1871 = vmatpush1.xpose.msra.mxu0 0.0
    %1872 = vmatprep.subr.mxu0 0.0
    %1873 = vmatpush1.xpose.msra.mxu0 0.0
    %1874 = vmatprep.subr.mxu0 0.0
    %1875 = vmatpush1.xpose.msra.mxu0 0.0
    %1876 = vmatprep.subr.mxu0 0.0
    %1877 = vmatpush1.xpose.msra.mxu0 0.0
    %1878 = vmatprep.subr.mxu0 0.0
    %1879 = vmatpush1.xpose.msra.mxu0 0.0
    %1880 = vmatprep.mubr.f32.mxu0 0.0
    %1881 = vmatmul.mubr.f32.gmra.mrb[0].mxu0 %v1812
    %v1882 = vpop.f32.mrb[0].mxu0
    %v1883 = vadd.f32 %v1810, %v1882
    %v1884 = vpop.f32.mrb[0].mxu0
    %1885 = vdwg.mxu0
    %v1886 = vadd.f32 %v1323, %v113
    %v1887 = vadd.f32 %v1403, %v114
    %v1888 = vadd.f32 %v1483, %v115
    %v1889 = vadd.f32 %v1563, %v116
    %v1890 = vadd.f32 %v1643, %v117
    %v1891 = vadd.f32 %v1723, %v118
    %v1892 = vadd.f32 %v1803, %v119
    %v1893 = vadd.f32 %v1883, %v120
    %v1894 = vsel %vm414, %v1886, -inf
    %1895 = vmax.xlane.f32.xlu0 %v1894
    %v1896 = vpop.xlane.xlu0 %1895
    %v1897 = vsel %vm414, %v1887, -inf
    %1898 = vmax.xlane.f32.xlu0 %v1897
    %v1899 = vpop.xlane.xlu0 %1898
    %v1900 = vsel %vm414, %v1888, -inf
    %1901 = vmax.xlane.f32.xlu0 %v1900
    %v1902 = vpop.xlane.xlu0 %1901
    %v1903 = vsel %vm414, %v1889, -inf
    %1904 = vmax.xlane.f32.xlu0 %v1903
    %v1905 = vpop.xlane.xlu0 %1904
    %v1906 = vsel %vm414, %v1890, -inf
    %1907 = vmax.xlane.f32.xlu0 %v1906
    %v1908 = vpop.xlane.xlu0 %1907
    %v1909 = vsel %vm414, %v1891, -inf
    %1910 = vmax.xlane.f32.xlu0 %v1909
    %v1911 = vpop.xlane.xlu0 %1910
    %v1912 = vsel %vm414, %v1892, -inf
    %1913 = vmax.xlane.f32.xlu0 %v1912
    %v1914 = vpop.xlane.xlu0 %1913
    %v1915 = vsel %vm414, %v1893, -inf
    %1916 = vmax.xlane.f32.xlu0 %v1915
    %v1917 = vpop.xlane.xlu0 %1916
    %v1918 = vsub.f32 %v1886, %v1896
    %v1919 = vsub.f32 %v1887, %v1899
    %v1920 = vsub.f32 %v1888, %v1902
    %v1921 = vsub.f32 %v1889, %v1905
    %v1922 = vsub.f32 %v1890, %v1908
    %v1923 = vsub.f32 %v1891, %v1911
    %v1924 = vsub.f32 %v1892, %v1914
    %v1925 = vsub.f32 %v1893, %v1917
    %v1926 = vmul.f32 %v1918, 1.442695
    %v1927 = vpow.pop %v1926
    %v1928 = vmul.f32 %v1919, 1.442695
    %v1929 = vpow.pop %v1928
    %v1930 = vmul.f32 %v1920, 1.442695
    %v1931 = vpow.pop %v1930
    %v1932 = vmul.f32 %v1921, 1.442695
    %v1933 = vpow.pop %v1932
    %v1934 = vmul.f32 %v1922, 1.442695
    %v1935 = vpow.pop %v1934
    %v1936 = vmul.f32 %v1923, 1.442695
    %v1937 = vpow.pop %v1936
    %v1938 = vmul.f32 %v1924, 1.442695
    %v1939 = vpow.pop %v1938
    %v1940 = vmul.f32 %v1925, 1.442695
    %v1941 = vpow.pop %v1940
    %v1942 = vsel %vm414, %v1927, 0.0
    %1943 = vadd.xlane.f32.xlu0 %v1942
    %v1944 = vpop.xlane.xlu0 %1943
    %v1945 = vsel %vm414, %v1929, 0.0
    %1946 = vadd.xlane.f32.xlu0 %v1945
    %v1947 = vpop.xlane.xlu0 %1946
    %v1948 = vsel %vm414, %v1931, 0.0
    %1949 = vadd.xlane.f32.xlu0 %v1948
    %v1950 = vpop.xlane.xlu0 %1949
    %v1951 = vsel %vm414, %v1933, 0.0
    %1952 = vadd.xlane.f32.xlu0 %v1951
    %v1953 = vpop.xlane.xlu0 %1952
    %v1954 = vsel %vm414, %v1935, 0.0
    %1955 = vadd.xlane.f32.xlu0 %v1954
    %v1956 = vpop.xlane.xlu0 %1955
    %v1957 = vsel %vm414, %v1937, 0.0
    %1958 = vadd.xlane.f32.xlu0 %v1957
    %v1959 = vpop.xlane.xlu0 %1958
    %v1960 = vsel %vm414, %v1939, 0.0
    %1961 = vadd.xlane.f32.xlu0 %v1960
    %v1962 = vpop.xlane.xlu0 %1961
    %v1963 = vsel %vm414, %v1941, 0.0
    %1964 = vadd.xlane.f32.xlu0 %v1963
    %v1965 = vpop.xlane.xlu0 %1964
    %v1966 = vrcp.pop %v1944
    %v1967 = vmul.f32 %v1927, %v1966
    %v1968 = vrcp.pop %v1947
    %v1969 = vmul.f32 %v1929, %v1968
    %v1970 = vrcp.pop %v1950
    %v1971 = vmul.f32 %v1931, %v1970
    %v1972 = vrcp.pop %v1953
    %v1973 = vmul.f32 %v1933, %v1972
    %v1974 = vrcp.pop %v1956
    %v1975 = vmul.f32 %v1935, %v1974
    %v1976 = vrcp.pop %v1959
    %v1977 = vmul.f32 %v1937, %v1976
    %v1978 = vrcp.pop %v1962
    %v1979 = vmul.f32 %v1939, %v1978
    %v1980 = vrcp.pop %v1965
    %v1981 = vmul.f32 %v1941, %v1980
    %1982 = vrot.lane.b32.xlu0 %v257, 64
    %v1983 = vpop.permute.xlu0 %1982
    %v1986 = vsel %vm414, %v1967, 0
    %1988 = vmatprep.subr.mxu0 0.0
    %1989 = vmatpush1.msra.mxu0 %v1983
    %1990 = vmatprep.subr.mxu0 0.0
    %1991 = vmatpush1.msra.mxu0 0.0
    %1992 = vmatprep.subr.mxu0 0.0
    %1993 = vmatpush1.msra.mxu0 0.0
    %1994 = vmatprep.subr.mxu0 0.0
    %1995 = vmatpush1.msra.mxu0 0.0
    %1996 = vmatprep.subr.mxu0 0.0
    %1997 = vmatpush1.msra.mxu0 0.0
    %1998 = vmatprep.subr.mxu0 0.0
    %1999 = vmatpush1.msra.mxu0 0.0
    %2000 = vmatprep.subr.mxu0 0.0
    %2001 = vmatpush1.msra.mxu0 0.0
    %2002 = vmatprep.subr.mxu0 0.0
    %2003 = vmatpush1.msra.mxu0 0.0
    %2004 = vmatprep.subr.mxu0 0.0
    %2005 = vmatpush1.msra.mxu0 0.0
    %2006 = vmatprep.subr.mxu0 0.0
    %2007 = vmatpush1.msra.mxu0 0.0
    %2008 = vmatprep.subr.mxu0 0.0
    %2009 = vmatpush1.msra.mxu0 0.0
    %2010 = vmatprep.subr.mxu0 0.0
    %2011 = vmatpush1.msra.mxu0 0.0
    %2012 = vmatprep.subr.mxu0 0.0
    %2013 = vmatpush1.msra.mxu0 0.0
    %2014 = vmatprep.subr.mxu0 0.0
    %2015 = vmatpush1.msra.mxu0 0.0
    %2016 = vmatprep.subr.mxu0 0.0
    %2017 = vmatpush1.msra.mxu0 0.0
    %2018 = vmatprep.subr.mxu0 0.0
    %2019 = vmatpush1.msra.mxu0 0.0
    %2020 = vmatprep.subr.mxu0 0.0
    %2021 = vmatpush1.msra.mxu0 0.0
    %2022 = vmatprep.subr.mxu0 0.0
    %2023 = vmatpush1.msra.mxu0 0.0
    %2024 = vmatprep.subr.mxu0 0.0
    %2025 = vmatpush1.msra.mxu0 0.0
    %2026 = vmatprep.subr.mxu0 0.0
    %2027 = vmatpush1.msra.mxu0 0.0
    %2028 = vmatprep.subr.mxu0 0.0
    %2029 = vmatpush1.msra.mxu0 0.0
    %2030 = vmatprep.subr.mxu0 0.0
    %2031 = vmatpush1.msra.mxu0 0.0
    %2032 = vmatprep.subr.mxu0 0.0
    %2033 = vmatpush1.msra.mxu0 0.0
    %2034 = vmatprep.subr.mxu0 0.0
    %2035 = vmatpush1.msra.mxu0 0.0
    %2036 = vmatprep.subr.mxu0 0.0
    %2037 = vmatpush1.msra.mxu0 0.0
    %2038 = vmatprep.subr.mxu0 0.0
    %2039 = vmatpush1.msra.mxu0 0.0
    %2040 = vmatprep.subr.mxu0 0.0
    %2041 = vmatpush1.msra.mxu0 0.0
    %2042 = vmatprep.subr.mxu0 0.0
    %2043 = vmatpush1.msra.mxu0 0.0
    %2044 = vmatprep.subr.mxu0 0.0
    %2045 = vmatpush1.msra.mxu0 0.0
    %2046 = vmatprep.subr.mxu0 0.0
    %2047 = vmatpush1.msra.mxu0 0.0
    %2048 = vmatprep.subr.mxu0 0.0
    %2049 = vmatpush1.msra.mxu0 0.0
    %2050 = vmatprep.subr.mxu0 0.0
    %2051 = vmatpush1.msra.mxu0 0.0
    %2052 = vmatprep.mubr.f32.mxu0 0.0
    %2053 = vmatmul.mubr.f32.gmra.mrb[0].mxu0 %v1986
    %v2054 = vpop.f32.mrb[0].mxu0
    %v2055 = vadd.f32 0.0, %v2054
    %v2056 = vpop.f32.mrb[0].mxu0
    %2057 = vdwg.mxu0
    %2058 = vrot.lane.b32.xlu0 %v388, 64
    %v2059 = vpop.permute.xlu0 %2058
    %v2062 = vsel %vm414, %v1969, 0
    %2064 = vmatprep.subr.mxu0 0.0
    %2065 = vmatpush1.msra.mxu0 %v2059
    %2066 = vmatprep.subr.mxu0 0.0
    %2067 = vmatpush1.msra.mxu0 0.0
    %2068 = vmatprep.subr.mxu0 0.0
    %2069 = vmatpush1.msra.mxu0 0.0
    %2070 = vmatprep.subr.mxu0 0.0
    %2071 = vmatpush1.msra.mxu0 0.0
    %2072 = vmatprep.subr.mxu0 0.0
    %2073 = vmatpush1.msra.mxu0 0.0
    %2074 = vmatprep.subr.mxu0 0.0
    %2075 = vmatpush1.msra.mxu0 0.0
    %2076 = vmatprep.subr.mxu0 0.0
    %2077 = vmatpush1.msra.mxu0 0.0
    %2078 = vmatprep.subr.mxu0 0.0
    %2079 = vmatpush1.msra.mxu0 0.0
    %2080 = vmatprep.subr.mxu0 0.0
    %2081 = vmatpush1.msra.mxu0 0.0
    %2082 = vmatprep.subr.mxu0 0.0
    %2083 = vmatpush1.msra.mxu0 0.0
    %2084 = vmatprep.subr.mxu0 0.0
    %2085 = vmatpush1.msra.mxu0 0.0
    %2086 = vmatprep.subr.mxu0 0.0
    %2087 = vmatpush1.msra.mxu0 0.0
    %2088 = vmatprep.subr.mxu0 0.0
    %2089 = vmatpush1.msra.mxu0 0.0
    %2090 = vmatprep.subr.mxu0 0.0
    %2091 = vmatpush1.msra.mxu0 0.0
    %2092 = vmatprep.subr.mxu0 0.0
    %2093 = vmatpush1.msra.mxu0 0.0
    %2094 = vmatprep.subr.mxu0 0.0
    %2095 = vmatpush1.msra.mxu0 0.0
    %2096 = vmatprep.subr.mxu0 0.0
    %2097 = vmatpush1.msra.mxu0 0.0
    %2098 = vmatprep.subr.mxu0 0.0
    %2099 = vmatpush1.msra.mxu0 0.0
    %2100 = vmatprep.subr.mxu0 0.0
    %2101 = vmatpush1.msra.mxu0 0.0
    %2102 = vmatprep.subr.mxu0 0.0
    %2103 = vmatpush1.msra.mxu0 0.0
    %2104 = vmatprep.subr.mxu0 0.0
    %2105 = vmatpush1.msra.mxu0 0.0
    %2106 = vmatprep.subr.mxu0 0.0
    %2107 = vmatpush1.msra.mxu0 0.0
    %2108 = vmatprep.subr.mxu0 0.0
    %2109 = vmatpush1.msra.mxu0 0.0
    %2110 = vmatprep.subr.mxu0 0.0
    %2111 = vmatpush1.msra.mxu0 0.0
    %2112 = vmatprep.subr.mxu0 0.0
    %2113 = vmatpush1.msra.mxu0 0.0
    %2114 = vmatprep.subr.mxu0 0.0
    %2115 = vmatpush1.msra.mxu0 0.0
    %2116 = vmatprep.subr.mxu0 0.0
    %2117 = vmatpush1.msra.mxu0 0.0
    %2118 = vmatprep.subr.mxu0 0.0
    %2119 = vmatpush1.msra.mxu0 0.0
    %2120 = vmatprep.subr.mxu0 0.0
    %2121 = vmatpush1.msra.mxu0 0.0
    %2122 = vmatprep.subr.mxu0 0.0
    %2123 = vmatpush1.msra.mxu0 0.0
    %2124 = vmatprep.subr.mxu0 0.0
    %2125 = vmatpush1.msra.mxu0 0.0
    %2126 = vmatprep.subr.mxu0 0.0
    %2127 = vmatpush1.msra.mxu0 0.0
    %2128 = vmatprep.mubr.f32.mxu0 0.0
    %2129 = vmatmul.mubr.f32.gmra.mrb[0].mxu0 %v2062
    %v2130 = vpop.f32.mrb[0].mxu0
    %v2131 = vadd.f32 0.0, %v2130
    %v2132 = vpop.f32.mrb[0].mxu0
    %2133 = vdwg.mxu0
    %2134 = vrot.lane.b32.xlu0 %v390, 64
    %v2135 = vpop.permute.xlu0 %2134
    %v2138 = vsel %vm414, %v1971, 0
    %2140 = vmatprep.subr.mxu0 0.0
    %2141 = vmatpush1.msra.mxu0 %v2135
    %2142 = vmatprep.subr.mxu0 0.0
    %2143 = vmatpush1.msra.mxu0 0.0
    %2144 = vmatprep.subr.mxu0 0.0
    %2145 = vmatpush1.msra.mxu0 0.0
    %2146 = vmatprep.subr.mxu0 0.0
    %2147 = vmatpush1.msra.mxu0 0.0
    %2148 = vmatprep.subr.mxu0 0.0
    %2149 = vmatpush1.msra.mxu0 0.0
    %2150 = vmatprep.subr.mxu0 0.0
    %2151 = vmatpush1.msra.mxu0 0.0
    %2152 = vmatprep.subr.mxu0 0.0
    %2153 = vmatpush1.msra.mxu0 0.0
    %2154 = vmatprep.subr.mxu0 0.0
    %2155 = vmatpush1.msra.mxu0 0.0
    %2156 = vmatprep.subr.mxu0 0.0
    %2157 = vmatpush1.msra.mxu0 0.0
    %2158 = vmatprep.subr.mxu0 0.0
    %2159 = vmatpush1.msra.mxu0 0.0
    %2160 = vmatprep.subr.mxu0 0.0
    %2161 = vmatpush1.msra.mxu0 0.0
    %2162 = vmatprep.subr.mxu0 0.0
    %2163 = vmatpush1.msra.mxu0 0.0
    %2164 = vmatprep.subr.mxu0 0.0
    %2165 = vmatpush1.msra.mxu0 0.0
    %2166 = vmatprep.subr.mxu0 0.0
    %2167 = vmatpush1.msra.mxu0 0.0
    %2168 = vmatprep.subr.mxu0 0.0
    %2169 = vmatpush1.msra.mxu0 0.0
    %2170 = vmatprep.subr.mxu0 0.0
    %2171 = vmatpush1.msra.mxu0 0.0
    %2172 = vmatprep.subr.mxu0 0.0
    %2173 = vmatpush1.msra.mxu0 0.0
    %2174 = vmatprep.subr.mxu0 0.0
    %2175 = vmatpush1.msra.mxu0 0.0
    %2176 = vmatprep.subr.mxu0 0.0
    %2177 = vmatpush1.msra.mxu0 0.0
    %2178 = vmatprep.subr.mxu0 0.0
    %2179 = vmatpush1.msra.mxu0 0.0
    %2180 = vmatprep.subr.mxu0 0.0
    %2181 = vmatpush1.msra.mxu0 0.0
    %2182 = vmatprep.subr.mxu0 0.0
    %2183 = vmatpush1.msra.mxu0 0.0
    %2184 = vmatprep.subr.mxu0 0.0
    %2185 = vmatpush1.msra.mxu0 0.0
    %2186 = vmatprep.subr.mxu0 0.0
    %2187 = vmatpush1.msra.mxu0 0.0
    %2188 = vmatprep.subr.mxu0 0.0
    %2189 = vmatpush1.msra.mxu0 0.0
    %2190 = vmatprep.subr.mxu0 0.0
    %2191 = vmatpush1.msra.mxu0 0.0
    %2192 = vmatprep.subr.mxu0 0.0
    %2193 = vmatpush1.msra.mxu0 0.0
    %2194 = vmatprep.subr.mxu0 0.0
    %2195 = vmatpush1.msra.mxu0 0.0
    %2196 = vmatprep.subr.mxu0 0.0
    %2197 = vmatpush1.msra.mxu0 0.0
    %2198 = vmatprep.subr.mxu0 0.0
    %2199 = vmatpush1.msra.mxu0 0.0
    %2200 = vmatprep.subr.mxu0 0.0
    %2201 = vmatpush1.msra.mxu0 0.0
    %2202 = vmatprep.subr.mxu0 0.0
    %2203 = vmatpush1.msra.mxu0 0.0
    %2204 = vmatprep.mubr.f32.mxu0 0.0
    %2205 = vmatmul.mubr.f32.gmra.mrb[0].mxu0 %v2138
    %v2206 = vpop.f32.mrb[0].mxu0
    %v2207 = vadd.f32 0.0, %v2206
    %v2208 = vpop.f32.mrb[0].mxu0
    %2209 = vdwg.mxu0
    %2210 = vrot.lane.b32.xlu0 %v392, 64
    %v2211 = vpop.permute.xlu0 %2210
    %v2214 = vsel %vm414, %v1973, 0
    %2216 = vmatprep.subr.mxu0 0.0
    %2217 = vmatpush1.msra.mxu0 %v2211
    %2218 = vmatprep.subr.mxu0 0.0
    %2219 = vmatpush1.msra.mxu0 0.0
    %2220 = vmatprep.subr.mxu0 0.0
    %2221 = vmatpush1.msra.mxu0 0.0
    %2222 = vmatprep.subr.mxu0 0.0
    %2223 = vmatpush1.msra.mxu0 0.0
    %2224 = vmatprep.subr.mxu0 0.0
    %2225 = vmatpush1.msra.mxu0 0.0
    %2226 = vmatprep.subr.mxu0 0.0
    %2227 = vmatpush1.msra.mxu0 0.0
    %2228 = vmatprep.subr.mxu0 0.0
    %2229 = vmatpush1.msra.mxu0 0.0
    %2230 = vmatprep.subr.mxu0 0.0
    %2231 = vmatpush1.msra.mxu0 0.0
    %2232 = vmatprep.subr.mxu0 0.0
    %2233 = vmatpush1.msra.mxu0 0.0
    %2234 = vmatprep.subr.mxu0 0.0
    %2235 = vmatpush1.msra.mxu0 0.0
    %2236 = vmatprep.subr.mxu0 0.0
    %2237 = vmatpush1.msra.mxu0 0.0
    %2238 = vmatprep.subr.mxu0 0.0
    %2239 = vmatpush1.msra.mxu0 0.0
    %2240 = vmatprep.subr.mxu0 0.0
    %2241 = vmatpush1.msra.mxu0 0.0
    %2242 = vmatprep.subr.mxu0 0.0
    %2243 = vmatpush1.msra.mxu0 0.0
    %2244 = vmatprep.subr.mxu0 0.0
    %2245 = vmatpush1.msra.mxu0 0.0
    %2246 = vmatprep.subr.mxu0 0.0
    %2247 = vmatpush1.msra.mxu0 0.0
    %2248 = vmatprep.subr.mxu0 0.0
    %2249 = vmatpush1.msra.mxu0 0.0
    %2250 = vmatprep.subr.mxu0 0.0
    %2251 = vmatpush1.msra.mxu0 0.0
    %2252 = vmatprep.subr.mxu0 0.0
    %2253 = vmatpush1.msra.mxu0 0.0
    %2254 = vmatprep.subr.mxu0 0.0
    %2255 = vmatpush1.msra.mxu0 0.0
    %2256 = vmatprep.subr.mxu0 0.0
    %2257 = vmatpush1.msra.mxu0 0.0
    %2258 = vmatprep.subr.mxu0 0.0
    %2259 = vmatpush1.msra.mxu0 0.0
    %2260 = vmatprep.subr.mxu0 0.0
    %2261 = vmatpush1.msra.mxu0 0.0
    %2262 = vmatprep.subr.mxu0 0.0
    %2263 = vmatpush1.msra.mxu0 0.0
    %2264 = vmatprep.subr.mxu0 0.0
    %2265 = vmatpush1.msra.mxu0 0.0
    %2266 = vmatprep.subr.mxu0 0.0
    %2267 = vmatpush1.msra.mxu0 0.0
    %2268 = vmatprep.subr.mxu0 0.0
    %2269 = vmatpush1.msra.mxu0 0.0
    %2270 = vmatprep.subr.mxu0 0.0
    %2271 = vmatpush1.msra.mxu0 0.0
    %2272 = vmatprep.subr.mxu0 0.0
    %2273 = vmatpush1.msra.mxu0 0.0
    %2274 = vmatprep.subr.mxu0 0.0
    %2275 = vmatpush1.msra.mxu0 0.0
    %2276 = vmatprep.subr.mxu0 0.0
    %2277 = vmatpush1.msra.mxu0 0.0
    %2278 = vmatprep.subr.mxu0 0.0
    %2279 = vmatpush1.msra.mxu0 0.0
    %2280 = vmatprep.mubr.f32.mxu0 0.0
    %2281 = vmatmul.mubr.f32.gmra.mrb[0].mxu0 %v2214
    %v2282 = vpop.f32.mrb[0].mxu0
    %v2283 = vadd.f32 0.0, %v2282
    %v2284 = vpop.f32.mrb[0].mxu0
    %2285 = vdwg.mxu0
    %2286 = vrot.lane.b32.xlu0 %v262, 64
    %v2287 = vpop.permute.xlu0 %2286
    %v2290 = vsel %vm414, %v1975, 0
    %2292 = vmatprep.subr.mxu0 0.0
    %2293 = vmatpush1.msra.mxu0 %v2287
    %2294 = vmatprep.subr.mxu0 0.0
    %2295 = vmatpush1.msra.mxu0 0.0
    %2296 = vmatprep.subr.mxu0 0.0
    %2297 = vmatpush1.msra.mxu0 0.0
    %2298 = vmatprep.subr.mxu0 0.0
    %2299 = vmatpush1.msra.mxu0 0.0
    %2300 = vmatprep.subr.mxu0 0.0
    %2301 = vmatpush1.msra.mxu0 0.0
    %2302 = vmatprep.subr.mxu0 0.0
    %2303 = vmatpush1.msra.mxu0 0.0
    %2304 = vmatprep.subr.mxu0 0.0
    %2305 = vmatpush1.msra.mxu0 0.0
    %2306 = vmatprep.subr.mxu0 0.0
    %2307 = vmatpush1.msra.mxu0 0.0
    %2308 = vmatprep.subr.mxu0 0.0
    %2309 = vmatpush1.msra.mxu0 0.0
    %2310 = vmatprep.subr.mxu0 0.0
    %2311 = vmatpush1.msra.mxu0 0.0
    %2312 = vmatprep.subr.mxu0 0.0
    %2313 = vmatpush1.msra.mxu0 0.0
    %2314 = vmatprep.subr.mxu0 0.0
    %2315 = vmatpush1.msra.mxu0 0.0
    %2316 = vmatprep.subr.mxu0 0.0
    %2317 = vmatpush1.msra.mxu0 0.0
    %2318 = vmatprep.subr.mxu0 0.0
    %2319 = vmatpush1.msra.mxu0 0.0
    %2320 = vmatprep.subr.mxu0 0.0
    %2321 = vmatpush1.msra.mxu0 0.0
    %2322 = vmatprep.subr.mxu0 0.0
    %2323 = vmatpush1.msra.mxu0 0.0
    %2324 = vmatprep.subr.mxu0 0.0
    %2325 = vmatpush1.msra.mxu0 0.0
    %2326 = vmatprep.subr.mxu0 0.0
    %2327 = vmatpush1.msra.mxu0 0.0
    %2328 = vmatprep.subr.mxu0 0.0
    %2329 = vmatpush1.msra.mxu0 0.0
    %2330 = vmatprep.subr.mxu0 0.0
    %2331 = vmatpush1.msra.mxu0 0.0
    %2332 = vmatprep.subr.mxu0 0.0
    %2333 = vmatpush1.msra.mxu0 0.0
    %2334 = vmatprep.subr.mxu0 0.0
    %2335 = vmatpush1.msra.mxu0 0.0
    %2336 = vmatprep.subr.mxu0 0.0
    %2337 = vmatpush1.msra.mxu0 0.0
    %2338 = vmatprep.subr.mxu0 0.0
    %2339 = vmatpush1.msra.mxu0 0.0
    %2340 = vmatprep.subr.mxu0 0.0
    %2341 = vmatpush1.msra.mxu0 0.0
    %2342 = vmatprep.subr.mxu0 0.0
    %2343 = vmatpush1.msra.mxu0 0.0
    %2344 = vmatprep.subr.mxu0 0.0
    %2345 = vmatpush1.msra.mxu0 0.0
    %2346 = vmatprep.subr.mxu0 0.0
    %2347 = vmatpush1.msra.mxu0 0.0
    %2348 = vmatprep.subr.mxu0 0.0
    %2349 = vmatpush1.msra.mxu0 0.0
    %2350 = vmatprep.subr.mxu0 0.0
    %2351 = vmatpush1.msra.mxu0 0.0
    %2352 = vmatprep.subr.mxu0 0.0
    %2353 = vmatpush1.msra.mxu0 0.0
    %2354 = vmatprep.subr.mxu0 0.0
    %2355 = vmatpush1.msra.mxu0 0.0
    %2356 = vmatprep.mubr.f32.mxu0 0.0
    %2357 = vmatmul.mubr.f32.gmra.mrb[0].mxu0 %v2290
    %v2358 = vpop.f32.mrb[0].mxu0
    %v2359 = vadd.f32 0.0, %v2358
    %v2360 = vpop.f32.mrb[0].mxu0
    %2361 = vdwg.mxu0
    %2362 = vrot.lane.b32.xlu0 %v395, 64
    %v2363 = vpop.permute.xlu0 %2362
    %v2366 = vsel %vm414, %v1977, 0
    %2368 = vmatprep.subr.mxu0 0.0
    %2369 = vmatpush1.msra.mxu0 %v2363
    %2370 = vmatprep.subr.mxu0 0.0
    %2371 = vmatpush1.msra.mxu0 0.0
    %2372 = vmatprep.subr.mxu0 0.0
    %2373 = vmatpush1.msra.mxu0 0.0
    %2374 = vmatprep.subr.mxu0 0.0
    %2375 = vmatpush1.msra.mxu0 0.0
    %2376 = vmatprep.subr.mxu0 0.0
    %2377 = vmatpush1.msra.mxu0 0.0
    %2378 = vmatprep.subr.mxu0 0.0
    %2379 = vmatpush1.msra.mxu0 0.0
    %2380 = vmatprep.subr.mxu0 0.0
    %2381 = vmatpush1.msra.mxu0 0.0
    %2382 = vmatprep.subr.mxu0 0.0
    %2383 = vmatpush1.msra.mxu0 0.0
    %2384 = vmatprep.subr.mxu0 0.0
    %2385 = vmatpush1.msra.mxu0 0.0
    %2386 = vmatprep.subr.mxu0 0.0
    %2387 = vmatpush1.msra.mxu0 0.0
    %2388 = vmatprep.subr.mxu0 0.0
    %2389 = vmatpush1.msra.mxu0 0.0
    %2390 = vmatprep.subr.mxu0 0.0
    %2391 = vmatpush1.msra.mxu0 0.0
    %2392 = vmatprep.subr.mxu0 0.0
    %2393 = vmatpush1.msra.mxu0 0.0
    %2394 = vmatprep.subr.mxu0 0.0
    %2395 = vmatpush1.msra.mxu0 0.0
    %2396 = vmatprep.subr.mxu0 0.0
    %2397 = vmatpush1.msra.mxu0 0.0
    %2398 = vmatprep.subr.mxu0 0.0
    %2399 = vmatpush1.msra.mxu0 0.0
    %2400 = vmatprep.subr.mxu0 0.0
    %2401 = vmatpush1.msra.mxu0 0.0
    %2402 = vmatprep.subr.mxu0 0.0
    %2403 = vmatpush1.msra.mxu0 0.0
    %2404 = vmatprep.subr.mxu0 0.0
    %2405 = vmatpush1.msra.mxu0 0.0
    %2406 = vmatprep.subr.mxu0 0.0
    %2407 = vmatpush1.msra.mxu0 0.0
    %2408 = vmatprep.subr.mxu0 0.0
    %2409 = vmatpush1.msra.mxu0 0.0
    %2410 = vmatprep.subr.mxu0 0.0
    %2411 = vmatpush1.msra.mxu0 0.0
    %2412 = vmatprep.subr.mxu0 0.0
    %2413 = vmatpush1.msra.mxu0 0.0
    %2414 = vmatprep.subr.mxu0 0.0
    %2415 = vmatpush1.msra.mxu0 0.0
    %2416 = vmatprep.subr.mxu0 0.0
    %2417 = vmatpush1.msra.mxu0 0.0
    %2418 = vmatprep.subr.mxu0 0.0
    %2419 = vmatpush1.msra.mxu0 0.0
    %2420 = vmatprep.subr.mxu0 0.0
    %2421 = vmatpush1.msra.mxu0 0.0
    %2422 = vmatprep.subr.mxu0 0.0
    %2423 = vmatpush1.msra.mxu0 0.0
    %2424 = vmatprep.subr.mxu0 0.0
    %2425 = vmatpush1.msra.mxu0 0.0
    %2426 = vmatprep.subr.mxu0 0.0
    %2427 = vmatpush1.msra.mxu0 0.0
    %2428 = vmatprep.subr.mxu0 0.0
    %2429 = vmatpush1.msra.mxu0 0.0
    %2430 = vmatprep.subr.mxu0 0.0
    %2431 = vmatpush1.msra.mxu0 0.0
    %2432 = vmatprep.mubr.f32.mxu0 0.0
    %2433 = vmatmul.mubr.f32.gmra.mrb[0].mxu0 %v2366
    %v2434 = vpop.f32.mrb[0].mxu0
    %v2435 = vadd.f32 0.0, %v2434
    %v2436 = vpop.f32.mrb[0].mxu0
    %2437 = vdwg.mxu0
    %2438 = vrot.lane.b32.xlu0 %v397, 64
    %v2439 = vpop.permute.xlu0 %2438
    %v2442 = vsel %vm414, %v1979, 0
    %2444 = vmatprep.subr.mxu0 0.0
    %2445 = vmatpush1.msra.mxu0 %v2439
    %2446 = vmatprep.subr.mxu0 0.0
    %2447 = vmatpush1.msra.mxu0 0.0
    %2448 = vmatprep.subr.mxu0 0.0
    %2449 = vmatpush1.msra.mxu0 0.0
    %2450 = vmatprep.subr.mxu0 0.0
    %2451 = vmatpush1.msra.mxu0 0.0
    %2452 = vmatprep.subr.mxu0 0.0
    %2453 = vmatpush1.msra.mxu0 0.0
    %2454 = vmatprep.subr.mxu0 0.0
    %2455 = vmatpush1.msra.mxu0 0.0
    %2456 = vmatprep.subr.mxu0 0.0
    %2457 = vmatpush1.msra.mxu0 0.0
    %2458 = vmatprep.subr.mxu0 0.0
    %2459 = vmatpush1.msra.mxu0 0.0
    %2460 = vmatprep.subr.mxu0 0.0
    %2461 = vmatpush1.msra.mxu0 0.0
    %2462 = vmatprep.subr.mxu0 0.0
    %2463 = vmatpush1.msra.mxu0 0.0
    %2464 = vmatprep.subr.mxu0 0.0
    %2465 = vmatpush1.msra.mxu0 0.0
    %2466 = vmatprep.subr.mxu0 0.0
    %2467 = vmatpush1.msra.mxu0 0.0
    %2468 = vmatprep.subr.mxu0 0.0
    %2469 = vmatpush1.msra.mxu0 0.0
    %2470 = vmatprep.subr.mxu0 0.0
    %2471 = vmatpush1.msra.mxu0 0.0
    %2472 = vmatprep.subr.mxu0 0.0
    %2473 = vmatpush1.msra.mxu0 0.0
    %2474 = vmatprep.subr.mxu0 0.0
    %2475 = vmatpush1.msra.mxu0 0.0
    %2476 = vmatprep.subr.mxu0 0.0
    %2477 = vmatpush1.msra.mxu0 0.0
    %2478 = vmatprep.subr.mxu0 0.0
    %2479 = vmatpush1.msra.mxu0 0.0
    %2480 = vmatprep.subr.mxu0 0.0
    %2481 = vmatpush1.msra.mxu0 0.0
    %2482 = vmatprep.subr.mxu0 0.0
    %2483 = vmatpush1.msra.mxu0 0.0
    %2484 = vmatprep.subr.mxu0 0.0
    %2485 = vmatpush1.msra.mxu0 0.0
    %2486 = vmatprep.subr.mxu0 0.0
    %2487 = vmatpush1.msra.mxu0 0.0
    %2488 = vmatprep.subr.mxu0 0.0
    %2489 = vmatpush1.msra.mxu0 0.0
    %2490 = vmatprep.subr.mxu0 0.0
    %2491 = vmatpush1.msra.mxu0 0.0
    %2492 = vmatprep.subr.mxu0 0.0
    %2493 = vmatpush1.msra.mxu0 0.0
    %2494 = vmatprep.subr.mxu0 0.0
    %2495 = vmatpush1.msra.mxu0 0.0
    %2496 = vmatprep.subr.mxu0 0.0
    %2497 = vmatpush1.msra.mxu0 0.0
    %2498 = vmatprep.subr.mxu0 0.0
    %2499 = vmatpush1.msra.mxu0 0.0
    %2500 = vmatprep.subr.mxu0 0.0
    %2501 = vmatpush1.msra.mxu0 0.0
    %2502 = vmatprep.subr.mxu0 0.0
    %2503 = vmatpush1.msra.mxu0 0.0
    %2504 = vmatprep.subr.mxu0 0.0
    %2505 = vmatpush1.msra.mxu0 0.0
    %2506 = vmatprep.subr.mxu0 0.0
    %2507 = vmatpush1.msra.mxu0 0.0
    %2508 = vmatprep.mubr.f32.mxu0 0.0
    %2509 = vmatmul.mubr.f32.gmra.mrb[0].mxu0 %v2442
    %v2510 = vpop.f32.mrb[0].mxu0
    %v2511 = vadd.f32 0.0, %v2510
    %v2512 = vpop.f32.mrb[0].mxu0
    %2513 = vdwg.mxu0
    %2514 = vrot.lane.b32.xlu0 %v399, 64
    %v2515 = vpop.permute.xlu0 %2514
    %v2518 = vsel %vm414, %v1981, 0
    %2520 = vmatprep.subr.mxu0 0.0
    %2521 = vmatpush1.msra.mxu0 %v2515
    %2522 = vmatprep.subr.mxu0 0.0
    %2523 = vmatpush1.msra.mxu0 0.0
    %2524 = vmatprep.subr.mxu0 0.0
    %2525 = vmatpush1.msra.mxu0 0.0
    %2526 = vmatprep.subr.mxu0 0.0
    %2527 = vmatpush1.msra.mxu0 0.0
    %2528 = vmatprep.subr.mxu0 0.0
    %2529 = vmatpush1.msra.mxu0 0.0
    %2530 = vmatprep.subr.mxu0 0.0
    %2531 = vmatpush1.msra.mxu0 0.0
    %2532 = vmatprep.subr.mxu0 0.0
    %2533 = vmatpush1.msra.mxu0 0.0
    %2534 = vmatprep.subr.mxu0 0.0
    %2535 = vmatpush1.msra.mxu0 0.0
    %2536 = vmatprep.subr.mxu0 0.0
    %2537 = vmatpush1.msra.mxu0 0.0
    %2538 = vmatprep.subr.mxu0 0.0
    %2539 = vmatpush1.msra.mxu0 0.0
    %2540 = vmatprep.subr.mxu0 0.0
    %2541 = vmatpush1.msra.mxu0 0.0
    %2542 = vmatprep.subr.mxu0 0.0
    %2543 = vmatpush1.msra.mxu0 0.0
    %2544 = vmatprep.subr.mxu0 0.0
    %2545 = vmatpush1.msra.mxu0 0.0
    %2546 = vmatprep.subr.mxu0 0.0
    %2547 = vmatpush1.msra.mxu0 0.0
    %2548 = vmatprep.subr.mxu0 0.0
    %2549 = vmatpush1.msra.mxu0 0.0
    %2550 = vmatprep.subr.mxu0 0.0
    %2551 = vmatpush1.msra.mxu0 0.0
    %2552 = vmatprep.subr.mxu0 0.0
    %2553 = vmatpush1.msra.mxu0 0.0
    %2554 = vmatprep.subr.mxu0 0.0
    %2555 = vmatpush1.msra.mxu0 0.0
    %2556 = vmatprep.subr.mxu0 0.0
    %2557 = vmatpush1.msra.mxu0 0.0
    %2558 = vmatprep.subr.mxu0 0.0
    %2559 = vmatpush1.msra.mxu0 0.0
    %2560 = vmatprep.subr.mxu0 0.0
    %2561 = vmatpush1.msra.mxu0 0.0
    %2562 = vmatprep.subr.mxu0 0.0
    %2563 = vmatpush1.msra.mxu0 0.0
    %2564 = vmatprep.subr.mxu0 0.0
    %2565 = vmatpush1.msra.mxu0 0.0
    %2566 = vmatprep.subr.mxu0 0.0
    %2567 = vmatpush1.msra.mxu0 0.0
    %2568 = vmatprep.subr.mxu0 0.0
    %2569 = vmatpush1.msra.mxu0 0.0
    %2570 = vmatprep.subr.mxu0 0.0
    %2571 = vmatpush1.msra.mxu0 0.0
    %2572 = vmatprep.subr.mxu0 0.0
    %2573 = vmatpush1.msra.mxu0 0.0
    %2574 = vmatprep.subr.mxu0 0.0
    %2575 = vmatpush1.msra.mxu0 0.0
    %2576 = vmatprep.subr.mxu0 0.0
    %2577 = vmatpush1.msra.mxu0 0.0
    %2578 = vmatprep.subr.mxu0 0.0
    %2579 = vmatpush1.msra.mxu0 0.0
    %2580 = vmatprep.subr.mxu0 0.0
    %2581 = vmatpush1.msra.mxu0 0.0
    %2582 = vmatprep.subr.mxu0 0.0
    %2583 = vmatpush1.msra.mxu0 0.0
    %2584 = vmatprep.mubr.f32.mxu0 0.0
    %2585 = vmatmul.mubr.f32.gmra.mrb[0].mxu0 %v2518
    %v2586 = vpop.f32.mrb[0].mxu0
    %v2587 = vadd.f32 0.0, %v2586
    %v2588 = vpop.f32.mrb[0].mxu0
    %2589 = vdwg.mxu0
    %2591 = vrot.lane.b32.xlu0 %v2131, 8
    %v2592 = vpop.permute.xlu0 %2591
    %2595 = vrot.lane.b32.xlu0 %v2207, 16
    %v2596 = vpop.permute.xlu0 %2595
    %2599 = vrot.lane.b32.xlu0 %v2283, 24
    %v2600 = vpop.permute.xlu0 %2599
    %v2602 = vsel %vm414, %v2055, %v2592
    %vm2603 = vcmask 130048
    %v2604 = vsel %vm2603, %v2602, %v2596
    %vm2605 = vcmask 195584
    %v2606 = vsel %vm2605, %v2604, %v2600
    %2608 = vrot.lane.b32.xlu0 %v2435, 8
    %v2609 = vpop.permute.xlu0 %2608
    %2612 = vrot.lane.b32.xlu0 %v2511, 16
    %v2613 = vpop.permute.xlu0 %2612
    %2616 = vrot.lane.b32.xlu0 %v2587, 24
    %v2617 = vpop.permute.xlu0 %2616
    %v2619 = vsel %vm414, %v2359, %v2609
    %v2620 = vsel %vm2603, %v2619, %v2613
    %v2621 = vsel %vm2605, %v2620, %v2617
    %v2622 = vlaneseq
    %v2623 = vshrl.u32 %v2622, 7
    %v2624 = vsub.s32 0, %v2623
    %v2625 = vrot.slane %v167, %v2624
    %v2627 = vsel %vm183, %v2606, 0
    %v2630 = vsel %vm183, %v2621, 0
    %2632 = vmatprep.subr.mxu0 0.0
    %2633 = vmatpush1.msra.mxu0 %v137
    %2634 = vmatprep.subr.mxu0 0.0
    %2635 = vmatpush1.msra.mxu0 %v138
    %2636 = vmatprep.subr.mxu0 0.0
    %2637 = vmatpush1.msra.mxu0 %v139
    %2638 = vmatprep.subr.mxu0 0.0
    %2639 = vmatpush1.msra.mxu0 %v140
    %2640 = vmatprep.subr.mxu0 0.0
    %2641 = vmatpush1.msra.mxu0 0.0
    %2642 = vmatprep.subr.mxu0 0.0
    %2643 = vmatpush1.msra.mxu0 0.0
    %2644 = vmatprep.subr.mxu0 0.0
    %2645 = vmatpush1.msra.mxu0 0.0
    %2646 = vmatprep.subr.mxu0 0.0
    %2647 = vmatpush1.msra.mxu0 0.0
    %2648 = vmatprep.subr.mxu0 0.0
    %2649 = vmatpush1.msra.mxu0 0.0
    %2650 = vmatprep.subr.mxu0 0.0
    %2651 = vmatpush1.msra.mxu0 0.0
    %2652 = vmatprep.subr.mxu0 0.0
    %2653 = vmatpush1.msra.mxu0 0.0
    %2654 = vmatprep.subr.mxu0 0.0
    %2655 = vmatpush1.msra.mxu0 0.0
    %2656 = vmatprep.subr.mxu0 0.0
    %2657 = vmatpush1.msra.mxu0 0.0
    %2658 = vmatprep.subr.mxu0 0.0
    %2659 = vmatpush1.msra.mxu0 0.0
    %2660 = vmatprep.subr.mxu0 0.0
    %2661 = vmatpush1.msra.mxu0 0.0
    %2662 = vmatprep.subr.mxu0 0.0
    %2663 = vmatpush1.msra.mxu0 0.0
    %2664 = vmatprep.subr.mxu0 0.0
    %2665 = vmatpush1.msra.mxu0 0.0
    %2666 = vmatprep.subr.mxu0 0.0
    %2667 = vmatpush1.msra.mxu0 0.0
    %2668 = vmatprep.subr.mxu0 0.0
    %2669 = vmatpush1.msra.mxu0 0.0
    %2670 = vmatprep.subr.mxu0 0.0
    %2671 = vmatpush1.msra.mxu0 0.0
    %2672 = vmatprep.subr.mxu0 0.0
    %2673 = vmatpush1.msra.mxu0 0.0
    %2674 = vmatprep.subr.mxu0 0.0
    %2675 = vmatpush1.msra.mxu0 0.0
    %2676 = vmatprep.subr.mxu0 0.0
    %2677 = vmatpush1.msra.mxu0 0.0
    %2678 = vmatprep.subr.mxu0 0.0
    %2679 = vmatpush1.msra.mxu0 0.0
    %2680 = vmatprep.subr.mxu0 0.0
    %2681 = vmatpush1.msra.mxu0 0.0
    %2682 = vmatprep.subr.mxu0 0.0
    %2683 = vmatpush1.msra.mxu0 0.0
    %2684 = vmatprep.subr.mxu0 0.0
    %2685 = vmatpush1.msra.mxu0 0.0
    %2686 = vmatprep.subr.mxu0 0.0
    %2687 = vmatpush1.msra.mxu0 0.0
    %2688 = vmatprep.subr.mxu0 0.0
    %2689 = vmatpush1.msra.mxu0 0.0
    %2690 = vmatprep.subr.mxu0 0.0
    %2691 = vmatpush1.msra.mxu0 0.0
    %2692 = vmatprep.subr.mxu0 0.0
    %2693 = vmatpush1.msra.mxu0 0.0
    %2694 = vmatprep.subr.mxu0 0.0
    %2695 = vmatpush1.msra.mxu0 0.0
    %2696 = vmatprep.mubr.f32.mxu0 0.0
    %2697 = vmatmul.mubr.f32.gmra.mrb[0].mxu0 %v2627
    %v2698 = vpop.f32.mrb[0].mxu0
    %v2699 = vadd.f32 %v2625, %v2698
    %v2700 = vpop.f32.mrb[0].mxu0
    %2701 = vmatprep.mubr.f32.mxu0 0.0
    %2702 = vmatmul.mubr.f32.gmra.mrb[0].mxu0 %v2630
    %v2703 = vpop.f32.mrb[0].mxu0
    %v2704 = vadd.f32 %v2625, %v2703
    %v2705 = vpop.f32.mrb[0].mxu0
    %2706 = vdwg.mxu0
    %v2707 = vadd.f32 %v106, %v2699
    %v2708 = vadd.f32 %v107, %v2704
    %v2709 = vsel %vm183, %v2707, 0.0
    %2710 = vadd.xlane.f32.xlu0 %v2709
    %v2711 = vpop.xlane.xlu0 %2710
    %v2712 = vsel %vm183, %v2708, 0.0
    %2713 = vadd.xlane.f32.xlu0 %v2712
    %v2714 = vpop.xlane.xlu0 %2713
    %v2715 = vrcp.pop 32.0
    %v2716 = vmul.f32 %v2711, %v2715
    %v2717 = vmul.f32 %v2714, %v2715
    %v2718 = vsub.f32 %v2707, %v2716
    %v2719 = vsub.f32 %v2708, %v2717
    %v2720 = vmul.f32 %v2718, %v2718
    %v2721 = vmul.f32 %v2719, %v2719
    %v2722 = vsel %vm183, %v2720, 0.0
    %2723 = vadd.xlane.f32.xlu0 %v2722
    %v2724 = vpop.xlane.xlu0 %2723
    %v2725 = vsel %vm183, %v2721, 0.0
    %2726 = vadd.xlane.f32.xlu0 %v2725
    %v2727 = vpop.xlane.xlu0 %2726
    %v2728 = vmul.f32 %v2724, %v2715
    %v2729 = vmul.f32 %v2727, %v2715
    %v2730 = vadd.f32 %v2728, 1e-05
    %v2731 = vadd.f32 %v2729, 1e-05
    %v2732 = vrsqrt.pop %v2730
    %v2733 = vrsqrt.pop %v2731
    %v2734 = vmul.f32 %v2718, %v2732
    %v2735 = vmul.f32 %v2719, %v2733
    %v2736 = vlaneseq
    %v2737 = vshrl.u32 %v2736, 7
    %v2738 = vsub.s32 0, %v2737
    %v2739 = vrot.slane %v171, %v2738
    %v2740 = vmul.f32 %v2734, %v2739
    %v2741 = vmul.f32 %v2735, %v2739
    %v2742 = vlaneseq
    %v2743 = vshrl.u32 %v2742, 7
    %v2744 = vsub.s32 0, %v2743
    %v2745 = vrot.slane %v172, %v2744
    %v2746 = vadd.f32 %v2740, %v2745
    %v2747 = vadd.f32 %v2741, %v2745
    %v2748 = vlaneseq
    %v2749 = vshrl.u32 %v2748, 7
    %v2750 = vsub.s32 0, %v2749
    %v2751 = vrot.slane %v165, %v2750
    %v2753 = vsel %vm183, %v2746, 0
    %v2756 = vsel %vm183, %v2747, 0
    %2758 = vmatprep.subr.mxu0 0.0
    %2759 = vmatpush1.msra.mxu0 %v141
    %2760 = vmatprep.subr.mxu0 0.0
    %2761 = vmatpush1.msra.mxu0 %v142
    %2762 = vmatprep.subr.mxu0 0.0
    %2763 = vmatpush1.msra.mxu0 %v143
    %2764 = vmatprep.subr.mxu0 0.0
    %2765 = vmatpush1.msra.mxu0 %v144
    %2766 = vmatprep.subr.mxu0 0.0
    %2767 = vmatpush1.msra.mxu0 0.0
    %2768 = vmatprep.subr.mxu0 0.0
    %2769 = vmatpush1.msra.mxu0 0.0
    %2770 = vmatprep.subr.mxu0 0.0
    %2771 = vmatpush1.msra.mxu0 0.0
    %2772 = vmatprep.subr.mxu0 0.0
    %2773 = vmatpush1.msra.mxu0 0.0
    %2774 = vmatprep.subr.mxu0 0.0
    %2775 = vmatpush1.msra.mxu0 0.0
    %2776 = vmatprep.subr.mxu0 0.0
    %2777 = vmatpush1.msra.mxu0 0.0
    %2778 = vmatprep.subr.mxu0 0.0
    %2779 = vmatpush1.msra.mxu0 0.0
    %2780 = vmatprep.subr.mxu0 0.0
    %2781 = vmatpush1.msra.mxu0 0.0
    %2782 = vmatprep.subr.mxu0 0.0
    %2783 = vmatpush1.msra.mxu0 0.0
    %2784 = vmatprep.subr.mxu0 0.0
    %2785 = vmatpush1.msra.mxu0 0.0
    %2786 = vmatprep.subr.mxu0 0.0
    %2787 = vmatpush1.msra.mxu0 0.0
    %2788 = vmatprep.subr.mxu0 0.0
    %2789 = vmatpush1.msra.mxu0 0.0
    %2790 = vmatprep.subr.mxu0 0.0
    %2791 = vmatpush1.msra.mxu0 0.0
    %2792 = vmatprep.subr.mxu0 0.0
    %2793 = vmatpush1.msra.mxu0 0.0
    %2794 = vmatprep.subr.mxu0 0.0
    %2795 = vmatpush1.msra.mxu0 0.0
    %2796 = vmatprep.subr.mxu0 0.0
    %2797 = vmatpush1.msra.mxu0 0.0
    %2798 = vmatprep.subr.mxu0 0.0
    %2799 = vmatpush1.msra.mxu0 0.0
    %2800 = vmatprep.subr.mxu0 0.0
    %2801 = vmatpush1.msra.mxu0 0.0
    %2802 = vmatprep.subr.mxu0 0.0
    %2803 = vmatpush1.msra.mxu0 0.0
    %2804 = vmatprep.subr.mxu0 0.0
    %2805 = vmatpush1.msra.mxu0 0.0
    %2806 = vmatprep.subr.mxu0 0.0
    %2807 = vmatpush1.msra.mxu0 0.0
    %2808 = vmatprep.subr.mxu0 0.0
    %2809 = vmatpush1.msra.mxu0 0.0
    %2810 = vmatprep.subr.mxu0 0.0
    %2811 = vmatpush1.msra.mxu0 0.0
    %2812 = vmatprep.subr.mxu0 0.0
    %2813 = vmatpush1.msra.mxu0 0.0
    %2814 = vmatprep.subr.mxu0 0.0
    %2815 = vmatpush1.msra.mxu0 0.0
    %2816 = vmatprep.subr.mxu0 0.0
    %2817 = vmatpush1.msra.mxu0 0.0
    %2818 = vmatprep.subr.mxu0 0.0
    %2819 = vmatpush1.msra.mxu0 0.0
    %2820 = vmatprep.subr.mxu0 0.0
    %2821 = vmatpush1.msra.mxu0 0.0
    %2822 = vmatprep.mubr.f32.mxu0 0.0
    %2823 = vmatmul.mubr.f32.gmra.mrb[0].mxu0 %v2753
    %v2824 = vpop.f32.mrb[0].mxu0
    %v2825 = vadd.f32 %v2751, %v2824
    %v2826 = vpop.f32.mrb[0].mxu0
    %2827 = vmatprep.mubr.f32.mxu0 0.0
    %2828 = vmatmul.mubr.f32.gmra.mrb[0].mxu0 %v2756
    %v2829 = vpop.f32.mrb[0].mxu0
    %v2830 = vadd.f32 %v2751, %v2829
    %v2831 = vpop.f32.mrb[0].mxu0
    %2832 = vdwg.mxu0
    %v2833 = vlaneseq
    %v2834 = vshrl.u32 %v2833, 7
    %v2835 = vsub.s32 0, %v2834
    %v2836 = vrot.slane %v166, %v2835
    %v2838 = vsel %vm2605, %v108, 0
    %v2841 = vsel %vm2605, %v109, 0
    %v2844 = vsel %vm2605, %v110, 0
    %2846 = vmatprep.subr.mxu0 0.0
    %2847 = vmatpush1.msra.mxu0 %v153
    %2848 = vmatprep.subr.mxu0 0.0
    %2849 = vmatpush1.msra.mxu0 %v154
    %2850 = vmatprep.subr.mxu0 0.0
    %2851 = vmatpush1.msra.mxu0 %v155
    %2852 = vmatprep.subr.mxu0 0.0
    %2853 = vmatpush1.msra.mxu0 0.0
    %2854 = vmatprep.subr.mxu0 0.0
    %2855 = vmatpush1.msra.mxu0 0.0
    %2856 = vmatprep.subr.mxu0 0.0
    %2857 = vmatpush1.msra.mxu0 0.0
    %2858 = vmatprep.subr.mxu0 0.0
    %2859 = vmatpush1.msra.mxu0 0.0
    %2860 = vmatprep.subr.mxu0 0.0
    %2861 = vmatpush1.msra.mxu0 0.0
    %2862 = vmatprep.subr.mxu0 0.0
    %2863 = vmatpush1.msra.mxu0 0.0
    %2864 = vmatprep.subr.mxu0 0.0
    %2865 = vmatpush1.msra.mxu0 0.0
    %2866 = vmatprep.subr.mxu0 0.0
    %2867 = vmatpush1.msra.mxu0 0.0
    %2868 = vmatprep.subr.mxu0 0.0
    %2869 = vmatpush1.msra.mxu0 0.0
    %2870 = vmatprep.subr.mxu0 0.0
    %2871 = vmatpush1.msra.mxu0 0.0
    %2872 = vmatprep.subr.mxu0 0.0
    %2873 = vmatpush1.msra.mxu0 0.0
    %2874 = vmatprep.subr.mxu0 0.0
    %2875 = vmatpush1.msra.mxu0 0.0
    %2876 = vmatprep.subr.mxu0 0.0
    %2877 = vmatpush1.msra.mxu0 0.0
    %2878 = vmatprep.subr.mxu0 0.0
    %2879 = vmatpush1.msra.mxu0 0.0
    %2880 = vmatprep.subr.mxu0 0.0
    %2881 = vmatpush1.msra.mxu0 0.0
    %2882 = vmatprep.subr.mxu0 0.0
    %2883 = vmatpush1.msra.mxu0 0.0
    %2884 = vmatprep.subr.mxu0 0.0
    %2885 = vmatpush1.msra.mxu0 0.0
    %2886 = vmatprep.subr.mxu0 0.0
    %2887 = vmatpush1.msra.mxu0 0.0
    %2888 = vmatprep.subr.mxu0 0.0
    %2889 = vmatpush1.msra.mxu0 0.0
    %2890 = vmatprep.subr.mxu0 0.0
    %2891 = vmatpush1.msra.mxu0 0.0
    %2892 = vmatprep.subr.mxu0 0.0
    %2893 = vmatpush1.msra.mxu0 0.0
    %2894 = vmatprep.subr.mxu0 0.0
    %2895 = vmatpush1.msra.mxu0 0.0
    %2896 = vmatprep.subr.mxu0 0.0
    %2897 = vmatpush1.msra.mxu0 0.0
    %2898 = vmatprep.subr.mxu0 0.0
    %2899 = vmatpush1.msra.mxu0 0.0
    %2900 = vmatprep.subr.mxu0 0.0
    %2901 = vmatpush1.msra.mxu0 0.0
    %2902 = vmatprep.subr.mxu0 0.0
    %2903 = vmatpush1.msra.mxu0 0.0
    %2904 = vmatprep.subr.mxu0 0.0
    %2905 = vmatpush1.msra.mxu0 0.0
    %2906 = vmatprep.subr.mxu0 0.0
    %2907 = vmatpush1.msra.mxu0 0.0
    %2908 = vmatprep.subr.mxu0 0.0
    %2909 = vmatpush1.msra.mxu0 0.0
    %2910 = vmatprep.mubr.f32.mxu0 0.0
    %2911 = vmatmul.mubr.f32.gmra.mrb[0].mxu0 %v2838
    %v2912 = vpop.f32.mrb[0].mxu0
    %v2913 = vadd.f32 %v2836, %v2912
    %v2914 = vpop.f32.mrb[0].mxu0
    %2915 = vmatprep.mubr.f32.mxu0 0.0
    %2916 = vmatmul.mubr.f32.gmra.mrb[0].mxu0 %v2841
    %v2917 = vpop.f32.mrb[0].mxu0
    %v2918 = vadd.f32 %v2836, %v2917
    %v2919 = vpop.f32.mrb[0].mxu0
    %2920 = vmatprep.mubr.f32.mxu0 0.0
    %2921 = vmatmul.mubr.f32.gmra.mrb[0].mxu0 %v2844
    %v2922 = vpop.f32.mrb[0].mxu0
    %v2923 = vadd.f32 %v2836, %v2922
    %v2924 = vpop.f32.mrb[0].mxu0
    %2925 = vdwg.mxu0
    %2927 = vrot.lane.b32.xlu0 %v2825, 120
    %v2928 = vpop.permute.xlu0 %2927
    %2929 = vrot.lane.b32.xlu0 %v2825, 112
    %v2930 = vpop.permute.xlu0 %2929
    %2931 = vrot.lane.b32.xlu0 %v2825, 104
    %v2932 = vpop.permute.xlu0 %2931
    %2934 = vrot.lane.b32.xlu0 %v2830, 120
    %v2935 = vpop.permute.xlu0 %2934
    %2936 = vrot.lane.b32.xlu0 %v2830, 112
    %v2937 = vpop.permute.xlu0 %2936
    %2938 = vrot.lane.b32.xlu0 %v2830, 104
    %v2939 = vpop.permute.xlu0 %2938
    %2942 = vrot.lane.b32.xlu0 %v2913, 120
    %v2943 = vpop.permute.xlu0 %2942
    %2944 = vrot.lane.b32.xlu0 %v2918, 120
    %v2945 = vpop.permute.xlu0 %2944
    %2946 = vrot.lane.b32.xlu0 %v2913, 112
    %v2947 = vpop.permute.xlu0 %2946
    %2948 = vrot.lane.b32.xlu0 %v2918, 112
    %v2949 = vpop.permute.xlu0 %2948
    %2950 = vrot.lane.b32.xlu0 %v2913, 104
    %v2951 = vpop.permute.xlu0 %2950
    %2952 = vrot.lane.b32.xlu0 %v2918, 104
    %v2953 = vpop.permute.xlu0 %2952
    %v2955 = vrot.slane %v2918, 4
    %v2956 = vrot.slane %v2923, 4
    %v2957 = vsel %vm1210, %v2955, %v2956
    %2958 = vrot.lane.b32.xlu0 %v2957, 120
    %v2959 = vpop.permute.xlu0 %2958
    %2960 = vrot.lane.b32.xlu0 %v2956, 120
    %v2961 = vpop.permute.xlu0 %2960
    %2962 = vrot.lane.b32.xlu0 %v2957, 112
    %v2963 = vpop.permute.xlu0 %2962
    %2964 = vrot.lane.b32.xlu0 %v2956, 112
    %v2965 = vpop.permute.xlu0 %2964
    %2966 = vrot.lane.b32.xlu0 %v2957, 104
    %v2967 = vpop.permute.xlu0 %2966
    %2968 = vrot.lane.b32.xlu0 %v2956, 104
    %v2969 = vpop.permute.xlu0 %2968
    %v2970 = vsel %vm414, %v2825, 0
    %v2972 = vsel %vm414, %v2913, 0
    %v2974 = vsel %vm414, %v2918, 0
    %2976 = vmatprep.subr.mxu0 0.0
    %2977 = vmatpush1.xpose.msra.mxu0 %v2972
    %2978 = vmatprep.subr.mxu0 0.0
    %2979 = vmatpush1.xpose.msra.mxu0 %v2974
    %2980 = vmatprep.subr.mxu0 0.0
    %2981 = vmatpush1.xpose.msra.mxu0 0.0
    %2982 = vmatprep.subr.mxu0 0.0
    %2983 = vmatpush1.xpose.msra.mxu0 0.0
    %2984 = vmatprep.subr.mxu0 0.0
    %2985 = vmatpush1.xpose.msra.mxu0 0.0
    %2986 = vmatprep.subr.mxu0 0.0
    %2987 = vmatpush1.xpose.msra.mxu0 0.0
    %2988 = vmatprep.subr.mxu0 0.0
    %2989 = vmatpush1.xpose.msra.mxu0 0.0
    %2990 = vmatprep.subr.mxu0 0.0
    %2991 = vmatpush1.xpose.msra.mxu0 0.0
    %2992 = vmatprep.subr.mxu0 0.0
    %2993 = vmatpush1.xpose.msra.mxu0 0.0
    %2994 = vmatprep.subr.mxu0 0.0
    %2995 = vmatpush1.xpose.msra.mxu0 0.0
    %2996 = vmatprep.subr.mxu0 0.0
    %2997 = vmatpush1.xpose.msra.mxu0 0.0
    %2998 = vmatprep.subr.mxu0 0.0
    %2999 = vmatpush1.xpose.msra.mxu0 0.0
    %3000 = vmatprep.subr.mxu0 0.0
    %3001 = vmatpush1.xpose.msra.mxu0 0.0
    %3002 = vmatprep.subr.mxu0 0.0
    %3003 = vmatpush1.xpose.msra.mxu0 0.0
    %3004 = vmatprep.subr.mxu0 0.0
    %3005 = vmatpush1.xpose.msra.mxu0 0.0
    %3006 = vmatprep.subr.mxu0 0.0
    %3007 = vmatpush1.xpose.msra.mxu0 0.0
    %3008 = vmatprep.subr.mxu0 0.0
    %3009 = vmatpush1.xpose.msra.mxu0 0.0
    %3010 = vmatprep.subr.mxu0 0.0
    %3011 = vmatpush1.xpose.msra.mxu0 0.0
    %3012 = vmatprep.subr.mxu0 0.0
    %3013 = vmatpush1.xpose.msra.mxu0 0.0
    %3014 = vmatprep.subr.mxu0 0.0
    %3015 = vmatpush1.xpose.msra.mxu0 0.0
    %3016 = vmatprep.subr.mxu0 0.0
    %3017 = vmatpush1.xpose.msra.mxu0 0.0
    %3018 = vmatprep.subr.mxu0 0.0
    %3019 = vmatpush1.xpose.msra.mxu0 0.0
    %3020 = vmatprep.subr.mxu0 0.0
    %3021 = vmatpush1.xpose.msra.mxu0 0.0
    %3022 = vmatprep.subr.mxu0 0.0
    %3023 = vmatpush1.xpose.msra.mxu0 0.0
    %3024 = vmatprep.subr.mxu0 0.0
    %3025 = vmatpush1.xpose.msra.mxu0 0.0
    %3026 = vmatprep.subr.mxu0 0.0
    %3027 = vmatpush1.xpose.msra.mxu0 0.0
    %3028 = vmatprep.subr.mxu0 0.0
    %3029 = vmatpush1.xpose.msra.mxu0 0.0
    %3030 = vmatprep.subr.mxu0 0.0
    %3031 = vmatpush1.xpose.msra.mxu0 0.0
    %3032 = vmatprep.subr.mxu0 0.0
    %3033 = vmatpush1.xpose.msra.mxu0 0.0
    %3034 = vmatprep.subr.mxu0 0.0
    %3035 = vmatpush1.xpose.msra.mxu0 0.0
    %3036 = vmatprep.subr.mxu0 0.0
    %3037 = vmatpush1.xpose.msra.mxu0 0.0
    %3038 = vmatprep.subr.mxu0 0.0
    %3039 = vmatpush1.xpose.msra.mxu0 0.0
    %3040 = vmatprep.mubr.f32.mxu0 0.0
    %3041 = vmatmul.mubr.f32.gmra.mrb[0].mxu0 %v2970
    %v3042 = vpop.f32.mrb[0].mxu0
    %v3043 = vadd.f32 %v121, %v3042
    %v3044 = vpop.f32.mrb[0].mxu0
    %3045 = vdwg.mxu0
    %v3046 = vsel %vm414, %v2928, 0
    %v3048 = vsel %vm414, %v2943, 0
    %v3050 = vsel %vm414, %v2945, 0
    %3052 = vmatprep.subr.mxu0 0.0
    %3053 = vmatpush1.xpose.msra.mxu0 %v3048
    %3054 = vmatprep.subr.mxu0 0.0
    %3055 = vmatpush1.xpose.msra.mxu0 %v3050
    %3056 = vmatprep.subr.mxu0 0.0
    %3057 = vmatpush1.xpose.msra.mxu0 0.0
    %3058 = vmatprep.subr.mxu0 0.0
    %3059 = vmatpush1.xpose.msra.mxu0 0.0
    %3060 = vmatprep.subr.mxu0 0.0
    %3061 = vmatpush1.xpose.msra.mxu0 0.0
    %3062 = vmatprep.subr.mxu0 0.0
    %3063 = vmatpush1.xpose.msra.mxu0 0.0
    %3064 = vmatprep.subr.mxu0 0.0
    %3065 = vmatpush1.xpose.msra.mxu0 0.0
    %3066 = vmatprep.subr.mxu0 0.0
    %3067 = vmatpush1.xpose.msra.mxu0 0.0
    %3068 = vmatprep.subr.mxu0 0.0
    %3069 = vmatpush1.xpose.msra.mxu0 0.0
    %3070 = vmatprep.subr.mxu0 0.0
    %3071 = vmatpush1.xpose.msra.mxu0 0.0
    %3072 = vmatprep.subr.mxu0 0.0
    %3073 = vmatpush1.xpose.msra.mxu0 0.0
    %3074 = vmatprep.subr.mxu0 0.0
    %3075 = vmatpush1.xpose.msra.mxu0 0.0
    %3076 = vmatprep.subr.mxu0 0.0
    %3077 = vmatpush1.xpose.msra.mxu0 0.0
    %3078 = vmatprep.subr.mxu0 0.0
    %3079 = vmatpush1.xpose.msra.mxu0 0.0
    %3080 = vmatprep.subr.mxu0 0.0
    %3081 = vmatpush1.xpose.msra.mxu0 0.0
    %3082 = vmatprep.subr.mxu0 0.0
    %3083 = vmatpush1.xpose.msra.mxu0 0.0
    %3084 = vmatprep.subr.mxu0 0.0
    %3085 = vmatpush1.xpose.msra.mxu0 0.0
    %3086 = vmatprep.subr.mxu0 0.0
    %3087 = vmatpush1.xpose.msra.mxu0 0.0
    %3088 = vmatprep.subr.mxu0 0.0
    %3089 = vmatpush1.xpose.msra.mxu0 0.0
    %3090 = vmatprep.subr.mxu0 0.0
    %3091 = vmatpush1.xpose.msra.mxu0 0.0
    %3092 = vmatprep.subr.mxu0 0.0
    %3093 = vmatpush1.xpose.msra.mxu0 0.0
    %3094 = vmatprep.subr.mxu0 0.0
    %3095 = vmatpush1.xpose.msra.mxu0 0.0
    %3096 = vmatprep.subr.mxu0 0.0
    %3097 = vmatpush1.xpose.msra.mxu0 0.0
    %3098 = vmatprep.subr.mxu0 0.0
    %3099 = vmatpush1.xpose.msra.mxu0 0.0
    %3100 = vmatprep.subr.mxu0 0.0
    %3101 = vmatpush1.xpose.msra.mxu0 0.0
    %3102 = vmatprep.subr.mxu0 0.0
    %3103 = vmatpush1.xpose.msra.mxu0 0.0
    %3104 = vmatprep.subr.mxu0 0.0
    %3105 = vmatpush1.xpose.msra.mxu0 0.0
    %3106 = vmatprep.subr.mxu0 0.0
    %3107 = vmatpush1.xpose.msra.mxu0 0.0
    %3108 = vmatprep.subr.mxu0 0.0
    %3109 = vmatpush1.xpose.msra.mxu0 0.0
    %3110 = vmatprep.subr.mxu0 0.0
    %3111 = vmatpush1.xpose.msra.mxu0 0.0
    %3112 = vmatprep.subr.mxu0 0.0
    %3113 = vmatpush1.xpose.msra.mxu0 0.0
    %3114 = vmatprep.subr.mxu0 0.0
    %3115 = vmatpush1.xpose.msra.mxu0 0.0
    %3116 = vmatprep.mubr.f32.mxu0 0.0
    %3117 = vmatmul.mubr.f32.gmra.mrb[0].mxu0 %v3046
    %v3118 = vpop.f32.mrb[0].mxu0
    %v3119 = vadd.f32 %v122, %v3118
    %v3120 = vpop.f32.mrb[0].mxu0
    %3121 = vdwg.mxu0
    %v3122 = vsel %vm414, %v2930, 0
    %v3124 = vsel %vm414, %v2947, 0
    %v3126 = vsel %vm414, %v2949, 0
    %3128 = vmatprep.subr.mxu0 0.0
    %3129 = vmatpush1.xpose.msra.mxu0 %v3124
    %3130 = vmatprep.subr.mxu0 0.0
    %3131 = vmatpush1.xpose.msra.mxu0 %v3126
    %3132 = vmatprep.subr.mxu0 0.0
    %3133 = vmatpush1.xpose.msra.mxu0 0.0
    %3134 = vmatprep.subr.mxu0 0.0
    %3135 = vmatpush1.xpose.msra.mxu0 0.0
    %3136 = vmatprep.subr.mxu0 0.0
    %3137 = vmatpush1.xpose.msra.mxu0 0.0
    %3138 = vmatprep.subr.mxu0 0.0
    %3139 = vmatpush1.xpose.msra.mxu0 0.0
    %3140 = vmatprep.subr.mxu0 0.0
    %3141 = vmatpush1.xpose.msra.mxu0 0.0
    %3142 = vmatprep.subr.mxu0 0.0
    %3143 = vmatpush1.xpose.msra.mxu0 0.0
    %3144 = vmatprep.subr.mxu0 0.0
    %3145 = vmatpush1.xpose.msra.mxu0 0.0
    %3146 = vmatprep.subr.mxu0 0.0
    %3147 = vmatpush1.xpose.msra.mxu0 0.0
    %3148 = vmatprep.subr.mxu0 0.0
    %3149 = vmatpush1.xpose.msra.mxu0 0.0
    %3150 = vmatprep.subr.mxu0 0.0
    %3151 = vmatpush1.xpose.msra.mxu0 0.0
    %3152 = vmatprep.subr.mxu0 0.0
    %3153 = vmatpush1.xpose.msra.mxu0 0.0
    %3154 = vmatprep.subr.mxu0 0.0
    %3155 = vmatpush1.xpose.msra.mxu0 0.0
    %3156 = vmatprep.subr.mxu0 0.0
    %3157 = vmatpush1.xpose.msra.mxu0 0.0
    %3158 = vmatprep.subr.mxu0 0.0
    %3159 = vmatpush1.xpose.msra.mxu0 0.0
    %3160 = vmatprep.subr.mxu0 0.0
    %3161 = vmatpush1.xpose.msra.mxu0 0.0
    %3162 = vmatprep.subr.mxu0 0.0
    %3163 = vmatpush1.xpose.msra.mxu0 0.0
    %3164 = vmatprep.subr.mxu0 0.0
    %3165 = vmatpush1.xpose.msra.mxu0 0.0
    %3166 = vmatprep.subr.mxu0 0.0
    %3167 = vmatpush1.xpose.msra.mxu0 0.0
    %3168 = vmatprep.subr.mxu0 0.0
    %3169 = vmatpush1.xpose.msra.mxu0 0.0
    %3170 = vmatprep.subr.mxu0 0.0
    %3171 = vmatpush1.xpose.msra.mxu0 0.0
    %3172 = vmatprep.subr.mxu0 0.0
    %3173 = vmatpush1.xpose.msra.mxu0 0.0
    %3174 = vmatprep.subr.mxu0 0.0
    %3175 = vmatpush1.xpose.msra.mxu0 0.0
    %3176 = vmatprep.subr.mxu0 0.0
    %3177 = vmatpush1.xpose.msra.mxu0 0.0
    %3178 = vmatprep.subr.mxu0 0.0
    %3179 = vmatpush1.xpose.msra.mxu0 0.0
    %3180 = vmatprep.subr.mxu0 0.0
    %3181 = vmatpush1.xpose.msra.mxu0 0.0
    %3182 = vmatprep.subr.mxu0 0.0
    %3183 = vmatpush1.xpose.msra.mxu0 0.0
    %3184 = vmatprep.subr.mxu0 0.0
    %3185 = vmatpush1.xpose.msra.mxu0 0.0
    %3186 = vmatprep.subr.mxu0 0.0
    %3187 = vmatpush1.xpose.msra.mxu0 0.0
    %3188 = vmatprep.subr.mxu0 0.0
    %3189 = vmatpush1.xpose.msra.mxu0 0.0
    %3190 = vmatprep.subr.mxu0 0.0
    %3191 = vmatpush1.xpose.msra.mxu0 0.0
    %3192 = vmatprep.mubr.f32.mxu0 0.0
    %3193 = vmatmul.mubr.f32.gmra.mrb[0].mxu0 %v3122
    %v3194 = vpop.f32.mrb[0].mxu0
    %v3195 = vadd.f32 %v123, %v3194
    %v3196 = vpop.f32.mrb[0].mxu0
    %3197 = vdwg.mxu0
    %v3198 = vsel %vm414, %v2932, 0
    %v3200 = vsel %vm414, %v2951, 0
    %v3202 = vsel %vm414, %v2953, 0
    %3204 = vmatprep.subr.mxu0 0.0
    %3205 = vmatpush1.xpose.msra.mxu0 %v3200
    %3206 = vmatprep.subr.mxu0 0.0
    %3207 = vmatpush1.xpose.msra.mxu0 %v3202
    %3208 = vmatprep.subr.mxu0 0.0
    %3209 = vmatpush1.xpose.msra.mxu0 0.0
    %3210 = vmatprep.subr.mxu0 0.0
    %3211 = vmatpush1.xpose.msra.mxu0 0.0
    %3212 = vmatprep.subr.mxu0 0.0
    %3213 = vmatpush1.xpose.msra.mxu0 0.0
    %3214 = vmatprep.subr.mxu0 0.0
    %3215 = vmatpush1.xpose.msra.mxu0 0.0
    %3216 = vmatprep.subr.mxu0 0.0
    %3217 = vmatpush1.xpose.msra.mxu0 0.0
    %3218 = vmatprep.subr.mxu0 0.0
    %3219 = vmatpush1.xpose.msra.mxu0 0.0
    %3220 = vmatprep.subr.mxu0 0.0
    %3221 = vmatpush1.xpose.msra.mxu0 0.0
    %3222 = vmatprep.subr.mxu0 0.0
    %3223 = vmatpush1.xpose.msra.mxu0 0.0
    %3224 = vmatprep.subr.mxu0 0.0
    %3225 = vmatpush1.xpose.msra.mxu0 0.0
    %3226 = vmatprep.subr.mxu0 0.0
    %3227 = vmatpush1.xpose.msra.mxu0 0.0
    %3228 = vmatprep.subr.mxu0 0.0
    %3229 = vmatpush1.xpose.msra.mxu0 0.0
    %3230 = vmatprep.subr.mxu0 0.0
    %3231 = vmatpush1.xpose.msra.mxu0 0.0
    %3232 = vmatprep.subr.mxu0 0.0
    %3233 = vmatpush1.xpose.msra.mxu0 0.0
    %3234 = vmatprep.subr.mxu0 0.0
    %3235 = vmatpush1.xpose.msra.mxu0 0.0
    %3236 = vmatprep.subr.mxu0 0.0
    %3237 = vmatpush1.xpose.msra.mxu0 0.0
    %3238 = vmatprep.subr.mxu0 0.0
    %3239 = vmatpush1.xpose.msra.mxu0 0.0
    %3240 = vmatprep.subr.mxu0 0.0
    %3241 = vmatpush1.xpose.msra.mxu0 0.0
    %3242 = vmatprep.subr.mxu0 0.0
    %3243 = vmatpush1.xpose.msra.mxu0 0.0
    %3244 = vmatprep.subr.mxu0 0.0
    %3245 = vmatpush1.xpose.msra.mxu0 0.0
    %3246 = vmatprep.subr.mxu0 0.0
    %3247 = vmatpush1.xpose.msra.mxu0 0.0
    %3248 = vmatprep.subr.mxu0 0.0
    %3249 = vmatpush1.xpose.msra.mxu0 0.0
    %3250 = vmatprep.subr.mxu0 0.0
    %3251 = vmatpush1.xpose.msra.mxu0 0.0
    %3252 = vmatprep.subr.mxu0 0.0
    %3253 = vmatpush1.xpose.msra.mxu0 0.0
    %3254 = vmatprep.subr.mxu0 0.0
    %3255 = vmatpush1.xpose.msra.mxu0 0.0
    %3256 = vmatprep.subr.mxu0 0.0
    %3257 = vmatpush1.xpose.msra.mxu0 0.0
    %3258 = vmatprep.subr.mxu0 0.0
    %3259 = vmatpush1.xpose.msra.mxu0 0.0
    %3260 = vmatprep.subr.mxu0 0.0
    %3261 = vmatpush1.xpose.msra.mxu0 0.0
    %3262 = vmatprep.subr.mxu0 0.0
    %3263 = vmatpush1.xpose.msra.mxu0 0.0
    %3264 = vmatprep.subr.mxu0 0.0
    %3265 = vmatpush1.xpose.msra.mxu0 0.0
    %3266 = vmatprep.subr.mxu0 0.0
    %3267 = vmatpush1.xpose.msra.mxu0 0.0
    %3268 = vmatprep.mubr.f32.mxu0 0.0
    %3269 = vmatmul.mubr.f32.gmra.mrb[0].mxu0 %v3198
    %v3270 = vpop.f32.mrb[0].mxu0
    %v3271 = vadd.f32 %v124, %v3270
    %v3272 = vpop.f32.mrb[0].mxu0
    %3273 = vdwg.mxu0
    %v3274 = vsel %vm414, %v2830, 0
    %v3276 = vsel %vm414, %v2957, 0
    %v3278 = vsel %vm414, %v2956, 0
    %3280 = vmatprep.subr.mxu0 0.0
    %3281 = vmatpush1.xpose.msra.mxu0 %v3276
    %3282 = vmatprep.subr.mxu0 0.0
    %3283 = vmatpush1.xpose.msra.mxu0 %v3278
    %3284 = vmatprep.subr.mxu0 0.0
    %3285 = vmatpush1.xpose.msra.mxu0 0.0
    %3286 = vmatprep.subr.mxu0 0.0
    %3287 = vmatpush1.xpose.msra.mxu0 0.0
    %3288 = vmatprep.subr.mxu0 0.0
    %3289 = vmatpush1.xpose.msra.mxu0 0.0
    %3290 = vmatprep.subr.mxu0 0.0
    %3291 = vmatpush1.xpose.msra.mxu0 0.0
    %3292 = vmatprep.subr.mxu0 0.0
    %3293 = vmatpush1.xpose.msra.mxu0 0.0
    %3294 = vmatprep.subr.mxu0 0.0
    %3295 = vmatpush1.xpose.msra.mxu0 0.0
    %3296 = vmatprep.subr.mxu0 0.0
    %3297 = vmatpush1.xpose.msra.mxu0 0.0
    %3298 = vmatprep.subr.mxu0 0.0
    %3299 = vmatpush1.xpose.msra.mxu0 0.0
    %3300 = vmatprep.subr.mxu0 0.0
    %3301 = vmatpush1.xpose.msra.mxu0 0.0
    %3302 = vmatprep.subr.mxu0 0.0
    %3303 = vmatpush1.xpose.msra.mxu0 0.0
    %3304 = vmatprep.subr.mxu0 0.0
    %3305 = vmatpush1.xpose.msra.mxu0 0.0
    %3306 = vmatprep.subr.mxu0 0.0
    %3307 = vmatpush1.xpose.msra.mxu0 0.0
    %3308 = vmatprep.subr.mxu0 0.0
    %3309 = vmatpush1.xpose.msra.mxu0 0.0
    %3310 = vmatprep.subr.mxu0 0.0
    %3311 = vmatpush1.xpose.msra.mxu0 0.0
    %3312 = vmatprep.subr.mxu0 0.0
    %3313 = vmatpush1.xpose.msra.mxu0 0.0
    %3314 = vmatprep.subr.mxu0 0.0
    %3315 = vmatpush1.xpose.msra.mxu0 0.0
    %3316 = vmatprep.subr.mxu0 0.0
    %3317 = vmatpush1.xpose.msra.mxu0 0.0
    %3318 = vmatprep.subr.mxu0 0.0
    %3319 = vmatpush1.xpose.msra.mxu0 0.0
    %3320 = vmatprep.subr.mxu0 0.0
    %3321 = vmatpush1.xpose.msra.mxu0 0.0
    %3322 = vmatprep.subr.mxu0 0.0
    %3323 = vmatpush1.xpose.msra.mxu0 0.0
    %3324 = vmatprep.subr.mxu0 0.0
    %3325 = vmatpush1.xpose.msra.mxu0 0.0
    %3326 = vmatprep.subr.mxu0 0.0
    %3327 = vmatpush1.xpose.msra.mxu0 0.0
    %3328 = vmatprep.subr.mxu0 0.0
    %3329 = vmatpush1.xpose.msra.mxu0 0.0
    %3330 = vmatprep.subr.mxu0 0.0
    %3331 = vmatpush1.xpose.msra.mxu0 0.0
    %3332 = vmatprep.subr.mxu0 0.0
    %3333 = vmatpush1.xpose.msra.mxu0 0.0
    %3334 = vmatprep.subr.mxu0 0.0
    %3335 = vmatpush1.xpose.msra.mxu0 0.0
    %3336 = vmatprep.subr.mxu0 0.0
    %3337 = vmatpush1.xpose.msra.mxu0 0.0
    %3338 = vmatprep.subr.mxu0 0.0
    %3339 = vmatpush1.xpose.msra.mxu0 0.0
    %3340 = vmatprep.subr.mxu0 0.0
    %3341 = vmatpush1.xpose.msra.mxu0 0.0
    %3342 = vmatprep.subr.mxu0 0.0
    %3343 = vmatpush1.xpose.msra.mxu0 0.0
    %3344 = vmatprep.mubr.f32.mxu0 0.0
    %3345 = vmatmul.mubr.f32.gmra.mrb[0].mxu0 %v3274
    %v3346 = vpop.f32.mrb[0].mxu0
    %v3347 = vadd.f32 %v125, %v3346
    %v3348 = vpop.f32.mrb[0].mxu0
    %3349 = vdwg.mxu0
    %v3350 = vsel %vm414, %v2935, 0
    %v3352 = vsel %vm414, %v2959, 0
    %v3354 = vsel %vm414, %v2961, 0
    %3356 = vmatprep.subr.mxu0 0.0
    %3357 = vmatpush1.xpose.msra.mxu0 %v3352
    %3358 = vmatprep.subr.mxu0 0.0
    %3359 = vmatpush1.xpose.msra.mxu0 %v3354
    %3360 = vmatprep.subr.mxu0 0.0
    %3361 = vmatpush1.xpose.msra.mxu0 0.0
    %3362 = vmatprep.subr.mxu0 0.0
    %3363 = vmatpush1.xpose.msra.mxu0 0.0
    %3364 = vmatprep.subr.mxu0 0.0
    %3365 = vmatpush1.xpose.msra.mxu0 0.0
    %3366 = vmatprep.subr.mxu0 0.0
    %3367 = vmatpush1.xpose.msra.mxu0 0.0
    %3368 = vmatprep.subr.mxu0 0.0
    %3369 = vmatpush1.xpose.msra.mxu0 0.0
    %3370 = vmatprep.subr.mxu0 0.0
    %3371 = vmatpush1.xpose.msra.mxu0 0.0
    %3372 = vmatprep.subr.mxu0 0.0
    %3373 = vmatpush1.xpose.msra.mxu0 0.0
    %3374 = vmatprep.subr.mxu0 0.0
    %3375 = vmatpush1.xpose.msra.mxu0 0.0
    %3376 = vmatprep.subr.mxu0 0.0
    %3377 = vmatpush1.xpose.msra.mxu0 0.0
    %3378 = vmatprep.subr.mxu0 0.0
    %3379 = vmatpush1.xpose.msra.mxu0 0.0
    %3380 = vmatprep.subr.mxu0 0.0
    %3381 = vmatpush1.xpose.msra.mxu0 0.0
    %3382 = vmatprep.subr.mxu0 0.0
    %3383 = vmatpush1.xpose.msra.mxu0 0.0
    %3384 = vmatprep.subr.mxu0 0.0
    %3385 = vmatpush1.xpose.msra.mxu0 0.0
    %3386 = vmatprep.subr.mxu0 0.0
    %3387 = vmatpush1.xpose.msra.mxu0 0.0
    %3388 = vmatprep.subr.mxu0 0.0
    %3389 = vmatpush1.xpose.msra.mxu0 0.0
    %3390 = vmatprep.subr.mxu0 0.0
    %3391 = vmatpush1.xpose.msra.mxu0 0.0
    %3392 = vmatprep.subr.mxu0 0.0
    %3393 = vmatpush1.xpose.msra.mxu0 0.0
    %3394 = vmatprep.subr.mxu0 0.0
    %3395 = vmatpush1.xpose.msra.mxu0 0.0
    %3396 = vmatprep.subr.mxu0 0.0
    %3397 = vmatpush1.xpose.msra.mxu0 0.0
    %3398 = vmatprep.subr.mxu0 0.0
    %3399 = vmatpush1.xpose.msra.mxu0 0.0
    %3400 = vmatprep.subr.mxu0 0.0
    %3401 = vmatpush1.xpose.msra.mxu0 0.0
    %3402 = vmatprep.subr.mxu0 0.0
    %3403 = vmatpush1.xpose.msra.mxu0 0.0
    %3404 = vmatprep.subr.mxu0 0.0
    %3405 = vmatpush1.xpose.msra.mxu0 0.0
    %3406 = vmatprep.subr.mxu0 0.0
    %3407 = vmatpush1.xpose.msra.mxu0 0.0
    %3408 = vmatprep.subr.mxu0 0.0
    %3409 = vmatpush1.xpose.msra.mxu0 0.0
    %3410 = vmatprep.subr.mxu0 0.0
    %3411 = vmatpush1.xpose.msra.mxu0 0.0
    %3412 = vmatprep.subr.mxu0 0.0
    %3413 = vmatpush1.xpose.msra.mxu0 0.0
    %3414 = vmatprep.subr.mxu0 0.0
    %3415 = vmatpush1.xpose.msra.mxu0 0.0
    %3416 = vmatprep.subr.mxu0 0.0
    %3417 = vmatpush1.xpose.msra.mxu0 0.0
    %3418 = vmatprep.subr.mxu0 0.0
    %3419 = vmatpush1.xpose.msra.mxu0 0.0
    %3420 = vmatprep.mubr.f32.mxu0 0.0
    %3421 = vmatmul.mubr.f32.gmra.mrb[0].mxu0 %v3350
    %v3422 = vpop.f32.mrb[0].mxu0
    %v3423 = vadd.f32 %v126, %v3422
    %v3424 = vpop.f32.mrb[0].mxu0
    %3425 = vdwg.mxu0
    %v3426 = vsel %vm414, %v2937, 0
    %v3428 = vsel %vm414, %v2963, 0
    %v3430 = vsel %vm414, %v2965, 0
    %3432 = vmatprep.subr.mxu0 0.0
    %3433 = vmatpush1.xpose.msra.mxu0 %v3428
    %3434 = vmatprep.subr.mxu0 0.0
    %3435 = vmatpush1.xpose.msra.mxu0 %v3430
    %3436 = vmatprep.subr.mxu0 0.0
    %3437 = vmatpush1.xpose.msra.mxu0 0.0
    %3438 = vmatprep.subr.mxu0 0.0
    %3439 = vmatpush1.xpose.msra.mxu0 0.0
    %3440 = vmatprep.subr.mxu0 0.0
    %3441 = vmatpush1.xpose.msra.mxu0 0.0
    %3442 = vmatprep.subr.mxu0 0.0
    %3443 = vmatpush1.xpose.msra.mxu0 0.0
    %3444 = vmatprep.subr.mxu0 0.0
    %3445 = vmatpush1.xpose.msra.mxu0 0.0
    %3446 = vmatprep.subr.mxu0 0.0
    %3447 = vmatpush1.xpose.msra.mxu0 0.0
    %3448 = vmatprep.subr.mxu0 0.0
    %3449 = vmatpush1.xpose.msra.mxu0 0.0
    %3450 = vmatprep.subr.mxu0 0.0
    %3451 = vmatpush1.xpose.msra.mxu0 0.0
    %3452 = vmatprep.subr.mxu0 0.0
    %3453 = vmatpush1.xpose.msra.mxu0 0.0
    %3454 = vmatprep.subr.mxu0 0.0
    %3455 = vmatpush1.xpose.msra.mxu0 0.0
    %3456 = vmatprep.subr.mxu0 0.0
    %3457 = vmatpush1.xpose.msra.mxu0 0.0
    %3458 = vmatprep.subr.mxu0 0.0
    %3459 = vmatpush1.xpose.msra.mxu0 0.0
    %3460 = vmatprep.subr.mxu0 0.0
    %3461 = vmatpush1.xpose.msra.mxu0 0.0
    %3462 = vmatprep.subr.mxu0 0.0
    %3463 = vmatpush1.xpose.msra.mxu0 0.0
    %3464 = vmatprep.subr.mxu0 0.0
    %3465 = vmatpush1.xpose.msra.mxu0 0.0
    %3466 = vmatprep.subr.mxu0 0.0
    %3467 = vmatpush1.xpose.msra.mxu0 0.0
    %3468 = vmatprep.subr.mxu0 0.0
    %3469 = vmatpush1.xpose.msra.mxu0 0.0
    %3470 = vmatprep.subr.mxu0 0.0
    %3471 = vmatpush1.xpose.msra.mxu0 0.0
    %3472 = vmatprep.subr.mxu0 0.0
    %3473 = vmatpush1.xpose.msra.mxu0 0.0
    %3474 = vmatprep.subr.mxu0 0.0
    %3475 = vmatpush1.xpose.msra.mxu0 0.0
    %3476 = vmatprep.subr.mxu0 0.0
    %3477 = vmatpush1.xpose.msra.mxu0 0.0
    %3478 = vmatprep.subr.mxu0 0.0
    %3479 = vmatpush1.xpose.msra.mxu0 0.0
    %3480 = vmatprep.subr.mxu0 0.0
    %3481 = vmatpush1.xpose.msra.mxu0 0.0
    %3482 = vmatprep.subr.mxu0 0.0
    %3483 = vmatpush1.xpose.msra.mxu0 0.0
    %3484 = vmatprep.subr.mxu0 0.0
    %3485 = vmatpush1.xpose.msra.mxu0 0.0
    %3486 = vmatprep.subr.mxu0 0.0
    %3487 = vmatpush1.xpose.msra.mxu0 0.0
    %3488 = vmatprep.subr.mxu0 0.0
    %3489 = vmatpush1.xpose.msra.mxu0 0.0
    %3490 = vmatprep.subr.mxu0 0.0
    %3491 = vmatpush1.xpose.msra.mxu0 0.0
    %3492 = vmatprep.subr.mxu0 0.0
    %3493 = vmatpush1.xpose.msra.mxu0 0.0
    %3494 = vmatprep.subr.mxu0 0.0
    %3495 = vmatpush1.xpose.msra.mxu0 0.0
    %3496 = vmatprep.mubr.f32.mxu0 0.0
    %3497 = vmatmul.mubr.f32.gmra.mrb[0].mxu0 %v3426
    %v3498 = vpop.f32.mrb[0].mxu0
    %v3499 = vadd.f32 %v127, %v3498
    %v3500 = vpop.f32.mrb[0].mxu0
    %3501 = vdwg.mxu0
    %v3502 = vsel %vm414, %v2939, 0
    %v3504 = vsel %vm414, %v2967, 0
    %v3506 = vsel %vm414, %v2969, 0
    %3508 = vmatprep.subr.mxu0 0.0
    %3509 = vmatpush1.xpose.msra.mxu0 %v3504
    %3510 = vmatprep.subr.mxu0 0.0
    %3511 = vmatpush1.xpose.msra.mxu0 %v3506
    %3512 = vmatprep.subr.mxu0 0.0
    %3513 = vmatpush1.xpose.msra.mxu0 0.0
    %3514 = vmatprep.subr.mxu0 0.0
    %3515 = vmatpush1.xpose.msra.mxu0 0.0
    %3516 = vmatprep.subr.mxu0 0.0
    %3517 = vmatpush1.xpose.msra.mxu0 0.0
    %3518 = vmatprep.subr.mxu0 0.0
    %3519 = vmatpush1.xpose.msra.mxu0 0.0
    %3520 = vmatprep.subr.mxu0 0.0
    %3521 = vmatpush1.xpose.msra.mxu0 0.0
    %3522 = vmatprep.subr.mxu0 0.0
    %3523 = vmatpush1.xpose.msra.mxu0 0.0
    %3524 = vmatprep.subr.mxu0 0.0
    %3525 = vmatpush1.xpose.msra.mxu0 0.0
    %3526 = vmatprep.subr.mxu0 0.0
    %3527 = vmatpush1.xpose.msra.mxu0 0.0
    %3528 = vmatprep.subr.mxu0 0.0
    %3529 = vmatpush1.xpose.msra.mxu0 0.0
    %3530 = vmatprep.subr.mxu0 0.0
    %3531 = vmatpush1.xpose.msra.mxu0 0.0
    %3532 = vmatprep.subr.mxu0 0.0
    %3533 = vmatpush1.xpose.msra.mxu0 0.0
    %3534 = vmatprep.subr.mxu0 0.0
    %3535 = vmatpush1.xpose.msra.mxu0 0.0
    %3536 = vmatprep.subr.mxu0 0.0
    %3537 = vmatpush1.xpose.msra.mxu0 0.0
    %3538 = vmatprep.subr.mxu0 0.0
    %3539 = vmatpush1.xpose.msra.mxu0 0.0
    %3540 = vmatprep.subr.mxu0 0.0
    %3541 = vmatpush1.xpose.msra.mxu0 0.0
    %3542 = vmatprep.subr.mxu0 0.0
    %3543 = vmatpush1.xpose.msra.mxu0 0.0
    %3544 = vmatprep.subr.mxu0 0.0
    %3545 = vmatpush1.xpose.msra.mxu0 0.0
    %3546 = vmatprep.subr.mxu0 0.0
    %3547 = vmatpush1.xpose.msra.mxu0 0.0
    %3548 = vmatprep.subr.mxu0 0.0
    %3549 = vmatpush1.xpose.msra.mxu0 0.0
    %3550 = vmatprep.subr.mxu0 0.0
    %3551 = vmatpush1.xpose.msra.mxu0 0.0
    %3552 = vmatprep.subr.mxu0 0.0
    %3553 = vmatpush1.xpose.msra.mxu0 0.0
    %3554 = vmatprep.subr.mxu0 0.0
    %3555 = vmatpush1.xpose.msra.mxu0 0.0
    %3556 = vmatprep.subr.mxu0 0.0
    %3557 = vmatpush1.xpose.msra.mxu0 0.0
    %3558 = vmatprep.subr.mxu0 0.0
    %3559 = vmatpush1.xpose.msra.mxu0 0.0
    %3560 = vmatprep.subr.mxu0 0.0
    %3561 = vmatpush1.xpose.msra.mxu0 0.0
    %3562 = vmatprep.subr.mxu0 0.0
    %3563 = vmatpush1.xpose.msra.mxu0 0.0
    %3564 = vmatprep.subr.mxu0 0.0
    %3565 = vmatpush1.xpose.msra.mxu0 0.0
    %3566 = vmatprep.subr.mxu0 0.0
    %3567 = vmatpush1.xpose.msra.mxu0 0.0
    %3568 = vmatprep.subr.mxu0 0.0
    %3569 = vmatpush1.xpose.msra.mxu0 0.0
    %3570 = vmatprep.subr.mxu0 0.0
    %3571 = vmatpush1.xpose.msra.mxu0 0.0
    %3572 = vmatprep.mubr.f32.mxu0 0.0
    %3573 = vmatmul.mubr.f32.gmra.mrb[0].mxu0 %v3502
    %v3574 = vpop.f32.mrb[0].mxu0
    %v3575 = vadd.f32 %v128, %v3574
    %v3576 = vpop.f32.mrb[0].mxu0
    %3577 = vdwg.mxu0
    %vm3578 = vcmask 97280
    %v3579 = vsel %vm3578, %v3043, -inf
    %3580 = vmax.xlane.f32.xlu0 %v3579
    %v3581 = vpop.xlane.xlu0 %3580
    %v3582 = vsel %vm3578, %v3119, -inf
    %3583 = vmax.xlane.f32.xlu0 %v3582
    %v3584 = vpop.xlane.xlu0 %3583
    %v3585 = vsel %vm3578, %v3195, -inf
    %3586 = vmax.xlane.f32.xlu0 %v3585
    %v3587 = vpop.xlane.xlu0 %3586
    %v3588 = vsel %vm3578, %v3271, -inf
    %3589 = vmax.xlane.f32.xlu0 %v3588
    %v3590 = vpop.xlane.xlu0 %3589
    %v3591 = vsel %vm3578, %v3347, -inf
    %3592 = vmax.xlane.f32.xlu0 %v3591
    %v3593 = vpop.xlane.xlu0 %3592
    %v3594 = vsel %vm3578, %v3423, -inf
    %3595 = vmax.xlane.f32.xlu0 %v3594
    %v3596 = vpop.xlane.xlu0 %3595
    %v3597 = vsel %vm3578, %v3499, -inf
    %3598 = vmax.xlane.f32.xlu0 %v3597
    %v3599 = vpop.xlane.xlu0 %3598
    %v3600 = vsel %vm3578, %v3575, -inf
    %3601 = vmax.xlane.f32.xlu0 %v3600
    %v3602 = vpop.xlane.xlu0 %3601
    %v3603 = vsub.f32 %v3043, %v3581
    %v3604 = vsub.f32 %v3119, %v3584
    %v3605 = vsub.f32 %v3195, %v3587
    %v3606 = vsub.f32 %v3271, %v3590
    %v3607 = vsub.f32 %v3347, %v3593
    %v3608 = vsub.f32 %v3423, %v3596
    %v3609 = vsub.f32 %v3499, %v3599
    %v3610 = vsub.f32 %v3575, %v3602
    %v3611 = vmul.f32 %v3603, 1.442695
    %v3612 = vpow.pop %v3611
    %v3613 = vmul.f32 %v3604, 1.442695
    %v3614 = vpow.pop %v3613
    %v3615 = vmul.f32 %v3605, 1.442695
    %v3616 = vpow.pop %v3615
    %v3617 = vmul.f32 %v3606, 1.442695
    %v3618 = vpow.pop %v3617
    %v3619 = vmul.f32 %v3607, 1.442695
    %v3620 = vpow.pop %v3619
    %v3621 = vmul.f32 %v3608, 1.442695
    %v3622 = vpow.pop %v3621
    %v3623 = vmul.f32 %v3609, 1.442695
    %v3624 = vpow.pop %v3623
    %v3625 = vmul.f32 %v3610, 1.442695
    %v3626 = vpow.pop %v3625
    %v3627 = vsel %vm3578, %v3612, 0.0
    %3628 = vadd.xlane.f32.xlu0 %v3627
    %v3629 = vpop.xlane.xlu0 %3628
    %v3630 = vsel %vm3578, %v3614, 0.0
    %3631 = vadd.xlane.f32.xlu0 %v3630
    %v3632 = vpop.xlane.xlu0 %3631
    %v3633 = vsel %vm3578, %v3616, 0.0
    %3634 = vadd.xlane.f32.xlu0 %v3633
    %v3635 = vpop.xlane.xlu0 %3634
    %v3636 = vsel %vm3578, %v3618, 0.0
    %3637 = vadd.xlane.f32.xlu0 %v3636
    %v3638 = vpop.xlane.xlu0 %3637
    %v3639 = vsel %vm3578, %v3620, 0.0
    %3640 = vadd.xlane.f32.xlu0 %v3639
    %v3641 = vpop.xlane.xlu0 %3640
    %v3642 = vsel %vm3578, %v3622, 0.0
    %3643 = vadd.xlane.f32.xlu0 %v3642
    %v3644 = vpop.xlane.xlu0 %3643
    %v3645 = vsel %vm3578, %v3624, 0.0
    %3646 = vadd.xlane.f32.xlu0 %v3645
    %v3647 = vpop.xlane.xlu0 %3646
    %v3648 = vsel %vm3578, %v3626, 0.0
    %3649 = vadd.xlane.f32.xlu0 %v3648
    %v3650 = vpop.xlane.xlu0 %3649
    %v3651 = vrcp.pop %v3629
    %v3652 = vmul.f32 %v3612, %v3651
    %v3653 = vrcp.pop %v3632
    %v3654 = vmul.f32 %v3614, %v3653
    %v3655 = vrcp.pop %v3635
    %v3656 = vmul.f32 %v3616, %v3655
    %v3657 = vrcp.pop %v3638
    %v3658 = vmul.f32 %v3618, %v3657
    %v3659 = vrcp.pop %v3641
    %v3660 = vmul.f32 %v3620, %v3659
    %v3661 = vrcp.pop %v3644
    %v3662 = vmul.f32 %v3622, %v3661
    %v3663 = vrcp.pop %v3647
    %v3664 = vmul.f32 %v3624, %v3663
    %v3665 = vrcp.pop %v3650
    %v3666 = vmul.f32 %v3626, %v3665
    %3667 = vrot.lane.b32.xlu0 %v2913, 96
    %v3668 = vpop.permute.xlu0 %3667
    %3669 = vrot.lane.b32.xlu0 %v2918, 96
    %v3670 = vpop.permute.xlu0 %3669
    %v3673 = vsel %vm3578, %v3652, 0
    %v3675 = vsel %vm1210, %v3670, 0
    %3677 = vmatprep.subr.mxu0 0.0
    %3678 = vmatpush1.msra.mxu0 %v3668
    %3679 = vmatprep.subr.mxu0 0.0
    %3680 = vmatpush1.msra.mxu0 %v3675
    %3681 = vmatprep.subr.mxu0 0.0
    %3682 = vmatpush1.msra.mxu0 0.0
    %3683 = vmatprep.subr.mxu0 0.0
    %3684 = vmatpush1.msra.mxu0 0.0
    %3685 = vmatprep.subr.mxu0 0.0
    %3686 = vmatpush1.msra.mxu0 0.0
    %3687 = vmatprep.subr.mxu0 0.0
    %3688 = vmatpush1.msra.mxu0 0.0
    %3689 = vmatprep.subr.mxu0 0.0
    %3690 = vmatpush1.msra.mxu0 0.0
    %3691 = vmatprep.subr.mxu0 0.0
    %3692 = vmatpush1.msra.mxu0 0.0
    %3693 = vmatprep.subr.mxu0 0.0
    %3694 = vmatpush1.msra.mxu0 0.0
    %3695 = vmatprep.subr.mxu0 0.0
    %3696 = vmatpush1.msra.mxu0 0.0
    %3697 = vmatprep.subr.mxu0 0.0
    %3698 = vmatpush1.msra.mxu0 0.0
    %3699 = vmatprep.subr.mxu0 0.0
    %3700 = vmatpush1.msra.mxu0 0.0
    %3701 = vmatprep.subr.mxu0 0.0
    %3702 = vmatpush1.msra.mxu0 0.0
    %3703 = vmatprep.subr.mxu0 0.0
    %3704 = vmatpush1.msra.mxu0 0.0
    %3705 = vmatprep.subr.mxu0 0.0
    %3706 = vmatpush1.msra.mxu0 0.0
    %3707 = vmatprep.subr.mxu0 0.0
    %3708 = vmatpush1.msra.mxu0 0.0
    %3709 = vmatprep.subr.mxu0 0.0
    %3710 = vmatpush1.msra.mxu0 0.0
    %3711 = vmatprep.subr.mxu0 0.0
    %3712 = vmatpush1.msra.mxu0 0.0
    %3713 = vmatprep.subr.mxu0 0.0
    %3714 = vmatpush1.msra.mxu0 0.0
    %3715 = vmatprep.subr.mxu0 0.0
    %3716 = vmatpush1.msra.mxu0 0.0
    %3717 = vmatprep.subr.mxu0 0.0
    %3718 = vmatpush1.msra.mxu0 0.0
    %3719 = vmatprep.subr.mxu0 0.0
    %3720 = vmatpush1.msra.mxu0 0.0
    %3721 = vmatprep.subr.mxu0 0.0
    %3722 = vmatpush1.msra.mxu0 0.0
    %3723 = vmatprep.subr.mxu0 0.0
    %3724 = vmatpush1.msra.mxu0 0.0
    %3725 = vmatprep.subr.mxu0 0.0
    %3726 = vmatpush1.msra.mxu0 0.0
    %3727 = vmatprep.subr.mxu0 0.0
    %3728 = vmatpush1.msra.mxu0 0.0
    %3729 = vmatprep.subr.mxu0 0.0
    %3730 = vmatpush1.msra.mxu0 0.0
    %3731 = vmatprep.subr.mxu0 0.0
    %3732 = vmatpush1.msra.mxu0 0.0
    %3733 = vmatprep.subr.mxu0 0.0
    %3734 = vmatpush1.msra.mxu0 0.0
    %3735 = vmatprep.subr.mxu0 0.0
    %3736 = vmatpush1.msra.mxu0 0.0
    %3737 = vmatprep.subr.mxu0 0.0
    %3738 = vmatpush1.msra.mxu0 0.0
    %3739 = vmatprep.subr.mxu0 0.0
    %3740 = vmatpush1.msra.mxu0 0.0
    %3741 = vmatprep.mubr.f32.mxu0 0.0
    %3742 = vmatmul.mubr.f32.gmra.mrb[0].mxu0 %v3673
    %v3743 = vpop.f32.mrb[0].mxu0
    %v3744 = vadd.f32 0.0, %v3743
    %v3745 = vpop.f32.mrb[0].mxu0
    %3746 = vdwg.mxu0
    %3747 = vrot.lane.b32.xlu0 %v2943, 96
    %v3748 = vpop.permute.xlu0 %3747
    %3749 = vrot.lane.b32.xlu0 %v2945, 96
    %v3750 = vpop.permute.xlu0 %3749
    %v3753 = vsel %vm3578, %v3654, 0
    %v3755 = vsel %vm1210, %v3750, 0
    %3757 = vmatprep.subr.mxu0 0.0
    %3758 = vmatpush1.msra.mxu0 %v3748
    %3759 = vmatprep.subr.mxu0 0.0
    %3760 = vmatpush1.msra.mxu0 %v3755
    %3761 = vmatprep.subr.mxu0 0.0
    %3762 = vmatpush1.msra.mxu0 0.0
    %3763 = vmatprep.subr.mxu0 0.0
    %3764 = vmatpush1.msra.mxu0 0.0
    %3765 = vmatprep.subr.mxu0 0.0
    %3766 = vmatpush1.msra.mxu0 0.0
    %3767 = vmatprep.subr.mxu0 0.0
    %3768 = vmatpush1.msra.mxu0 0.0
    %3769 = vmatprep.subr.mxu0 0.0
    %3770 = vmatpush1.msra.mxu0 0.0
    %3771 = vmatprep.subr.mxu0 0.0
    %3772 = vmatpush1.msra.mxu0 0.0
    %3773 = vmatprep.subr.mxu0 0.0
    %3774 = vmatpush1.msra.mxu0 0.0
    %3775 = vmatprep.subr.mxu0 0.0
    %3776 = vmatpush1.msra.mxu0 0.0
    %3777 = vmatprep.subr.mxu0 0.0
    %3778 = vmatpush1.msra.mxu0 0.0
    %3779 = vmatprep.subr.mxu0 0.0
    %3780 = vmatpush1.msra.mxu0 0.0
    %3781 = vmatprep.subr.mxu0 0.0
    %3782 = vmatpush1.msra.mxu0 0.0
    %3783 = vmatprep.subr.mxu0 0.0
    %3784 = vmatpush1.msra.mxu0 0.0
    %3785 = vmatprep.subr.mxu0 0.0
    %3786 = vmatpush1.msra.mxu0 0.0
    %3787 = vmatprep.subr.mxu0 0.0
    %3788 = vmatpush1.msra.mxu0 0.0
    %3789 = vmatprep.subr.mxu0 0.0
    %3790 = vmatpush1.msra.mxu0 0.0
    %3791 = vmatprep.subr.mxu0 0.0
    %3792 = vmatpush1.msra.mxu0 0.0
    %3793 = vmatprep.subr.mxu0 0.0
    %3794 = vmatpush1.msra.mxu0 0.0
    %3795 = vmatprep.subr.mxu0 0.0
    %3796 = vmatpush1.msra.mxu0 0.0
    %3797 = vmatprep.subr.mxu0 0.0
    %3798 = vmatpush1.msra.mxu0 0.0
    %3799 = vmatprep.subr.mxu0 0.0
    %3800 = vmatpush1.msra.mxu0 0.0
    %3801 = vmatprep.subr.mxu0 0.0
    %3802 = vmatpush1.msra.mxu0 0.0
    %3803 = vmatprep.subr.mxu0 0.0
    %3804 = vmatpush1.msra.mxu0 0.0
    %3805 = vmatprep.subr.mxu0 0.0
    %3806 = vmatpush1.msra.mxu0 0.0
    %3807 = vmatprep.subr.mxu0 0.0
    %3808 = vmatpush1.msra.mxu0 0.0
    %3809 = vmatprep.subr.mxu0 0.0
    %3810 = vmatpush1.msra.mxu0 0.0
    %3811 = vmatprep.subr.mxu0 0.0
    %3812 = vmatpush1.msra.mxu0 0.0
    %3813 = vmatprep.subr.mxu0 0.0
    %3814 = vmatpush1.msra.mxu0 0.0
    %3815 = vmatprep.subr.mxu0 0.0
    %3816 = vmatpush1.msra.mxu0 0.0
    %3817 = vmatprep.subr.mxu0 0.0
    %3818 = vmatpush1.msra.mxu0 0.0
    %3819 = vmatprep.subr.mxu0 0.0
    %3820 = vmatpush1.msra.mxu0 0.0
    %3821 = vmatprep.mubr.f32.mxu0 0.0
    %3822 = vmatmul.mubr.f32.gmra.mrb[0].mxu0 %v3753
    %v3823 = vpop.f32.mrb[0].mxu0
    %v3824 = vadd.f32 0.0, %v3823
    %v3825 = vpop.f32.mrb[0].mxu0
    %3826 = vdwg.mxu0
    %3827 = vrot.lane.b32.xlu0 %v2947, 96
    %v3828 = vpop.permute.xlu0 %3827
    %3829 = vrot.lane.b32.xlu0 %v2949, 96
    %v3830 = vpop.permute.xlu0 %3829
    %v3833 = vsel %vm3578, %v3656, 0
    %v3835 = vsel %vm1210, %v3830, 0
    %3837 = vmatprep.subr.mxu0 0.0
    %3838 = vmatpush1.msra.mxu0 %v3828
    %3839 = vmatprep.subr.mxu0 0.0
    %3840 = vmatpush1.msra.mxu0 %v3835
    %3841 = vmatprep.subr.mxu0 0.0
    %3842 = vmatpush1.msra.mxu0 0.0
    %3843 = vmatprep.subr.mxu0 0.0
    %3844 = vmatpush1.msra.mxu0 0.0
    %3845 = vmatprep.subr.mxu0 0.0
    %3846 = vmatpush1.msra.mxu0 0.0
    %3847 = vmatprep.subr.mxu0 0.0
    %3848 = vmatpush1.msra.mxu0 0.0
    %3849 = vmatprep.subr.mxu0 0.0
    %3850 = vmatpush1.msra.mxu0 0.0
    %3851 = vmatprep.subr.mxu0 0.0
    %3852 = vmatpush1.msra.mxu0 0.0
    %3853 = vmatprep.subr.mxu0 0.0
    %3854 = vmatpush1.msra.mxu0 0.0
    %3855 = vmatprep.subr.mxu0 0.0
    %3856 = vmatpush1.msra.mxu0 0.0
    %3857 = vmatprep.subr.mxu0 0.0
    %3858 = vmatpush1.msra.mxu0 0.0
    %3859 = vmatprep.subr.mxu0 0.0
    %3860 = vmatpush1.msra.mxu0 0.0
    %3861 = vmatprep.subr.mxu0 0.0
    %3862 = vmatpush1.msra.mxu0 0.0
    %3863 = vmatprep.subr.mxu0 0.0
    %3864 = vmatpush1.msra.mxu0 0.0
    %3865 = vmatprep.subr.mxu0 0.0
    %3866 = vmatpush1.msra.mxu0 0.0
    %3867 = vmatprep.subr.mxu0 0.0
    %3868 = vmatpush1.msra.mxu0 0.0
    %3869 = vmatprep.subr.mxu0 0.0
    %3870 = vmatpush1.msra.mxu0 0.0
    %3871 = vmatprep.subr.mxu0 0.0
    %3872 = vmatpush1.msra.mxu0 0.0
    %3873 = vmatprep.subr.mxu0 0.0
    %3874 = vmatpush1.msra.mxu0 0.0
    %3875 = vmatprep.subr.mxu0 0.0
    %3876 = vmatpush1.msra.mxu0 0.0
    %3877 = vmatprep.subr.mxu0 0.0
    %3878 = vmatpush1.msra.mxu0 0.0
    %3879 = vmatprep.subr.mxu0 0.0
    %3880 = vmatpush1.msra.mxu0 0.0
    %3881 = vmatprep.subr.mxu0 0.0
    %3882 = vmatpush1.msra.mxu0 0.0
    %3883 = vmatprep.subr.mxu0 0.0
    %3884 = vmatpush1.msra.mxu0 0.0
    %3885 = vmatprep.subr.mxu0 0.0
    %3886 = vmatpush1.msra.mxu0 0.0
    %3887 = vmatprep.subr.mxu0 0.0
    %3888 = vmatpush1.msra.mxu0 0.0
    %3889 = vmatprep.subr.mxu0 0.0
    %3890 = vmatpush1.msra.mxu0 0.0
    %3891 = vmatprep.subr.mxu0 0.0
    %3892 = vmatpush1.msra.mxu0 0.0
    %3893 = vmatprep.subr.mxu0 0.0
    %3894 = vmatpush1.msra.mxu0 0.0
    %3895 = vmatprep.subr.mxu0 0.0
    %3896 = vmatpush1.msra.mxu0 0.0
    %3897 = vmatprep.subr.mxu0 0.0
    %3898 = vmatpush1.msra.mxu0 0.0
    %3899 = vmatprep.subr.mxu0 0.0
    %3900 = vmatpush1.msra.mxu0 0.0
    %3901 = vmatprep.mubr.f32.mxu0 0.0
    %3902 = vmatmul.mubr.f32.gmra.mrb[0].mxu0 %v3833
    %v3903 = vpop.f32.mrb[0].mxu0
    %v3904 = vadd.f32 0.0, %v3903
    %v3905 = vpop.f32.mrb[0].mxu0
    %3906 = vdwg.mxu0
    %3907 = vrot.lane.b32.xlu0 %v2951, 96
    %v3908 = vpop.permute.xlu0 %3907
    %3909 = vrot.lane.b32.xlu0 %v2953, 96
    %v3910 = vpop.permute.xlu0 %3909
    %v3913 = vsel %vm3578, %v3658, 0
    %v3915 = vsel %vm1210, %v3910, 0
    %3917 = vmatprep.subr.mxu0 0.0
    %3918 = vmatpush1.msra.mxu0 %v3908
    %3919 = vmatprep.subr.mxu0 0.0
    %3920 = vmatpush1.msra.mxu0 %v3915
    %3921 = vmatprep.subr.mxu0 0.0
    %3922 = vmatpush1.msra.mxu0 0.0
    %3923 = vmatprep.subr.mxu0 0.0
    %3924 = vmatpush1.msra.mxu0 0.0
    %3925 = vmatprep.subr.mxu0 0.0
    %3926 = vmatpush1.msra.mxu0 0.0
    %3927 = vmatprep.subr.mxu0 0.0
    %3928 = vmatpush1.msra.mxu0 0.0
    %3929 = vmatprep.subr.mxu0 0.0
    %3930 = vmatpush1.msra.mxu0 0.0
    %3931 = vmatprep.subr.mxu0 0.0
    %3932 = vmatpush1.msra.mxu0 0.0
    %3933 = vmatprep.subr.mxu0 0.0
    %3934 = vmatpush1.msra.mxu0 0.0
    %3935 = vmatprep.subr.mxu0 0.0
    %3936 = vmatpush1.msra.mxu0 0.0
    %3937 = vmatprep.subr.mxu0 0.0
    %3938 = vmatpush1.msra.mxu0 0.0
    %3939 = vmatprep.subr.mxu0 0.0
    %3940 = vmatpush1.msra.mxu0 0.0
    %3941 = vmatprep.subr.mxu0 0.0
    %3942 = vmatpush1.msra.mxu0 0.0
    %3943 = vmatprep.subr.mxu0 0.0
    %3944 = vmatpush1.msra.mxu0 0.0
    %3945 = vmatprep.subr.mxu0 0.0
    %3946 = vmatpush1.msra.mxu0 0.0
    %3947 = vmatprep.subr.mxu0 0.0
    %3948 = vmatpush1.msra.mxu0 0.0
    %3949 = vmatprep.subr.mxu0 0.0
    %3950 = vmatpush1.msra.mxu0 0.0
    %3951 = vmatprep.subr.mxu0 0.0
    %3952 = vmatpush1.msra.mxu0 0.0
    %3953 = vmatprep.subr.mxu0 0.0
    %3954 = vmatpush1.msra.mxu0 0.0
    %3955 = vmatprep.subr.mxu0 0.0
    %3956 = vmatpush1.msra.mxu0 0.0
    %3957 = vmatprep.subr.mxu0 0.0
    %3958 = vmatpush1.msra.mxu0 0.0
    %3959 = vmatprep.subr.mxu0 0.0
    %3960 = vmatpush1.msra.mxu0 0.0
    %3961 = vmatprep.subr.mxu0 0.0
    %3962 = vmatpush1.msra.mxu0 0.0
    %3963 = vmatprep.subr.mxu0 0.0
    %3964 = vmatpush1.msra.mxu0 0.0
    %3965 = vmatprep.subr.mxu0 0.0
    %3966 = vmatpush1.msra.mxu0 0.0
    %3967 = vmatprep.subr.mxu0 0.0
    %3968 = vmatpush1.msra.mxu0 0.0
    %3969 = vmatprep.subr.mxu0 0.0
    %3970 = vmatpush1.msra.mxu0 0.0
    %3971 = vmatprep.subr.mxu0 0.0
    %3972 = vmatpush1.msra.mxu0 0.0
    %3973 = vmatprep.subr.mxu0 0.0
    %3974 = vmatpush1.msra.mxu0 0.0
    %3975 = vmatprep.subr.mxu0 0.0
    %3976 = vmatpush1.msra.mxu0 0.0
    %3977 = vmatprep.subr.mxu0 0.0
    %3978 = vmatpush1.msra.mxu0 0.0
    %3979 = vmatprep.subr.mxu0 0.0
    %3980 = vmatpush1.msra.mxu0 0.0
    %3981 = vmatprep.mubr.f32.mxu0 0.0
    %3982 = vmatmul.mubr.f32.gmra.mrb[0].mxu0 %v3913
    %v3983 = vpop.f32.mrb[0].mxu0
    %v3984 = vadd.f32 0.0, %v3983
    %v3985 = vpop.f32.mrb[0].mxu0
    %3986 = vdwg.mxu0
    %3987 = vrot.lane.b32.xlu0 %v2957, 96
    %v3988 = vpop.permute.xlu0 %3987
    %3989 = vrot.lane.b32.xlu0 %v2956, 96
    %v3990 = vpop.permute.xlu0 %3989
    %v3993 = vsel %vm3578, %v3660, 0
    %v3995 = vsel %vm1210, %v3990, 0
    %3997 = vmatprep.subr.mxu0 0.0
    %3998 = vmatpush1.msra.mxu0 %v3988
    %3999 = vmatprep.subr.mxu0 0.0
    %4000 = vmatpush1.msra.mxu0 %v3995
    %4001 = vmatprep.subr.mxu0 0.0
    %4002 = vmatpush1.msra.mxu0 0.0
    %4003 = vmatprep.subr.mxu0 0.0
    %4004 = vmatpush1.msra.mxu0 0.0
    %4005 = vmatprep.subr.mxu0 0.0
    %4006 = vmatpush1.msra.mxu0 0.0
    %4007 = vmatprep.subr.mxu0 0.0
    %4008 = vmatpush1.msra.mxu0 0.0
    %4009 = vmatprep.subr.mxu0 0.0
    %4010 = vmatpush1.msra.mxu0 0.0
    %4011 = vmatprep.subr.mxu0 0.0
    %4012 = vmatpush1.msra.mxu0 0.0
    %4013 = vmatprep.subr.mxu0 0.0
    %4014 = vmatpush1.msra.mxu0 0.0
    %4015 = vmatprep.subr.mxu0 0.0
    %4016 = vmatpush1.msra.mxu0 0.0
    %4017 = vmatprep.subr.mxu0 0.0
    %4018 = vmatpush1.msra.mxu0 0.0
    %4019 = vmatprep.subr.mxu0 0.0
    %4020 = vmatpush1.msra.mxu0 0.0
    %4021 = vmatprep.subr.mxu0 0.0
    %4022 = vmatpush1.msra.mxu0 0.0
    %4023 = vmatprep.subr.mxu0 0.0
    %4024 = vmatpush1.msra.mxu0 0.0
    %4025 = vmatprep.subr.mxu0 0.0
    %4026 = vmatpush1.msra.mxu0 0.0
    %4027 = vmatprep.subr.mxu0 0.0
    %4028 = vmatpush1.msra.mxu0 0.0
    %4029 = vmatprep.subr.mxu0 0.0
    %4030 = vmatpush1.msra.mxu0 0.0
    %4031 = vmatprep.subr.mxu0 0.0
    %4032 = vmatpush1.msra.mxu0 0.0
    %4033 = vmatprep.subr.mxu0 0.0
    %4034 = vmatpush1.msra.mxu0 0.0
    %4035 = vmatprep.subr.mxu0 0.0
    %4036 = vmatpush1.msra.mxu0 0.0
    %4037 = vmatprep.subr.mxu0 0.0
    %4038 = vmatpush1.msra.mxu0 0.0
    %4039 = vmatprep.subr.mxu0 0.0
    %4040 = vmatpush1.msra.mxu0 0.0
    %4041 = vmatprep.subr.mxu0 0.0
    %4042 = vmatpush1.msra.mxu0 0.0
    %4043 = vmatprep.subr.mxu0 0.0
    %4044 = vmatpush1.msra.mxu0 0.0
    %4045 = vmatprep.subr.mxu0 0.0
    %4046 = vmatpush1.msra.mxu0 0.0
    %4047 = vmatprep.subr.mxu0 0.0
    %4048 = vmatpush1.msra.mxu0 0.0
    %4049 = vmatprep.subr.mxu0 0.0
    %4050 = vmatpush1.msra.mxu0 0.0
    %4051 = vmatprep.subr.mxu0 0.0
    %4052 = vmatpush1.msra.mxu0 0.0
    %4053 = vmatprep.subr.mxu0 0.0
    %4054 = vmatpush1.msra.mxu0 0.0
    %4055 = vmatprep.subr.mxu0 0.0
    %4056 = vmatpush1.msra.mxu0 0.0
    %4057 = vmatprep.subr.mxu0 0.0
    %4058 = vmatpush1.msra.mxu0 0.0
    %4059 = vmatprep.subr.mxu0 0.0
    %4060 = vmatpush1.msra.mxu0 0.0
    %4061 = vmatprep.mubr.f32.mxu0 0.0
    %4062 = vmatmul.mubr.f32.gmra.mrb[0].mxu0 %v3993
    %v4063 = vpop.f32.mrb[0].mxu0
    %v4064 = vadd.f32 0.0, %v4063
    %v4065 = vpop.f32.mrb[0].mxu0
    %4066 = vdwg.mxu0
    %4067 = vrot.lane.b32.xlu0 %v2959, 96
    %v4068 = vpop.permute.xlu0 %4067
    %4069 = vrot.lane.b32.xlu0 %v2961, 96
    %v4070 = vpop.permute.xlu0 %4069
    %v4073 = vsel %vm3578, %v3662, 0
    %v4075 = vsel %vm1210, %v4070, 0
    %4077 = vmatprep.subr.mxu0 0.0
    %4078 = vmatpush1.msra.mxu0 %v4068
    %4079 = vmatprep.subr.mxu0 0.0
    %4080 = vmatpush1.msra.mxu0 %v4075
    %4081 = vmatprep.subr.mxu0 0.0
    %4082 = vmatpush1.msra.mxu0 0.0
    %4083 = vmatprep.subr.mxu0 0.0
    %4084 = vmatpush1.msra.mxu0 0.0
    %4085 = vmatprep.subr.mxu0 0.0
    %4086 = vmatpush1.msra.mxu0 0.0
    %4087 = vmatprep.subr.mxu0 0.0
    %4088 = vmatpush1.msra.mxu0 0.0
    %4089 = vmatprep.subr.mxu0 0.0
    %4090 = vmatpush1.msra.mxu0 0.0
    %4091 = vmatprep.subr.mxu0 0.0
    %4092 = vmatpush1.msra.mxu0 0.0
    %4093 = vmatprep.subr.mxu0 0.0
    %4094 = vmatpush1.msra.mxu0 0.0
    %4095 = vmatprep.subr.mxu0 0.0
    %4096 = vmatpush1.msra.mxu0 0.0
    %4097 = vmatprep.subr.mxu0 0.0
    %4098 = vmatpush1.msra.mxu0 0.0
    %4099 = vmatprep.subr.mxu0 0.0
    %4100 = vmatpush1.msra.mxu0 0.0
    %4101 = vmatprep.subr.mxu0 0.0
    %4102 = vmatpush1.msra.mxu0 0.0
    %4103 = vmatprep.subr.mxu0 0.0
    %4104 = vmatpush1.msra.mxu0 0.0
    %4105 = vmatprep.subr.mxu0 0.0
    %4106 = vmatpush1.msra.mxu0 0.0
    %4107 = vmatprep.subr.mxu0 0.0
    %4108 = vmatpush1.msra.mxu0 0.0
    %4109 = vmatprep.subr.mxu0 0.0
    %4110 = vmatpush1.msra.mxu0 0.0
    %4111 = vmatprep.subr.mxu0 0.0
    %4112 = vmatpush1.msra.mxu0 0.0
    %4113 = vmatprep.subr.mxu0 0.0
    %4114 = vmatpush1.msra.mxu0 0.0
    %4115 = vmatprep.subr.mxu0 0.0
    %4116 = vmatpush1.msra.mxu0 0.0
    %4117 = vmatprep.subr.mxu0 0.0
    %4118 = vmatpush1.msra.mxu0 0.0
    %4119 = vmatprep.subr.mxu0 0.0
    %4120 = vmatpush1.msra.mxu0 0.0
    %4121 = vmatprep.subr.mxu0 0.0
    %4122 = vmatpush1.msra.mxu0 0.0
    %4123 = vmatprep.subr.mxu0 0.0
    %4124 = vmatpush1.msra.mxu0 0.0
    %4125 = vmatprep.subr.mxu0 0.0
    %4126 = vmatpush1.msra.mxu0 0.0
    %4127 = vmatprep.subr.mxu0 0.0
    %4128 = vmatpush1.msra.mxu0 0.0
    %4129 = vmatprep.subr.mxu0 0.0
    %4130 = vmatpush1.msra.mxu0 0.0
    %4131 = vmatprep.subr.mxu0 0.0
    %4132 = vmatpush1.msra.mxu0 0.0
    %4133 = vmatprep.subr.mxu0 0.0
    %4134 = vmatpush1.msra.mxu0 0.0
    %4135 = vmatprep.subr.mxu0 0.0
    %4136 = vmatpush1.msra.mxu0 0.0
    %4137 = vmatprep.subr.mxu0 0.0
    %4138 = vmatpush1.msra.mxu0 0.0
    %4139 = vmatprep.subr.mxu0 0.0
    %4140 = vmatpush1.msra.mxu0 0.0
    %4141 = vmatprep.mubr.f32.mxu0 0.0
    %4142 = vmatmul.mubr.f32.gmra.mrb[0].mxu0 %v4073
    %v4143 = vpop.f32.mrb[0].mxu0
    %v4144 = vadd.f32 0.0, %v4143
    %v4145 = vpop.f32.mrb[0].mxu0
    %4146 = vdwg.mxu0
    %4147 = vrot.lane.b32.xlu0 %v2963, 96
    %v4148 = vpop.permute.xlu0 %4147
    %4149 = vrot.lane.b32.xlu0 %v2965, 96
    %v4150 = vpop.permute.xlu0 %4149
    %v4153 = vsel %vm3578, %v3664, 0
    %v4155 = vsel %vm1210, %v4150, 0
    %4157 = vmatprep.subr.mxu0 0.0
    %4158 = vmatpush1.msra.mxu0 %v4148
    %4159 = vmatprep.subr.mxu0 0.0
    %4160 = vmatpush1.msra.mxu0 %v4155
    %4161 = vmatprep.subr.mxu0 0.0
    %4162 = vmatpush1.msra.mxu0 0.0
    %4163 = vmatprep.subr.mxu0 0.0
    %4164 = vmatpush1.msra.mxu0 0.0
    %4165 = vmatprep.subr.mxu0 0.0
    %4166 = vmatpush1.msra.mxu0 0.0
    %4167 = vmatprep.subr.mxu0 0.0
    %4168 = vmatpush1.msra.mxu0 0.0
    %4169 = vmatprep.subr.mxu0 0.0
    %4170 = vmatpush1.msra.mxu0 0.0
    %4171 = vmatprep.subr.mxu0 0.0
    %4172 = vmatpush1.msra.mxu0 0.0
    %4173 = vmatprep.subr.mxu0 0.0
    %4174 = vmatpush1.msra.mxu0 0.0
    %4175 = vmatprep.subr.mxu0 0.0
    %4176 = vmatpush1.msra.mxu0 0.0
    %4177 = vmatprep.subr.mxu0 0.0
    %4178 = vmatpush1.msra.mxu0 0.0
    %4179 = vmatprep.subr.mxu0 0.0
    %4180 = vmatpush1.msra.mxu0 0.0
    %4181 = vmatprep.subr.mxu0 0.0
    %4182 = vmatpush1.msra.mxu0 0.0
    %4183 = vmatprep.subr.mxu0 0.0
    %4184 = vmatpush1.msra.mxu0 0.0
    %4185 = vmatprep.subr.mxu0 0.0
    %4186 = vmatpush1.msra.mxu0 0.0
    %4187 = vmatprep.subr.mxu0 0.0
    %4188 = vmatpush1.msra.mxu0 0.0
    %4189 = vmatprep.subr.mxu0 0.0
    %4190 = vmatpush1.msra.mxu0 0.0
    %4191 = vmatprep.subr.mxu0 0.0
    %4192 = vmatpush1.msra.mxu0 0.0
    %4193 = vmatprep.subr.mxu0 0.0
    %4194 = vmatpush1.msra.mxu0 0.0
    %4195 = vmatprep.subr.mxu0 0.0
    %4196 = vmatpush1.msra.mxu0 0.0
    %4197 = vmatprep.subr.mxu0 0.0
    %4198 = vmatpush1.msra.mxu0 0.0
    %4199 = vmatprep.subr.mxu0 0.0
    %4200 = vmatpush1.msra.mxu0 0.0
    %4201 = vmatprep.subr.mxu0 0.0
    %4202 = vmatpush1.msra.mxu0 0.0
    %4203 = vmatprep.subr.mxu0 0.0
    %4204 = vmatpush1.msra.mxu0 0.0
    %4205 = vmatprep.subr.mxu0 0.0
    %4206 = vmatpush1.msra.mxu0 0.0
    %4207 = vmatprep.subr.mxu0 0.0
    %4208 = vmatpush1.msra.mxu0 0.0
    %4209 = vmatprep.subr.mxu0 0.0
    %4210 = vmatpush1.msra.mxu0 0.0
    %4211 = vmatprep.subr.mxu0 0.0
    %4212 = vmatpush1.msra.mxu0 0.0
    %4213 = vmatprep.subr.mxu0 0.0
    %4214 = vmatpush1.msra.mxu0 0.0
    %4215 = vmatprep.subr.mxu0 0.0
    %4216 = vmatpush1.msra.mxu0 0.0
    %4217 = vmatprep.subr.mxu0 0.0
    %4218 = vmatpush1.msra.mxu0 0.0
    %4219 = vmatprep.subr.mxu0 0.0
    %4220 = vmatpush1.msra.mxu0 0.0
    %4221 = vmatprep.mubr.f32.mxu0 0.0
    %4222 = vmatmul.mubr.f32.gmra.mrb[0].mxu0 %v4153
    %v4223 = vpop.f32.mrb[0].mxu0
    %v4224 = vadd.f32 0.0, %v4223
    %v4225 = vpop.f32.mrb[0].mxu0
    %4226 = vdwg.mxu0
    %4227 = vrot.lane.b32.xlu0 %v2967, 96
    %v4228 = vpop.permute.xlu0 %4227
    %4229 = vrot.lane.b32.xlu0 %v2969, 96
    %v4230 = vpop.permute.xlu0 %4229
    %v4233 = vsel %vm3578, %v3666, 0
    %v4235 = vsel %vm1210, %v4230, 0
    %4237 = vmatprep.subr.mxu0 0.0
    %4238 = vmatpush1.msra.mxu0 %v4228
    %4239 = vmatprep.subr.mxu0 0.0
    %4240 = vmatpush1.msra.mxu0 %v4235
    %4241 = vmatprep.subr.mxu0 0.0
    %4242 = vmatpush1.msra.mxu0 0.0
    %4243 = vmatprep.subr.mxu0 0.0
    %4244 = vmatpush1.msra.mxu0 0.0
    %4245 = vmatprep.subr.mxu0 0.0
    %4246 = vmatpush1.msra.mxu0 0.0
    %4247 = vmatprep.subr.mxu0 0.0
    %4248 = vmatpush1.msra.mxu0 0.0
    %4249 = vmatprep.subr.mxu0 0.0
    %4250 = vmatpush1.msra.mxu0 0.0
    %4251 = vmatprep.subr.mxu0 0.0
    %4252 = vmatpush1.msra.mxu0 0.0
    %4253 = vmatprep.subr.mxu0 0.0
    %4254 = vmatpush1.msra.mxu0 0.0
    %4255 = vmatprep.subr.mxu0 0.0
    %4256 = vmatpush1.msra.mxu0 0.0
    %4257 = vmatprep.subr.mxu0 0.0
    %4258 = vmatpush1.msra.mxu0 0.0
    %4259 = vmatprep.subr.mxu0 0.0
    %4260 = vmatpush1.msra.mxu0 0.0
    %4261 = vmatprep.subr.mxu0 0.0
    %4262 = vmatpush1.msra.mxu0 0.0
    %4263 = vmatprep.subr.mxu0 0.0
    %4264 = vmatpush1.msra.mxu0 0.0
    %4265 = vmatprep.subr.mxu0 0.0
    %4266 = vmatpush1.msra.mxu0 0.0
    %4267 = vmatprep.subr.mxu0 0.0
    %4268 = vmatpush1.msra.mxu0 0.0
    %4269 = vmatprep.subr.mxu0 0.0
    %4270 = vmatpush1.msra.mxu0 0.0
    %4271 = vmatprep.subr.mxu0 0.0
    %4272 = vmatpush1.msra.mxu0 0.0
    %4273 = vmatprep.subr.mxu0 0.0
    %4274 = vmatpush1.msra.mxu0 0.0
    %4275 = vmatprep.subr.mxu0 0.0
    %4276 = vmatpush1.msra.mxu0 0.0
    %4277 = vmatprep.subr.mxu0 0.0
    %4278 = vmatpush1.msra.mxu0 0.0
    %4279 = vmatprep.subr.mxu0 0.0
    %4280 = vmatpush1.msra.mxu0 0.0
    %4281 = vmatprep.subr.mxu0 0.0
    %4282 = vmatpush1.msra.mxu0 0.0
    %4283 = vmatprep.subr.mxu0 0.0
    %4284 = vmatpush1.msra.mxu0 0.0
    %4285 = vmatprep.subr.mxu0 0.0
    %4286 = vmatpush1.msra.mxu0 0.0
    %4287 = vmatprep.subr.mxu0 0.0
    %4288 = vmatpush1.msra.mxu0 0.0
    %4289 = vmatprep.subr.mxu0 0.0
    %4290 = vmatpush1.msra.mxu0 0.0
    %4291 = vmatprep.subr.mxu0 0.0
    %4292 = vmatpush1.msra.mxu0 0.0
    %4293 = vmatprep.subr.mxu0 0.0
    %4294 = vmatpush1.msra.mxu0 0.0
    %4295 = vmatprep.subr.mxu0 0.0
    %4296 = vmatpush1.msra.mxu0 0.0
    %4297 = vmatprep.subr.mxu0 0.0
    %4298 = vmatpush1.msra.mxu0 0.0
    %4299 = vmatprep.subr.mxu0 0.0
    %4300 = vmatpush1.msra.mxu0 0.0
    %4301 = vmatprep.mubr.f32.mxu0 0.0
    %4302 = vmatmul.mubr.f32.gmra.mrb[0].mxu0 %v4233
    %v4303 = vpop.f32.mrb[0].mxu0
    %v4304 = vadd.f32 0.0, %v4303
    %v4305 = vpop.f32.mrb[0].mxu0
    %4306 = vdwg.mxu0
    %4308 = vrot.lane.b32.xlu0 %v3824, 8
    %v4309 = vpop.permute.xlu0 %4308
    %4312 = vrot.lane.b32.xlu0 %v3904, 16
    %v4313 = vpop.permute.xlu0 %4312
    %4316 = vrot.lane.b32.xlu0 %v3984, 24
    %v4317 = vpop.permute.xlu0 %4316
    %v4319 = vsel %vm414, %v3744, %v4309
    %v4320 = vsel %vm2603, %v4319, %v4313
    %v4321 = vsel %vm2605, %v4320, %v4317
    %4323 = vrot.lane.b32.xlu0 %v4144, 8
    %v4324 = vpop.permute.xlu0 %4323
    %4327 = vrot.lane.b32.xlu0 %v4224, 16
    %v4328 = vpop.permute.xlu0 %4327
    %4331 = vrot.lane.b32.xlu0 %v4304, 24
    %v4332 = vpop.permute.xlu0 %4331
    %v4334 = vsel %vm414, %v4064, %v4324
    %v4335 = vsel %vm2603, %v4334, %v4328
    %v4336 = vsel %vm2605, %v4335, %v4332
    %v4337 = vlaneseq
    %v4338 = vshrl.u32 %v4337, 7
    %v4339 = vsub.s32 0, %v4338
    %v4340 = vrot.slane %v168, %v4339
    %v4342 = vsel %vm183, %v4321, 0
    %v4345 = vsel %vm183, %v4336, 0
    %4347 = vmatprep.subr.mxu0 0.0
    %4348 = vmatpush1.msra.mxu0 %v145
    %4349 = vmatprep.subr.mxu0 0.0
    %4350 = vmatpush1.msra.mxu0 %v146
    %4351 = vmatprep.subr.mxu0 0.0
    %4352 = vmatpush1.msra.mxu0 %v147
    %4353 = vmatprep.subr.mxu0 0.0
    %4354 = vmatpush1.msra.mxu0 %v148
    %4355 = vmatprep.subr.mxu0 0.0
    %4356 = vmatpush1.msra.mxu0 0.0
    %4357 = vmatprep.subr.mxu0 0.0
    %4358 = vmatpush1.msra.mxu0 0.0
    %4359 = vmatprep.subr.mxu0 0.0
    %4360 = vmatpush1.msra.mxu0 0.0
    %4361 = vmatprep.subr.mxu0 0.0
    %4362 = vmatpush1.msra.mxu0 0.0
    %4363 = vmatprep.subr.mxu0 0.0
    %4364 = vmatpush1.msra.mxu0 0.0
    %4365 = vmatprep.subr.mxu0 0.0
    %4366 = vmatpush1.msra.mxu0 0.0
    %4367 = vmatprep.subr.mxu0 0.0
    %4368 = vmatpush1.msra.mxu0 0.0
    %4369 = vmatprep.subr.mxu0 0.0
    %4370 = vmatpush1.msra.mxu0 0.0
    %4371 = vmatprep.subr.mxu0 0.0
    %4372 = vmatpush1.msra.mxu0 0.0
    %4373 = vmatprep.subr.mxu0 0.0
    %4374 = vmatpush1.msra.mxu0 0.0
    %4375 = vmatprep.subr.mxu0 0.0
    %4376 = vmatpush1.msra.mxu0 0.0
    %4377 = vmatprep.subr.mxu0 0.0
    %4378 = vmatpush1.msra.mxu0 0.0
    %4379 = vmatprep.subr.mxu0 0.0
    %4380 = vmatpush1.msra.mxu0 0.0
    %4381 = vmatprep.subr.mxu0 0.0
    %4382 = vmatpush1.msra.mxu0 0.0
    %4383 = vmatprep.subr.mxu0 0.0
    %4384 = vmatpush1.msra.mxu0 0.0
    %4385 = vmatprep.subr.mxu0 0.0
    %4386 = vmatpush1.msra.mxu0 0.0
    %4387 = vmatprep.subr.mxu0 0.0
    %4388 = vmatpush1.msra.mxu0 0.0
    %4389 = vmatprep.subr.mxu0 0.0
    %4390 = vmatpush1.msra.mxu0 0.0
    %4391 = vmatprep.subr.mxu0 0.0
    %4392 = vmatpush1.msra.mxu0 0.0
    %4393 = vmatprep.subr.mxu0 0.0
    %4394 = vmatpush1.msra.mxu0 0.0
    %4395 = vmatprep.subr.mxu0 0.0
    %4396 = vmatpush1.msra.mxu0 0.0
    %4397 = vmatprep.subr.mxu0 0.0
    %4398 = vmatpush1.msra.mxu0 0.0
    %4399 = vmatprep.subr.mxu0 0.0
    %4400 = vmatpush1.msra.mxu0 0.0
    %4401 = vmatprep.subr.mxu0 0.0
    %4402 = vmatpush1.msra.mxu0 0.0
    %4403 = vmatprep.subr.mxu0 0.0
    %4404 = vmatpush1.msra.mxu0 0.0
    %4405 = vmatprep.subr.mxu0 0.0
    %4406 = vmatpush1.msra.mxu0 0.0
    %4407 = vmatprep.subr.mxu0 0.0
    %4408 = vmatpush1.msra.mxu0 0.0
    %4409 = vmatprep.subr.mxu0 0.0
    %4410 = vmatpush1.msra.mxu0 0.0
    %4411 = vmatprep.mubr.f32.mxu0 0.0
    %4412 = vmatmul.mubr.f32.gmra.mrb[0].mxu0 %v4342
    %v4413 = vpop.f32.mrb[0].mxu0
    %v4414 = vadd.f32 %v4340, %v4413
    %v4415 = vpop.f32.mrb[0].mxu0
    %4416 = vmatprep.mubr.f32.mxu0 0.0
    %4417 = vmatmul.mubr.f32.gmra.mrb[0].mxu0 %v4345
    %v4418 = vpop.f32.mrb[0].mxu0
    %v4419 = vadd.f32 %v4340, %v4418
    %v4420 = vpop.f32.mrb[0].mxu0
    %4421 = vdwg.mxu0
    %v4422 = vadd.f32 %v2746, %v4414
    %v4423 = vadd.f32 %v2747, %v4419
    %v4424 = vsel %vm183, %v4422, 0.0
    %4425 = vadd.xlane.f32.xlu0 %v4424
    %v4426 = vpop.xlane.xlu0 %4425
    %v4427 = vsel %vm183, %v4423, 0.0
    %4428 = vadd.xlane.f32.xlu0 %v4427
    %v4429 = vpop.xlane.xlu0 %4428
    %v4430 = vmul.f32 %v4426, %v2715
    %v4431 = vmul.f32 %v4429, %v2715
    %v4432 = vsub.f32 %v4422, %v4430
    %v4433 = vsub.f32 %v4423, %v4431
    %v4434 = vmul.f32 %v4432, %v4432
    %v4435 = vmul.f32 %v4433, %v4433
    %v4436 = vsel %vm183, %v4434, 0.0
    %4437 = vadd.xlane.f32.xlu0 %v4436
    %v4438 = vpop.xlane.xlu0 %4437
    %v4439 = vsel %vm183, %v4435, 0.0
    %4440 = vadd.xlane.f32.xlu0 %v4439
    %v4441 = vpop.xlane.xlu0 %4440
    %v4442 = vmul.f32 %v4438, %v2715
    %v4443 = vmul.f32 %v4441, %v2715
    %v4444 = vadd.f32 %v4442, 1e-05
    %v4445 = vadd.f32 %v4443, 1e-05
    %v4446 = vrsqrt.pop %v4444
    %v4447 = vrsqrt.pop %v4445
    %v4448 = vmul.f32 %v4432, %v4446
    %v4449 = vmul.f32 %v4433, %v4447
    %v4450 = vlaneseq
    %v4451 = vshrl.u32 %v4450, 7
    %v4452 = vsub.s32 0, %v4451
    %v4453 = vrot.slane %v173, %v4452
    %v4454 = vmul.f32 %v4448, %v4453
    %v4455 = vmul.f32 %v4449, %v4453
    %v4456 = vlaneseq
    %v4457 = vshrl.u32 %v4456, 7
    %v4458 = vsub.s32 0, %v4457
    %v4459 = vrot.slane %v174, %v4458
    %v4460 = vadd.f32 %v4454, %v4459
    %v4461 = vadd.f32 %v4455, %v4459
    %v4462 = vlaneseq
    %v4463 = vshrl.u32 %v4462, 7
    %v4464 = vsub.s32 0, %v4463
    %v4465 = vrot.slane %v169, %v4464
    %v4467 = vsel %vm183, %v4460, 0
    %v4470 = vsel %vm183, %v4461, 0
    %4472 = vmatprep.subr.mxu0 0.0
    %4473 = vmatpush1.msra.mxu0 %v149
    %4474 = vmatprep.subr.mxu0 0.0
    %4475 = vmatpush1.msra.mxu0 %v150
    %4476 = vmatprep.subr.mxu0 0.0
    %4477 = vmatpush1.msra.mxu0 %v151
    %4478 = vmatprep.subr.mxu0 0.0
    %4479 = vmatpush1.msra.mxu0 %v152
    %4480 = vmatprep.subr.mxu0 0.0
    %4481 = vmatpush1.msra.mxu0 0.0
    %4482 = vmatprep.subr.mxu0 0.0
    %4483 = vmatpush1.msra.mxu0 0.0
    %4484 = vmatprep.subr.mxu0 0.0
    %4485 = vmatpush1.msra.mxu0 0.0
    %4486 = vmatprep.subr.mxu0 0.0
    %4487 = vmatpush1.msra.mxu0 0.0
    %4488 = vmatprep.subr.mxu0 0.0
    %4489 = vmatpush1.msra.mxu0 0.0
    %4490 = vmatprep.subr.mxu0 0.0
    %4491 = vmatpush1.msra.mxu0 0.0
    %4492 = vmatprep.subr.mxu0 0.0
    %4493 = vmatpush1.msra.mxu0 0.0
    %4494 = vmatprep.subr.mxu0 0.0
    %4495 = vmatpush1.msra.mxu0 0.0
    %4496 = vmatprep.subr.mxu0 0.0
    %4497 = vmatpush1.msra.mxu0 0.0
    %4498 = vmatprep.subr.mxu0 0.0
    %4499 = vmatpush1.msra.mxu0 0.0
    %4500 = vmatprep.subr.mxu0 0.0
    %4501 = vmatpush1.msra.mxu0 0.0
    %4502 = vmatprep.subr.mxu0 0.0
    %4503 = vmatpush1.msra.mxu0 0.0
    %4504 = vmatprep.subr.mxu0 0.0
    %4505 = vmatpush1.msra.mxu0 0.0
    %4506 = vmatprep.subr.mxu0 0.0
    %4507 = vmatpush1.msra.mxu0 0.0
    %4508 = vmatprep.subr.mxu0 0.0
    %4509 = vmatpush1.msra.mxu0 0.0
    %4510 = vmatprep.subr.mxu0 0.0
    %4511 = vmatpush1.msra.mxu0 0.0
    %4512 = vmatprep.subr.mxu0 0.0
    %4513 = vmatpush1.msra.mxu0 0.0
    %4514 = vmatprep.subr.mxu0 0.0
    %4515 = vmatpush1.msra.mxu0 0.0
    %4516 = vmatprep.subr.mxu0 0.0
    %4517 = vmatpush1.msra.mxu0 0.0
    %4518 = vmatprep.subr.mxu0 0.0
    %4519 = vmatpush1.msra.mxu0 0.0
    %4520 = vmatprep.subr.mxu0 0.0
    %4521 = vmatpush1.msra.mxu0 0.0
    %4522 = vmatprep.subr.mxu0 0.0
    %4523 = vmatpush1.msra.mxu0 0.0
    %4524 = vmatprep.subr.mxu0 0.0
    %4525 = vmatpush1.msra.mxu0 0.0
    %4526 = vmatprep.subr.mxu0 0.0
    %4527 = vmatpush1.msra.mxu0 0.0
    %4528 = vmatprep.subr.mxu0 0.0
    %4529 = vmatpush1.msra.mxu0 0.0
    %4530 = vmatprep.subr.mxu0 0.0
    %4531 = vmatpush1.msra.mxu0 0.0
    %4532 = vmatprep.subr.mxu0 0.0
    %4533 = vmatpush1.msra.mxu0 0.0
    %4534 = vmatprep.subr.mxu0 0.0
    %4535 = vmatpush1.msra.mxu0 0.0
    %4536 = vmatprep.mubr.f32.mxu0 0.0
    %4537 = vmatmul.mubr.f32.gmra.mrb[0].mxu0 %v4467
    %v4538 = vpop.f32.mrb[0].mxu0
    %v4539 = vadd.f32 %v4465, %v4538
    %v4540 = vpop.f32.mrb[0].mxu0
    %4541 = vmatprep.mubr.f32.mxu0 0.0
    %4542 = vmatmul.mubr.f32.gmra.mrb[0].mxu0 %v4470
    %v4543 = vpop.f32.mrb[0].mxu0
    %v4544 = vadd.f32 %v4465, %v4543
    %v4545 = vpop.f32.mrb[0].mxu0
    %4546 = vdwg.mxu0
    %v4547 = vmax.f32 %v4539, 0.0
    %v4548 = vmax.f32 %v4544, 0.0
    %vm4549 = vcmask 523264
    %v4551 = vsel %vm4549, %v4547, 0
    %v4554 = vsel %vm4549, %v4548, 0
    %4556 = vmatprep.subr.mxu0 0.0
    %4557 = vmatpush1.msra.mxu0 %v156
    %4558 = vmatprep.subr.mxu0 0.0
    %4559 = vmatpush1.msra.mxu0 %v157
    %4560 = vmatprep.subr.mxu0 0.0
    %4561 = vmatpush1.msra.mxu0 %v158
    %4562 = vmatprep.subr.mxu0 0.0
    %4563 = vmatpush1.msra.mxu0 %v159
    %4564 = vmatprep.subr.mxu0 0.0
    %4565 = vmatpush1.msra.mxu0 %v160
    %4566 = vmatprep.subr.mxu0 0.0
    %4567 = vmatpush1.msra.mxu0 %v161
    %4568 = vmatprep.subr.mxu0 0.0
    %4569 = vmatpush1.msra.mxu0 %v162
    %4570 = vmatprep.subr.mxu0 0.0
    %4571 = vmatpush1.msra.mxu0 %v163
    %4572 = vmatprep.subr.mxu0 0.0
    %4573 = vmatpush1.msra.mxu0 0.0
    %4574 = vmatprep.subr.mxu0 0.0
    %4575 = vmatpush1.msra.mxu0 0.0
    %4576 = vmatprep.subr.mxu0 0.0
    %4577 = vmatpush1.msra.mxu0 0.0
    %4578 = vmatprep.subr.mxu0 0.0
    %4579 = vmatpush1.msra.mxu0 0.0
    %4580 = vmatprep.subr.mxu0 0.0
    %4581 = vmatpush1.msra.mxu0 0.0
    %4582 = vmatprep.subr.mxu0 0.0
    %4583 = vmatpush1.msra.mxu0 0.0
    %4584 = vmatprep.subr.mxu0 0.0
    %4585 = vmatpush1.msra.mxu0 0.0
    %4586 = vmatprep.subr.mxu0 0.0
    %4587 = vmatpush1.msra.mxu0 0.0
    %4588 = vmatprep.subr.mxu0 0.0
    %4589 = vmatpush1.msra.mxu0 0.0
    %4590 = vmatprep.subr.mxu0 0.0
    %4591 = vmatpush1.msra.mxu0 0.0
    %4592 = vmatprep.subr.mxu0 0.0
    %4593 = vmatpush1.msra.mxu0 0.0
    %4594 = vmatprep.subr.mxu0 0.0
    %4595 = vmatpush1.msra.mxu0 0.0
    %4596 = vmatprep.subr.mxu0 0.0
    %4597 = vmatpush1.msra.mxu0 0.0
    %4598 = vmatprep.subr.mxu0 0.0
    %4599 = vmatpush1.msra.mxu0 0.0
    %4600 = vmatprep.subr.mxu0 0.0
    %4601 = vmatpush1.msra.mxu0 0.0
    %4602 = vmatprep.subr.mxu0 0.0
    %4603 = vmatpush1.msra.mxu0 0.0
    %4604 = vmatprep.subr.mxu0 0.0
    %4605 = vmatpush1.msra.mxu0 0.0
    %4606 = vmatprep.subr.mxu0 0.0
    %4607 = vmatpush1.msra.mxu0 0.0
    %4608 = vmatprep.subr.mxu0 0.0
    %4609 = vmatpush1.msra.mxu0 0.0
    %4610 = vmatprep.subr.mxu0 0.0
    %4611 = vmatpush1.msra.mxu0 0.0
    %4612 = vmatprep.subr.mxu0 0.0
    %4613 = vmatpush1.msra.mxu0 0.0
    %4614 = vmatprep.subr.mxu0 0.0
    %4615 = vmatpush1.msra.mxu0 0.0
    %4616 = vmatprep.subr.mxu0 0.0
    %4617 = vmatpush1.msra.mxu0 0.0
    %4618 = vmatprep.subr.mxu0 0.0
    %4619 = vmatpush1.msra.mxu0 0.0
    %4620 = vmatprep.mubr.f32.mxu0 0.0
    %4621 = vmatmul.mubr.f32.gmra.mrb[0].mxu0 %v4551
    %v4622 = vpop.f32.mrb[0].mxu0
    %v4623 = vadd.f32 0.0, %v4622
    %v4624 = vpop.f32.mrb[0].mxu0
    %4625 = vmatprep.mubr.f32.mxu0 0.0
    %4626 = vmatmul.mubr.f32.gmra.mrb[0].mxu0 %v4554
    %v4627 = vpop.f32.mrb[0].mxu0
    %v4628 = vadd.f32 0.0, %v4627
    %v4629 = vpop.f32.mrb[0].mxu0
    %4630 = vdwg.mxu0
    %v4631 = vadd.f32 %v4460, %v4623
    %v4632 = vadd.f32 %v4461, %v4628
    %v4633 = vlaneseq
    %v4634 = vshrl.u32 %v4633, 7
    %v4635 = vsub.s32 0, %v4634
    %v4636 = vrot.slane %v170, %v4635
    %v4637 = vadd.f32 %v4631, %v4636
    %v4638 = vadd.f32 %v4632, %v4636
    %v4639 = vsel %vm183, %v4637, 0.0
    %4640 = vadd.xlane.f32.xlu0 %v4639
    %v4641 = vpop.xlane.xlu0 %4640
    %v4642 = vsel %vm183, %v4638, 0.0
    %4643 = vadd.xlane.f32.xlu0 %v4642
    %v4644 = vpop.xlane.xlu0 %4643
    %v4645 = vmul.f32 %v4641, %v2715
    %v4646 = vmul.f32 %v4644, %v2715
    %v4647 = vsub.f32 %v4637, %v4645
    %v4648 = vsub.f32 %v4638, %v4646
    %v4649 = vmul.f32 %v4647, %v4647
    %v4650 = vmul.f32 %v4648, %v4648
    %v4651 = vsel %vm183, %v4649, 0.0
    %4652 = vadd.xlane.f32.xlu0 %v4651
    %v4653 = vpop.xlane.xlu0 %4652
    %v4654 = vsel %vm183, %v4650, 0.0
    %4655 = vadd.xlane.f32.xlu0 %v4654
    %v4656 = vpop.xlane.xlu0 %4655
    %v4657 = vmul.f32 %v4653, %v2715
    %v4658 = vmul.f32 %v4656, %v2715
    %v4659 = vadd.f32 %v4657, 1e-05
    %v4660 = vadd.f32 %v4658, 1e-05
    %v4661 = vrsqrt.pop %v4659
    %v4662 = vrsqrt.pop %v4660
    %v4663 = vmul.f32 %v4647, %v4661
    %v4664 = vmul.f32 %v4648, %v4662
    %v4665 = vlaneseq
    %v4666 = vshrl.u32 %v4665, 7
    %v4667 = vsub.s32 0, %v4666
    %v4668 = vrot.slane %v175, %v4667
    %v4669 = vmul.f32 %v4663, %v4668
    %v4670 = vmul.f32 %v4664, %v4668
    %v4671 = vlaneseq
    %v4672 = vshrl.u32 %v4671, 7
    %v4673 = vsub.s32 0, %v4672
    %v4674 = vrot.slane %v176, %v4673
    %v4675 = vadd.f32 %v4669, %v4674
    %v4676 = vadd.f32 %v4670, %v4674
    %4677 = vrot.lane.b32.xlu0 %v1969, 8
    %v4678 = vpop.permute.xlu0 %4677
    %4680 = vrot.lane.b32.xlu0 %v1971, 16
    %v4681 = vpop.permute.xlu0 %4680
    %4683 = vrot.lane.b32.xlu0 %v1973, 24
    %v4684 = vpop.permute.xlu0 %4683
    %v4686 = vsel %vm414, %v1967, %v4678
    %v4687 = vsel %vm2603, %v4686, %v4681
    %v4688 = vsel %vm2605, %v4687, %v4684
    %4689 = vrot.lane.b32.xlu0 %v1977, 8
    %v4690 = vpop.permute.xlu0 %4689
    %4692 = vrot.lane.b32.xlu0 %v1979, 16
    %v4693 = vpop.permute.xlu0 %4692
    %4695 = vrot.lane.b32.xlu0 %v1981, 24
    %v4696 = vpop.permute.xlu0 %4695
    %v4698 = vsel %vm414, %v1975, %v4690
    %v4699 = vsel %vm2603, %v4698, %v4693
    %v4700 = vsel %vm2605, %v4699, %v4696
    %4701 = vrot.lane.b32.xlu0 %v3654, 12
    %v4702 = vpop.permute.xlu0 %4701
    %4704 = vrot.lane.b32.xlu0 %v3656, 24
    %v4705 = vpop.permute.xlu0 %4704
    %4707 = vrot.lane.b32.xlu0 %v3658, 36
    %v4708 = vpop.permute.xlu0 %4707
    %v4710 = vsel %vm3578, %v3652, %v4702
    %v4711 = vsel %vm2605, %v4710, %v4705
    %vm4712 = vcmask 293888
    %v4713 = vsel %vm4712, %v4711, %v4708
    %4714 = vrot.lane.b32.xlu0 %v3662, 12
    %v4715 = vpop.permute.xlu0 %4714
    %4717 = vrot.lane.b32.xlu0 %v3664, 24
    %v4718 = vpop.permute.xlu0 %4717
    %4720 = vrot.lane.b32.xlu0 %v3666, 36
    %v4721 = vpop.permute.xlu0 %4720
    %v4723 = vsel %vm3578, %v3660, %v4715
    %v4724 = vsel %vm2605, %v4723, %v4718
    %v4725 = vsel %vm4712, %v4724, %v4721
    %4728 = vrot.lane.b32.xlu0 %v4688, 32
    %v4729 = vpop.permute.xlu0 %4728
    %4730 = vrot.lane.b32.xlu0 %v4700, 32
    %v4731 = vpop.permute.xlu0 %4730
    %4736 = vrot.lane.b32.xlu0 %v4713, 64
    %v4737 = vpop.permute.xlu0 %4736
    %4738 = vrot.lane.b32.xlu0 %v4725, 64
    %v4739 = vpop.permute.xlu0 %4738
    %v4742 = vsel %vm183, %v4675, %v4729
    %v4743 = vsel %vm183, %v4676, %v4731
    %v4744 = vsel %vm4549, %v4742, %v4737
    %v4745 = vsel %vm4549, %v4743, %v4739
    %vm4746 = vcmask 916480
    %v4747 = vsel %vm4746, %v4744, 0.0
    %v4748 = vsel %vm4746, %v4745, 0.0
    %4749 = vst [vmem:[#allocation13] sm:$0xff] %v4747
    %4750 = vst [vmem:[#allocation13 + $0x8] sm:$0xff] %v4748
    // Predicated region
    $region50: #{tpu_custom_call.1} parent=1 // pred_check
      _
    $region51: #{tpu_custom_call.1} parent=1 // pred_check_branch
      %4752 = sbr.rel (0) target = $region53
    $region52: #{tpu_custom_call.1} parent=1 // pred_region
      %s4754 = ssub.s32 256, 256
      %4755 = vsyncadd [#allocation4], %s4754
      %s4756 = sshll.u32 [#allocation13], 4
      %s4757 = int_to_ptr.vmem [resolvable:$true] %s4756
      %4762 = dma.vmem_to_hbm [thread:$0]  %s4757, 256, %s6, [#allocation4], 128, 128, 8
    $region53: #{tpu_custom_call.1} parent=1 // pred_fallthru
      _
    // Predicated region
    $region54: #{tpu_custom_call.1} parent=1 // pred_check
      _
    $region55: #{tpu_custom_call.1} parent=1 // pred_check_branch
      %4764 = sbr.rel (0) target = $region57
    $region56: #{tpu_custom_call.1} parent=1 // pred_region
      %4765 = dma.done [#allocation4], 256
    $region57: #{tpu_custom_call.1} parent=1 // pred_fallthru
      _
    %4766 = vsyncpa [#allocation3], 1
    %4767 = vsyncpa [#allocation6], 1
    %4768 = vsyncpa [#allocation9], 1
    %4769 = vsyncpa [#allocation12], 1
    %4770 = vsyncpa [#allocation4], 1

</llo_original>
